<compile_context>
chip_gen: v7x
topology: tpu7x:2x2x1
jax: 0.10.0
libtpu: 0.0.40
codegen_flags: <defaults>
</compile_context>

<pallas_src>
import math

import jax
import jax.numpy as jnp
from jax.experimental import pallas as pl
from jax.experimental.pallas import tpu as pltpu

# ---- model hyper-parameters (consistent with CustomModel.__init__) ----------
NUM_TOKENS = 64          # num_tokens
K = 32                   # k (embedding dim)
NUM_HEADS = 4            # num_heads
NUM_BLOCKS = 2           # num_transformer_blocks
HEAD_DIM = K // NUM_HEADS
MAX_POS = 512            # nn.Embedding(512, k)
LN_EPS = 1e-5            # PyTorch LayerNorm default eps

# weights are stored pre-transposed so every kernel matmul is  x @ W  (+ b)
BLOCK_PARAM_ORDER = ("wq", "bq", "wk", "bk", "wv", "bv", "wo", "bo",
                     "g1", "be1", "wf1", "bf1", "wf2", "bf2", "g2", "be2")
N_BLOCK_PARAMS = len(BLOCK_PARAM_ORDER)


def _layer_norm(x, gamma, beta):
    mean = jnp.mean(x, axis=-1, keepdims=True)
    var = jnp.mean((x - mean) ** 2, axis=-1, keepdims=True)
    return (x - mean) * jax.lax.rsqrt(var + LN_EPS) * gamma + beta


# ------------------------- fused Pallas kernel --------------------------------
def fused_forward_kernel(ids_ref, pos_oh_ref, attn_bias_ref,
                         tok_emb_ref, pos_emb_ref, *refs):
    """refs = NUM_BLOCKS * 16 block-param refs, then wout_ref, bout_ref, o_ref."""
    o_ref = refs[-1]
    bout_ref = refs[-2]
    wout_ref = refs[-3]
    block_refs = refs[:-3]

    BS = ids_ref.shape[0]

    # ---- embeddings: one-hot gather as a matmul, plus position add ----------
    ids = ids_ref[...]                                              # (BS, 1) int32
    tok_iota = jax.lax.broadcasted_iota(jnp.int32, (BS, NUM_TOKENS), 1)
    tok_oh = jnp.where(ids == tok_iota, 1.0, 0.0).astype(jnp.float32)  # (BS, T)
    x = jnp.dot(tok_oh, tok_emb_ref[...], preferred_element_type=jnp.float32)
    x = x + jnp.dot(pos_oh_ref[...], pos_emb_ref[...],
                    preferred_element_type=jnp.float32)             # (BS, K)

    attn_bias = attn_bias_ref[...]                                  # (BS, BS)
    scale = 1.0 / math.sqrt(HEAD_DIM)

    for blk in range(NUM_BLOCKS):
        (wq, bq, wk, bk, wv, bv, wo, bo, g1, be1,
         wf1, bf1, wf2, bf2, g2, be2) = block_refs[blk * N_BLOCK_PARAMS:
                                                   (blk + 1) * N_BLOCK_PARAMS]

        q = jnp.dot(x, wq[...], preferred_element_type=jnp.float32) + bq[...]
        k = jnp.dot(x, wk[...], preferred_element_type=jnp.float32) + bk[...]
        v = jnp.dot(x, wv[...], preferred_element_type=jnp.float32) + bv[...]
        wo_full = wo[...]                                           # (K, K)

        # attention for all (position, batch) rows at once; per-head results
        # are projected and accumulated directly (no scratch, no concat).
        attn = jnp.zeros((BS, K), jnp.float32)
        for h in range(NUM_HEADS):
            cols = slice(h * HEAD_DIM, (h + 1) * HEAD_DIM)
            qh = q[:, cols] * scale                                 # (BS, hd)
            kh = k[:, cols]                                         # (BS, hd)
            vh = v[:, cols]                                         # (BS, hd)
            sc = jax.lax.dot_general(                                # (BS, BS)
                qh, kh, (((1,), (1,)), ((), ())),
                preferred_element_type=jnp.float32)
            sc = sc + attn_bias                                      # mask cross-pos
            sc = sc - jnp.max(sc, axis=-1, keepdims=True)
            p = jnp.exp(sc)
            # exact normalization: the approximate EUP reciprocal accumulated
            # too much error (~3e-3) through two blocks of LayerNorms.
            p = p / jnp.sum(p, axis=-1, keepdims=True)
            oh = jnp.dot(p, vh, preferred_element_type=jnp.float32)  # (BS, hd)
            attn = attn + jnp.dot(oh, wo_full[h * HEAD_DIM:(h + 1) * HEAD_DIM, :],
                                  preferred_element_type=jnp.float32)
        attn = attn + bo[...]

        # residual + LayerNorm 1
        h1 = _layer_norm(attn + x, g1[...], be1[...])
        # feed forward (Linear -> ReLU -> Linear) + residual + LayerNorm 2
        ff = jnp.maximum(
            jnp.dot(h1, wf1[...], preferred_element_type=jnp.float32) + bf1[...],
            0.0)
        ff = jnp.dot(ff, wf2[...], preferred_element_type=jnp.float32) + bf2[...]
        x = _layer_norm(ff + h1, g2[...], be2[...])

    # output head
    # TODO(synk): logits last dim is 64 (<128 lanes) so the final store is a
    # masked vst; padding to 128 lanes is possible but not worth an extra
    # wrapper slice at this size.
    o_ref[...] = (jnp.dot(x, wout_ref[...], preferred_element_type=jnp.float32)
                  + bout_ref[...]).astype(o_ref.dtype)


# ------------------------- wrapper --------------------------------------------
def _vmem_spec():
    return pl.BlockSpec(memory_space=pltpu.MemorySpace.VMEM)


@jax.jit
def custom_model_forward(token_ids, params):
    B, S = token_ids.shape
    BS = B * S

    ids2d = token_ids.reshape(BS, 1).astype(jnp.int32)

    # The following are data-independent -> constant-folded by XLA at compile
    # time, so they add no runtime dispatches.
    row_pos = jnp.arange(BS, dtype=jnp.int32) % S                     # (BS,)
    pos_oh = (row_pos[:, None] ==
              jnp.arange(S, dtype=jnp.int32)[None, :]).astype(jnp.float32)
    attn_bias = jnp.where(row_pos[:, None] == row_pos[None, :],
                          0.0, -1e30).astype(jnp.float32)             # (BS, BS)
    pos_slice = params["pos_emb"][:S]                                 # (S, K)

    inputs = [ids2d, pos_oh, attn_bias, params["tok_emb"], pos_slice]
    for blk in params["blocks"]:
        inputs.extend(blk[name] for name in BLOCK_PARAM_ORDER)
    inputs.append(params["wout"])
    inputs.append(params["bout"])

    logits2d = pl.pallas_call(
        fused_forward_kernel,
        out_shape=jax.ShapeDtypeStruct((BS, NUM_TOKENS), jnp.float32),
        in_specs=[_vmem_spec() for _ in inputs],
        out_specs=_vmem_spec(),
    )(*inputs)

    return logits2d.reshape(B, S, NUM_TOKENS)                         # (B, S, T)


# ------------------------- parameter init (deterministic) ---------------------
def init_params(key):
    keys = jax.random.split(key, NUM_BLOCKS + 3)
    tok_emb = jax.random.normal(keys[0], (NUM_TOKENS, K), jnp.float32) * 0.02
    pos_emb = jax.random.normal(keys[1], (MAX_POS, K), jnp.float32) * 0.02
    blocks = []
    s = 1.0 / math.sqrt(K)
    for i in range(NUM_BLOCKS):
        wkeys = jax.random.split(keys[2 + i], 8)
        blocks.append(dict(
            wq=jax.random.normal(wkeys[0], (K, K), jnp.float32) * s,
            bq=jnp.zeros((1, K), jnp.float32),
            wk=jax.random.normal(wkeys[1], (K, K), jnp.float32) * s,
            bk=jnp.zeros((1, K), jnp.float32),
            wv=jax.random.normal(wkeys[2], (K, K), jnp.float32) * s,
            bv=jnp.zeros((1, K), jnp.float32),
            wo=jax.random.normal(wkeys[3], (K, K), jnp.float32) * s,
            bo=jnp.zeros((1, K), jnp.float32),
            g1=jnp.ones((1, K), jnp.float32),
            be1=jnp.zeros((1, K), jnp.float32),
            wf1=jax.random.normal(wkeys[4], (K, 4 * K), jnp.float32) * s,
            bf1=jax.random.normal(wkeys[5], (1, 4 * K), jnp.float32) * 0.01,
            wf2=jax.random.normal(wkeys[6], (4 * K, K), jnp.float32) / math.sqrt(4 * K),
            bf2=jax.random.normal(wkeys[7], (1, K), jnp.float32) * 0.01,
            g2=jnp.ones((1, K), jnp.float32),
            be2=jnp.zeros((1, K), jnp.float32),
        ))
    wout = jax.random.normal(keys[-1], (K, NUM_TOKENS), jnp.float32) * s
    bout = jnp.zeros((1, NUM_TOKENS), jnp.float32)
    return dict(tok_emb=tok_emb, pos_emb=pos_emb, blocks=blocks,
                wout=wout, bout=bout)


# ------------------------- pure-JAX reference (for verification) --------------
def reference_forward(token_ids, params):
    B, S = token_ids.shape
    x = params["tok_emb"][token_ids] + params["pos_emb"][:S][None]    # (B, S, K)
    scale = 1.0 / math.sqrt(HEAD_DIM)
    for blk in params["blocks"]:
        q = x @ blk["wq"] + blk["bq"]
        k = x @ blk["wk"] + blk["bk"]
        v = x @ blk["wv"] + blk["bv"]
        qh = q.reshape(B, S, NUM_HEADS, HEAD_DIM)
        kh = k.reshape(B, S, NUM_HEADS, HEAD_DIM)
        vh = v.reshape(B, S, NUM_HEADS, HEAD_DIM)
        # MHA with dim0 as sequence: attention over axis b for each (s, h)
        sc = jnp.einsum('bshd,cshd->shbc', qh * scale, kh)
        p = jax.nn.softmax(sc, axis=-1)
        attn = jnp.einsum('shbc,cshd->bshd', p, vh).reshape(B, S, K)
        attn = attn @ blk["wo"] + blk["bo"]
        h1 = _layer_norm(attn + x, blk["g1"], blk["be1"])
        ff = jax.nn.relu(h1 @ blk["wf1"] + blk["bf1"]) @ blk["wf2"] + blk["bf2"]
        x = _layer_norm(ff + h1, blk["g2"], blk["be2"])
    return x @ params["wout"] + params["bout"]


# ------------------------- main ------------------------------------------------
if __name__ == "__main__":
    B, S = 2, 8
    root = jax.random.PRNGKey(0)
    pkey, dkey = jax.random.split(root)
    params = init_params(pkey)
    token_ids = jax.random.randint(dkey, (B, S), 0, NUM_TOKENS, dtype=jnp.int32)

    out = jax.block_until_ready(custom_model_forward(token_ids, params))
    assert out.shape == (B, S, NUM_TOKENS), out.shape

    ref = reference_forward(token_ids, params)
    max_err = float(jnp.max(jnp.abs(out - ref)))
    if max_err > 1e-3:
        raise SystemExit(f"mismatch vs reference: max abs err = {max_err}")

    print("KERNEL_OK")
</pallas_src>

<mosaic_0001>
module attributes {stable_mosaic.version = 11 : i64} {
  func.func @fused_forward_kernel(%arg0: memref<16x1xi32, #tpu.memory_space<vmem>>, %arg1: memref<16x8xf32, #tpu.memory_space<vmem>>, %arg2: memref<16x16xf32, #tpu.memory_space<vmem>>, %arg3: memref<64x32xf32, #tpu.memory_space<vmem>>, %arg4: memref<8x32xf32, #tpu.memory_space<vmem>>, %arg5: memref<32x32xf32, #tpu.memory_space<vmem>>, %arg6: memref<1x32xf32, #tpu.memory_space<vmem>>, %arg7: memref<32x32xf32, #tpu.memory_space<vmem>>, %arg8: memref<1x32xf32, #tpu.memory_space<vmem>>, %arg9: memref<32x32xf32, #tpu.memory_space<vmem>>, %arg10: memref<1x32xf32, #tpu.memory_space<vmem>>, %arg11: memref<32x32xf32, #tpu.memory_space<vmem>>, %arg12: memref<1x32xf32, #tpu.memory_space<vmem>>, %arg13: memref<1x32xf32, #tpu.memory_space<vmem>>, %arg14: memref<1x32xf32, #tpu.memory_space<vmem>>, %arg15: memref<32x128xf32, #tpu.memory_space<vmem>>, %arg16: memref<1x128xf32, #tpu.memory_space<vmem>>, %arg17: memref<128x32xf32, #tpu.memory_space<vmem>>, %arg18: memref<1x32xf32, #tpu.memory_space<vmem>>, %arg19: memref<1x32xf32, #tpu.memory_space<vmem>>, %arg20: memref<1x32xf32, #tpu.memory_space<vmem>>, %arg21: memref<32x32xf32, #tpu.memory_space<vmem>>, %arg22: memref<1x32xf32, #tpu.memory_space<vmem>>, %arg23: memref<32x32xf32, #tpu.memory_space<vmem>>, %arg24: memref<1x32xf32, #tpu.memory_space<vmem>>, %arg25: memref<32x32xf32, #tpu.memory_space<vmem>>, %arg26: memref<1x32xf32, #tpu.memory_space<vmem>>, %arg27: memref<32x32xf32, #tpu.memory_space<vmem>>, %arg28: memref<1x32xf32, #tpu.memory_space<vmem>>, %arg29: memref<1x32xf32, #tpu.memory_space<vmem>>, %arg30: memref<1x32xf32, #tpu.memory_space<vmem>>, %arg31: memref<32x128xf32, #tpu.memory_space<vmem>>, %arg32: memref<1x128xf32, #tpu.memory_space<vmem>>, %arg33: memref<128x32xf32, #tpu.memory_space<vmem>>, %arg34: memref<1x32xf32, #tpu.memory_space<vmem>>, %arg35: memref<1x32xf32, #tpu.memory_space<vmem>>, %arg36: memref<1x32xf32, #tpu.memory_space<vmem>>, %arg37: memref<32x64xf32, #tpu.memory_space<vmem>>, %arg38: memref<1x64xf32, #tpu.memory_space<vmem>>, %arg39: memref<16x64xf32, #tpu.memory_space<vmem>>) attributes {dimension_semantics = [], scalar_prefetch = 0 : i64, scratch_operands = 0 : i64, tpu.core_type = #tpu.core_type<tc>} {
    %c0 = arith.constant 0 : index
    %c0_0 = arith.constant 0 : index
    %0 = vector.load %arg0[%c0, %c0_0] : memref<16x1xi32, #tpu.memory_space<vmem>>, vector<16x1xi32>
    %1 = tpu.iota {dimensions = array<i32: 1>} : vector<16x64xi32>
    %2 = vector.broadcast %0 : vector<16x1xi32> to vector<16x64xi32>
    %3 = arith.cmpi eq, %2, %1 : vector<16x64xi32>
    %cst = arith.constant 1.000000e+00 : f32
    %cst_1 = arith.constant 0.000000e+00 : f32
    %4 = vector.broadcast %cst : f32 to vector<16x64xf32>
    %5 = vector.broadcast %cst_1 : f32 to vector<16x64xf32>
    %6 = arith.select %3, %4, %5 : vector<16x64xi1>, vector<16x64xf32>
    %c0_2 = arith.constant 0 : index
    %c0_3 = arith.constant 0 : index
    %7 = vector.load %arg3[%c0_2, %c0_3] : memref<64x32xf32, #tpu.memory_space<vmem>>, vector<64x32xf32>
    %cst_4 = arith.constant dense<0.000000e+00> : vector<16x32xf32>
    %8 = tpu.matmul %6, %7, %cst_4 {dimension_numbers = #tpu.dot_dimension_numbers<[1], [0], [0], [1], [0, 0, 1, 1], [], []>} : vector<16x64xf32>, vector<64x32xf32>, vector<16x32xf32> -> vector<16x32xf32>
    %c0_5 = arith.constant 0 : index
    %c0_6 = arith.constant 0 : index
    %9 = vector.load %arg1[%c0_5, %c0_6] : memref<16x8xf32, #tpu.memory_space<vmem>>, vector<16x8xf32>
    %c0_7 = arith.constant 0 : index
    %c0_8 = arith.constant 0 : index
    %10 = vector.load %arg4[%c0_7, %c0_8] : memref<8x32xf32, #tpu.memory_space<vmem>>, vector<8x32xf32>
    %cst_9 = arith.constant dense<0.000000e+00> : vector<16x32xf32>
    %11 = tpu.matmul %9, %10, %cst_9 {dimension_numbers = #tpu.dot_dimension_numbers<[1], [0], [0], [1], [0, 0, 1, 1], [], []>} : vector<16x8xf32>, vector<8x32xf32>, vector<16x32xf32> -> vector<16x32xf32>
    %12 = arith.addf %8, %11 : vector<16x32xf32>
    %c0_10 = arith.constant 0 : index
    %c0_11 = arith.constant 0 : index
    %13 = vector.load %arg2[%c0_10, %c0_11] : memref<16x16xf32, #tpu.memory_space<vmem>>, vector<16x16xf32>
    %c0_12 = arith.constant 0 : index
    %c0_13 = arith.constant 0 : index
    %14 = vector.load %arg5[%c0_12, %c0_13] : memref<32x32xf32, #tpu.memory_space<vmem>>, vector<32x32xf32>
    %cst_14 = arith.constant dense<0.000000e+00> : vector<16x32xf32>
    %15 = tpu.matmul %12, %14, %cst_14 {dimension_numbers = #tpu.dot_dimension_numbers<[1], [0], [0], [1], [0, 0, 1, 1], [], []>} : vector<16x32xf32>, vector<32x32xf32>, vector<16x32xf32> -> vector<16x32xf32>
    %c0_15 = arith.constant 0 : index
    %c0_16 = arith.constant 0 : index
    %16 = vector.load %arg6[%c0_15, %c0_16] : memref<1x32xf32, #tpu.memory_space<vmem>>, vector<1x32xf32>
    %17 = vector.broadcast %16 : vector<1x32xf32> to vector<16x32xf32>
    %18 = arith.addf %15, %17 : vector<16x32xf32>
    %c0_17 = arith.constant 0 : index
    %c0_18 = arith.constant 0 : index
    %19 = vector.load %arg7[%c0_17, %c0_18] : memref<32x32xf32, #tpu.memory_space<vmem>>, vector<32x32xf32>
    %cst_19 = arith.constant dense<0.000000e+00> : vector<16x32xf32>
    %20 = tpu.matmul %12, %19, %cst_19 {dimension_numbers = #tpu.dot_dimension_numbers<[1], [0], [0], [1], [0, 0, 1, 1], [], []>} : vector<16x32xf32>, vector<32x32xf32>, vector<16x32xf32> -> vector<16x32xf32>
    %c0_20 = arith.constant 0 : index
    %c0_21 = arith.constant 0 : index
    %21 = vector.load %arg8[%c0_20, %c0_21] : memref<1x32xf32, #tpu.memory_space<vmem>>, vector<1x32xf32>
    %22 = vector.broadcast %21 : vector<1x32xf32> to vector<16x32xf32>
    %23 = arith.addf %20, %22 : vector<16x32xf32>
    %c0_22 = arith.constant 0 : index
    %c0_23 = arith.constant 0 : index
    %24 = vector.load %arg9[%c0_22, %c0_23] : memref<32x32xf32, #tpu.memory_space<vmem>>, vector<32x32xf32>
    %cst_24 = arith.constant dense<0.000000e+00> : vector<16x32xf32>
    %25 = tpu.matmul %12, %24, %cst_24 {dimension_numbers = #tpu.dot_dimension_numbers<[1], [0], [0], [1], [0, 0, 1, 1], [], []>} : vector<16x32xf32>, vector<32x32xf32>, vector<16x32xf32> -> vector<16x32xf32>
    %c0_25 = arith.constant 0 : index
    %c0_26 = arith.constant 0 : index
    %26 = vector.load %arg10[%c0_25, %c0_26] : memref<1x32xf32, #tpu.memory_space<vmem>>, vector<1x32xf32>
    %27 = vector.broadcast %26 : vector<1x32xf32> to vector<16x32xf32>
    %28 = arith.addf %25, %27 : vector<16x32xf32>
    %c0_27 = arith.constant 0 : index
    %c0_28 = arith.constant 0 : index
    %29 = vector.load %arg11[%c0_27, %c0_28] : memref<32x32xf32, #tpu.memory_space<vmem>>, vector<32x32xf32>
    %cst_29 = arith.constant 0.000000e+00 : f32
    %30 = vector.broadcast %cst_29 : f32 to vector<16x32xf32>
    %31 = vector.extract_strided_slice %18 {offsets = [0, 0], sizes = [16, 8], strides = [1, 1]} : vector<16x32xf32> to vector<16x8xf32>
    %cst_30 = arith.constant 0.353553385 : f32
    %32 = vector.broadcast %cst_30 : f32 to vector<16x8xf32>
    %33 = arith.mulf %31, %32 : vector<16x8xf32>
    %34 = vector.extract_strided_slice %23 {offsets = [0, 0], sizes = [16, 8], strides = [1, 1]} : vector<16x32xf32> to vector<16x8xf32>
    %35 = vector.extract_strided_slice %28 {offsets = [0, 0], sizes = [16, 8], strides = [1, 1]} : vector<16x32xf32> to vector<16x8xf32>
    %cst_31 = arith.constant dense<0.000000e+00> : vector<16x16xf32>
    %36 = tpu.matmul %33, %34, %cst_31 {dimension_numbers = #tpu.dot_dimension_numbers<[1], [1], [0], [0], [0, 0, 1, 0], [], []>} : vector<16x8xf32>, vector<16x8xf32>, vector<16x16xf32> -> vector<16x16xf32>
    %37 = arith.addf %36, %13 : vector<16x16xf32>
    %cst_32 = arith.constant dense<0xFF800000> : vector<16xf32>
    %38 = vector.multi_reduction <maximumf>, %37, %cst_32 [1] : vector<16x16xf32> to vector<16xf32>
    %39 = vector.shape_cast %38 : vector<16xf32> to vector<16x1xf32>
    %40 = vector.broadcast %39 : vector<16x1xf32> to vector<16x16xf32>
    %41 = arith.subf %37, %40 : vector<16x16xf32>
    %42 = math.exp %41 : vector<16x16xf32>
    %cst_33 = arith.constant dense<0.000000e+00> : vector<16xf32>
    %43 = vector.multi_reduction <add>, %42, %cst_33 [1] : vector<16x16xf32> to vector<16xf32>
    %44 = vector.shape_cast %43 : vector<16xf32> to vector<16x1xf32>
    %45 = vector.broadcast %44 : vector<16x1xf32> to vector<16x16xf32>
    %46 = arith.divf %42, %45 : vector<16x16xf32>
    %cst_34 = arith.constant dense<0.000000e+00> : vector<16x8xf32>
    %47 = tpu.matmul %46, %35, %cst_34 {dimension_numbers = #tpu.dot_dimension_numbers<[1], [0], [0], [1], [0, 0, 1, 1], [], []>} : vector<16x16xf32>, vector<16x8xf32>, vector<16x8xf32> -> vector<16x8xf32>
    %48 = vector.extract_strided_slice %29 {offsets = [0, 0], sizes = [8, 32], strides = [1, 1]} : vector<32x32xf32> to vector<8x32xf32>
    %cst_35 = arith.constant dense<0.000000e+00> : vector<16x32xf32>
    %49 = tpu.matmul %47, %48, %cst_35 {dimension_numbers = #tpu.dot_dimension_numbers<[1], [0], [0], [1], [0, 0, 1, 1], [], []>} : vector<16x8xf32>, vector<8x32xf32>, vector<16x32xf32> -> vector<16x32xf32>
    %50 = arith.addf %30, %49 : vector<16x32xf32>
    %51 = vector.extract_strided_slice %18 {offsets = [0, 8], sizes = [16, 8], strides = [1, 1]} : vector<16x32xf32> to vector<16x8xf32>
    %cst_36 = arith.constant 0.353553385 : f32
    %52 = vector.broadcast %cst_36 : f32 to vector<16x8xf32>
    %53 = arith.mulf %51, %52 : vector<16x8xf32>
    %54 = vector.extract_strided_slice %23 {offsets = [0, 8], sizes = [16, 8], strides = [1, 1]} : vector<16x32xf32> to vector<16x8xf32>
    %55 = vector.extract_strided_slice %28 {offsets = [0, 8], sizes = [16, 8], strides = [1, 1]} : vector<16x32xf32> to vector<16x8xf32>
    %cst_37 = arith.constant dense<0.000000e+00> : vector<16x16xf32>
    %56 = tpu.matmul %53, %54, %cst_37 {dimension_numbers = #tpu.dot_dimension_numbers<[1], [1], [0], [0], [0, 0, 1, 0], [], []>} : vector<16x8xf32>, vector<16x8xf32>, vector<16x16xf32> -> vector<16x16xf32>
    %57 = arith.addf %56, %13 : vector<16x16xf32>
    %cst_38 = arith.constant dense<0xFF800000> : vector<16xf32>
    %58 = vector.multi_reduction <maximumf>, %57, %cst_38 [1] : vector<16x16xf32> to vector<16xf32>
    %59 = vector.shape_cast %58 : vector<16xf32> to vector<16x1xf32>
    %60 = vector.broadcast %59 : vector<16x1xf32> to vector<16x16xf32>
    %61 = arith.subf %57, %60 : vector<16x16xf32>
    %62 = math.exp %61 : vector<16x16xf32>
    %cst_39 = arith.constant dense<0.000000e+00> : vector<16xf32>
    %63 = vector.multi_reduction <add>, %62, %cst_39 [1] : vector<16x16xf32> to vector<16xf32>
    %64 = vector.shape_cast %63 : vector<16xf32> to vector<16x1xf32>
    %65 = vector.broadcast %64 : vector<16x1xf32> to vector<16x16xf32>
    %66 = arith.divf %62, %65 : vector<16x16xf32>
    %cst_40 = arith.constant dense<0.000000e+00> : vector<16x8xf32>
    %67 = tpu.matmul %66, %55, %cst_40 {dimension_numbers = #tpu.dot_dimension_numbers<[1], [0], [0], [1], [0, 0, 1, 1], [], []>} : vector<16x16xf32>, vector<16x8xf32>, vector<16x8xf32> -> vector<16x8xf32>
    %68 = vector.extract_strided_slice %29 {offsets = [8, 0], sizes = [8, 32], strides = [1, 1]} : vector<32x32xf32> to vector<8x32xf32>
    %cst_41 = arith.constant dense<0.000000e+00> : vector<16x32xf32>
    %69 = tpu.matmul %67, %68, %cst_41 {dimension_numbers = #tpu.dot_dimension_numbers<[1], [0], [0], [1], [0, 0, 1, 1], [], []>} : vector<16x8xf32>, vector<8x32xf32>, vector<16x32xf32> -> vector<16x32xf32>
    %70 = arith.addf %50, %69 : vector<16x32xf32>
    %71 = vector.extract_strided_slice %18 {offsets = [0, 16], sizes = [16, 8], strides = [1, 1]} : vector<16x32xf32> to vector<16x8xf32>
    %cst_42 = arith.constant 0.353553385 : f32
    %72 = vector.broadcast %cst_42 : f32 to vector<16x8xf32>
    %73 = arith.mulf %71, %72 : vector<16x8xf32>
    %74 = vector.extract_strided_slice %23 {offsets = [0, 16], sizes = [16, 8], strides = [1, 1]} : vector<16x32xf32> to vector<16x8xf32>
    %75 = vector.extract_strided_slice %28 {offsets = [0, 16], sizes = [16, 8], strides = [1, 1]} : vector<16x32xf32> to vector<16x8xf32>
    %cst_43 = arith.constant dense<0.000000e+00> : vector<16x16xf32>
    %76 = tpu.matmul %73, %74, %cst_43 {dimension_numbers = #tpu.dot_dimension_numbers<[1], [1], [0], [0], [0, 0, 1, 0], [], []>} : vector<16x8xf32>, vector<16x8xf32>, vector<16x16xf32> -> vector<16x16xf32>
    %77 = arith.addf %76, %13 : vector<16x16xf32>
    %cst_44 = arith.constant dense<0xFF800000> : vector<16xf32>
    %78 = vector.multi_reduction <maximumf>, %77, %cst_44 [1] : vector<16x16xf32> to vector<16xf32>
    %79 = vector.shape_cast %78 : vector<16xf32> to vector<16x1xf32>
    %80 = vector.broadcast %79 : vector<16x1xf32> to vector<16x16xf32>
    %81 = arith.subf %77, %80 : vector<16x16xf32>
    %82 = math.exp %81 : vector<16x16xf32>
    %cst_45 = arith.constant dense<0.000000e+00> : vector<16xf32>
    %83 = vector.multi_reduction <add>, %82, %cst_45 [1] : vector<16x16xf32> to vector<16xf32>
    %84 = vector.shape_cast %83 : vector<16xf32> to vector<16x1xf32>
    %85 = vector.broadcast %84 : vector<16x1xf32> to vector<16x16xf32>
    %86 = arith.divf %82, %85 : vector<16x16xf32>
    %cst_46 = arith.constant dense<0.000000e+00> : vector<16x8xf32>
    %87 = tpu.matmul %86, %75, %cst_46 {dimension_numbers = #tpu.dot_dimension_numbers<[1], [0], [0], [1], [0, 0, 1, 1], [], []>} : vector<16x16xf32>, vector<16x8xf32>, vector<16x8xf32> -> vector<16x8xf32>
    %88 = vector.extract_strided_slice %29 {offsets = [16, 0], sizes = [8, 32], strides = [1, 1]} : vector<32x32xf32> to vector<8x32xf32>
    %cst_47 = arith.constant dense<0.000000e+00> : vector<16x32xf32>
    %89 = tpu.matmul %87, %88, %cst_47 {dimension_numbers = #tpu.dot_dimension_numbers<[1], [0], [0], [1], [0, 0, 1, 1], [], []>} : vector<16x8xf32>, vector<8x32xf32>, vector<16x32xf32> -> vector<16x32xf32>
    %90 = arith.addf %70, %89 : vector<16x32xf32>
    %91 = vector.extract_strided_slice %18 {offsets = [0, 24], sizes = [16, 8], strides = [1, 1]} : vector<16x32xf32> to vector<16x8xf32>
    %cst_48 = arith.constant 0.353553385 : f32
    %92 = vector.broadcast %cst_48 : f32 to vector<16x8xf32>
    %93 = arith.mulf %91, %92 : vector<16x8xf32>
    %94 = vector.extract_strided_slice %23 {offsets = [0, 24], sizes = [16, 8], strides = [1, 1]} : vector<16x32xf32> to vector<16x8xf32>
    %95 = vector.extract_strided_slice %28 {offsets = [0, 24], sizes = [16, 8], strides = [1, 1]} : vector<16x32xf32> to vector<16x8xf32>
    %cst_49 = arith.constant dense<0.000000e+00> : vector<16x16xf32>
    %96 = tpu.matmul %93, %94, %cst_49 {dimension_numbers = #tpu.dot_dimension_numbers<[1], [1], [0], [0], [0, 0, 1, 0], [], []>} : vector<16x8xf32>, vector<16x8xf32>, vector<16x16xf32> -> vector<16x16xf32>
    %97 = arith.addf %96, %13 : vector<16x16xf32>
    %cst_50 = arith.constant dense<0xFF800000> : vector<16xf32>
    %98 = vector.multi_reduction <maximumf>, %97, %cst_50 [1] : vector<16x16xf32> to vector<16xf32>
    %99 = vector.shape_cast %98 : vector<16xf32> to vector<16x1xf32>
    %100 = vector.broadcast %99 : vector<16x1xf32> to vector<16x16xf32>
    %101 = arith.subf %97, %100 : vector<16x16xf32>
    %102 = math.exp %101 : vector<16x16xf32>
    %cst_51 = arith.constant dense<0.000000e+00> : vector<16xf32>
    %103 = vector.multi_reduction <add>, %102, %cst_51 [1] : vector<16x16xf32> to vector<16xf32>
    %104 = vector.shape_cast %103 : vector<16xf32> to vector<16x1xf32>
    %105 = vector.broadcast %104 : vector<16x1xf32> to vector<16x16xf32>
    %106 = arith.divf %102, %105 : vector<16x16xf32>
    %cst_52 = arith.constant dense<0.000000e+00> : vector<16x8xf32>
    %107 = tpu.matmul %106, %95, %cst_52 {dimension_numbers = #tpu.dot_dimension_numbers<[1], [0], [0], [1], [0, 0, 1, 1], [], []>} : vector<16x16xf32>, vector<16x8xf32>, vector<16x8xf32> -> vector<16x8xf32>
    %108 = vector.extract_strided_slice %29 {offsets = [24, 0], sizes = [8, 32], strides = [1, 1]} : vector<32x32xf32> to vector<8x32xf32>
    %cst_53 = arith.constant dense<0.000000e+00> : vector<16x32xf32>
    %109 = tpu.matmul %107, %108, %cst_53 {dimension_numbers = #tpu.dot_dimension_numbers<[1], [0], [0], [1], [0, 0, 1, 1], [], []>} : vector<16x8xf32>, vector<8x32xf32>, vector<16x32xf32> -> vector<16x32xf32>
    %110 = arith.addf %90, %109 : vector<16x32xf32>
    %c0_54 = arith.constant 0 : index
    %c0_55 = arith.constant 0 : index
    %111 = vector.load %arg12[%c0_54, %c0_55] : memref<1x32xf32, #tpu.memory_space<vmem>>, vector<1x32xf32>
    %112 = vector.broadcast %111 : vector<1x32xf32> to vector<16x32xf32>
    %113 = arith.addf %110, %112 : vector<16x32xf32>
    %114 = arith.addf %113, %12 : vector<16x32xf32>
    %c0_56 = arith.constant 0 : index
    %c0_57 = arith.constant 0 : index
    %115 = vector.load %arg13[%c0_56, %c0_57] : memref<1x32xf32, #tpu.memory_space<vmem>>, vector<1x32xf32>
    %c0_58 = arith.constant 0 : index
    %c0_59 = arith.constant 0 : index
    %116 = vector.load %arg14[%c0_58, %c0_59] : memref<1x32xf32, #tpu.memory_space<vmem>>, vector<1x32xf32>
    %cst_60 = arith.constant dense<0.000000e+00> : vector<16xf32>
    %117 = vector.multi_reduction <add>, %114, %cst_60 [1] : vector<16x32xf32> to vector<16xf32>
    %118 = vector.shape_cast %117 : vector<16xf32> to vector<16x1xf32>
    %cst_61 = arith.constant 3.200000e+01 : f32
    %119 = vector.broadcast %cst_61 : f32 to vector<16x1xf32>
    %120 = arith.divf %118, %119 : vector<16x1xf32>
    %121 = vector.broadcast %120 : vector<16x1xf32> to vector<16x32xf32>
    %122 = arith.subf %114, %121 : vector<16x32xf32>
    %123 = arith.mulf %122, %122 : vector<16x32xf32>
    %cst_62 = arith.constant dense<0.000000e+00> : vector<16xf32>
    %124 = vector.multi_reduction <add>, %123, %cst_62 [1] : vector<16x32xf32> to vector<16xf32>
    %125 = vector.shape_cast %124 : vector<16xf32> to vector<16x1xf32>
    %cst_63 = arith.constant 3.200000e+01 : f32
    %126 = vector.broadcast %cst_63 : f32 to vector<16x1xf32>
    %127 = arith.divf %125, %126 : vector<16x1xf32>
    %128 = vector.broadcast %120 : vector<16x1xf32> to vector<16x32xf32>
    %129 = arith.subf %114, %128 : vector<16x32xf32>
    %cst_64 = arith.constant 9.99999974E-6 : f32
    %130 = vector.broadcast %cst_64 : f32 to vector<16x1xf32>
    %131 = arith.addf %127, %130 : vector<16x1xf32>
    %132 = math.rsqrt %131 : vector<16x1xf32>
    %133 = vector.broadcast %132 : vector<16x1xf32> to vector<16x32xf32>
    %134 = arith.mulf %129, %133 : vector<16x32xf32>
    %135 = vector.broadcast %115 : vector<1x32xf32> to vector<16x32xf32>
    %136 = arith.mulf %134, %135 : vector<16x32xf32>
    %137 = vector.broadcast %116 : vector<1x32xf32> to vector<16x32xf32>
    %138 = arith.addf %136, %137 : vector<16x32xf32>
    %c0_65 = arith.constant 0 : index
    %c0_66 = arith.constant 0 : index
    %139 = vector.load %arg15[%c0_65, %c0_66] : memref<32x128xf32, #tpu.memory_space<vmem>>, vector<32x128xf32>
    %cst_67 = arith.constant dense<0.000000e+00> : vector<16x128xf32>
    %140 = tpu.matmul %138, %139, %cst_67 {dimension_numbers = #tpu.dot_dimension_numbers<[1], [0], [0], [1], [0, 0, 1, 1], [], []>} : vector<16x32xf32>, vector<32x128xf32>, vector<16x128xf32> -> vector<16x128xf32>
    %c0_68 = arith.constant 0 : index
    %c0_69 = arith.constant 0 : index
    %141 = vector.load %arg16[%c0_68, %c0_69] : memref<1x128xf32, #tpu.memory_space<vmem>>, vector<1x128xf32>
    %142 = vector.broadcast %141 : vector<1x128xf32> to vector<16x128xf32>
    %143 = arith.addf %140, %142 : vector<16x128xf32>
    %cst_70 = arith.constant 0.000000e+00 : f32
    %144 = vector.broadcast %cst_70 : f32 to vector<16x128xf32>
    %145 = arith.maximumf %143, %144 : vector<16x128xf32>
    %c0_71 = arith.constant 0 : index
    %c0_72 = arith.constant 0 : index
    %146 = vector.load %arg17[%c0_71, %c0_72] : memref<128x32xf32, #tpu.memory_space<vmem>>, vector<128x32xf32>
    %cst_73 = arith.constant dense<0.000000e+00> : vector<16x32xf32>
    %147 = tpu.matmul %145, %146, %cst_73 {dimension_numbers = #tpu.dot_dimension_numbers<[1], [0], [0], [1], [0, 0, 1, 1], [], []>} : vector<16x128xf32>, vector<128x32xf32>, vector<16x32xf32> -> vector<16x32xf32>
    %c0_74 = arith.constant 0 : index
    %c0_75 = arith.constant 0 : index
    %148 = vector.load %arg18[%c0_74, %c0_75] : memref<1x32xf32, #tpu.memory_space<vmem>>, vector<1x32xf32>
    %149 = vector.broadcast %148 : vector<1x32xf32> to vector<16x32xf32>
    %150 = arith.addf %147, %149 : vector<16x32xf32>
    %151 = arith.addf %150, %138 : vector<16x32xf32>
    %c0_76 = arith.constant 0 : index
    %c0_77 = arith.constant 0 : index
    %152 = vector.load %arg19[%c0_76, %c0_77] : memref<1x32xf32, #tpu.memory_space<vmem>>, vector<1x32xf32>
    %c0_78 = arith.constant 0 : index
    %c0_79 = arith.constant 0 : index
    %153 = vector.load %arg20[%c0_78, %c0_79] : memref<1x32xf32, #tpu.memory_space<vmem>>, vector<1x32xf32>
    %cst_80 = arith.constant dense<0.000000e+00> : vector<16xf32>
    %154 = vector.multi_reduction <add>, %151, %cst_80 [1] : vector<16x32xf32> to vector<16xf32>
    %155 = vector.shape_cast %154 : vector<16xf32> to vector<16x1xf32>
    %cst_81 = arith.constant 3.200000e+01 : f32
    %156 = vector.broadcast %cst_81 : f32 to vector<16x1xf32>
    %157 = arith.divf %155, %156 : vector<16x1xf32>
    %158 = vector.broadcast %157 : vector<16x1xf32> to vector<16x32xf32>
    %159 = arith.subf %151, %158 : vector<16x32xf32>
    %160 = arith.mulf %159, %159 : vector<16x32xf32>
    %cst_82 = arith.constant dense<0.000000e+00> : vector<16xf32>
    %161 = vector.multi_reduction <add>, %160, %cst_82 [1] : vector<16x32xf32> to vector<16xf32>
    %162 = vector.shape_cast %161 : vector<16xf32> to vector<16x1xf32>
    %cst_83 = arith.constant 3.200000e+01 : f32
    %163 = vector.broadcast %cst_83 : f32 to vector<16x1xf32>
    %164 = arith.divf %162, %163 : vector<16x1xf32>
    %165 = vector.broadcast %157 : vector<16x1xf32> to vector<16x32xf32>
    %166 = arith.subf %151, %165 : vector<16x32xf32>
    %cst_84 = arith.constant 9.99999974E-6 : f32
    %167 = vector.broadcast %cst_84 : f32 to vector<16x1xf32>
    %168 = arith.addf %164, %167 : vector<16x1xf32>
    %169 = math.rsqrt %168 : vector<16x1xf32>
    %170 = vector.broadcast %169 : vector<16x1xf32> to vector<16x32xf32>
    %171 = arith.mulf %166, %170 : vector<16x32xf32>
    %172 = vector.broadcast %152 : vector<1x32xf32> to vector<16x32xf32>
    %173 = arith.mulf %171, %172 : vector<16x32xf32>
    %174 = vector.broadcast %153 : vector<1x32xf32> to vector<16x32xf32>
    %175 = arith.addf %173, %174 : vector<16x32xf32>
    %c0_85 = arith.constant 0 : index
    %c0_86 = arith.constant 0 : index
    %176 = vector.load %arg21[%c0_85, %c0_86] : memref<32x32xf32, #tpu.memory_space<vmem>>, vector<32x32xf32>
    %cst_87 = arith.constant dense<0.000000e+00> : vector<16x32xf32>
    %177 = tpu.matmul %175, %176, %cst_87 {dimension_numbers = #tpu.dot_dimension_numbers<[1], [0], [0], [1], [0, 0, 1, 1], [], []>} : vector<16x32xf32>, vector<32x32xf32>, vector<16x32xf32> -> vector<16x32xf32>
    %c0_88 = arith.constant 0 : index
    %c0_89 = arith.constant 0 : index
    %178 = vector.load %arg22[%c0_88, %c0_89] : memref<1x32xf32, #tpu.memory_space<vmem>>, vector<1x32xf32>
    %179 = vector.broadcast %178 : vector<1x32xf32> to vector<16x32xf32>
    %180 = arith.addf %177, %179 : vector<16x32xf32>
    %c0_90 = arith.constant 0 : index
    %c0_91 = arith.constant 0 : index
    %181 = vector.load %arg23[%c0_90, %c0_91] : memref<32x32xf32, #tpu.memory_space<vmem>>, vector<32x32xf32>
    %cst_92 = arith.constant dense<0.000000e+00> : vector<16x32xf32>
    %182 = tpu.matmul %175, %181, %cst_92 {dimension_numbers = #tpu.dot_dimension_numbers<[1], [0], [0], [1], [0, 0, 1, 1], [], []>} : vector<16x32xf32>, vector<32x32xf32>, vector<16x32xf32> -> vector<16x32xf32>
    %c0_93 = arith.constant 0 : index
    %c0_94 = arith.constant 0 : index
    %183 = vector.load %arg24[%c0_93, %c0_94] : memref<1x32xf32, #tpu.memory_space<vmem>>, vector<1x32xf32>
    %184 = vector.broadcast %183 : vector<1x32xf32> to vector<16x32xf32>
    %185 = arith.addf %182, %184 : vector<16x32xf32>
    %c0_95 = arith.constant 0 : index
    %c0_96 = arith.constant 0 : index
    %186 = vector.load %arg25[%c0_95, %c0_96] : memref<32x32xf32, #tpu.memory_space<vmem>>, vector<32x32xf32>
    %cst_97 = arith.constant dense<0.000000e+00> : vector<16x32xf32>
    %187 = tpu.matmul %175, %186, %cst_97 {dimension_numbers = #tpu.dot_dimension_numbers<[1], [0], [0], [1], [0, 0, 1, 1], [], []>} : vector<16x32xf32>, vector<32x32xf32>, vector<16x32xf32> -> vector<16x32xf32>
    %c0_98 = arith.constant 0 : index
    %c0_99 = arith.constant 0 : index
    %188 = vector.load %arg26[%c0_98, %c0_99] : memref<1x32xf32, #tpu.memory_space<vmem>>, vector<1x32xf32>
    %189 = vector.broadcast %188 : vector<1x32xf32> to vector<16x32xf32>
    %190 = arith.addf %187, %189 : vector<16x32xf32>
    %c0_100 = arith.constant 0 : index
    %c0_101 = arith.constant 0 : index
    %191 = vector.load %arg27[%c0_100, %c0_101] : memref<32x32xf32, #tpu.memory_space<vmem>>, vector<32x32xf32>
    %cst_102 = arith.constant 0.000000e+00 : f32
    %192 = vector.broadcast %cst_102 : f32 to vector<16x32xf32>
    %193 = vector.extract_strided_slice %180 {offsets = [0, 0], sizes = [16, 8], strides = [1, 1]} : vector<16x32xf32> to vector<16x8xf32>
    %cst_103 = arith.constant 0.353553385 : f32
    %194 = vector.broadcast %cst_103 : f32 to vector<16x8xf32>
    %195 = arith.mulf %193, %194 : vector<16x8xf32>
    %196 = vector.extract_strided_slice %185 {offsets = [0, 0], sizes = [16, 8], strides = [1, 1]} : vector<16x32xf32> to vector<16x8xf32>
    %197 = vector.extract_strided_slice %190 {offsets = [0, 0], sizes = [16, 8], strides = [1, 1]} : vector<16x32xf32> to vector<16x8xf32>
    %cst_104 = arith.constant dense<0.000000e+00> : vector<16x16xf32>
    %198 = tpu.matmul %195, %196, %cst_104 {dimension_numbers = #tpu.dot_dimension_numbers<[1], [1], [0], [0], [0, 0, 1, 0], [], []>} : vector<16x8xf32>, vector<16x8xf32>, vector<16x16xf32> -> vector<16x16xf32>
    %199 = arith.addf %198, %13 : vector<16x16xf32>
    %cst_105 = arith.constant dense<0xFF800000> : vector<16xf32>
    %200 = vector.multi_reduction <maximumf>, %199, %cst_105 [1] : vector<16x16xf32> to vector<16xf32>
    %201 = vector.shape_cast %200 : vector<16xf32> to vector<16x1xf32>
    %202 = vector.broadcast %201 : vector<16x1xf32> to vector<16x16xf32>
    %203 = arith.subf %199, %202 : vector<16x16xf32>
    %204 = math.exp %203 : vector<16x16xf32>
    %cst_106 = arith.constant dense<0.000000e+00> : vector<16xf32>
    %205 = vector.multi_reduction <add>, %204, %cst_106 [1] : vector<16x16xf32> to vector<16xf32>
    %206 = vector.shape_cast %205 : vector<16xf32> to vector<16x1xf32>
    %207 = vector.broadcast %206 : vector<16x1xf32> to vector<16x16xf32>
    %208 = arith.divf %204, %207 : vector<16x16xf32>
    %cst_107 = arith.constant dense<0.000000e+00> : vector<16x8xf32>
    %209 = tpu.matmul %208, %197, %cst_107 {dimension_numbers = #tpu.dot_dimension_numbers<[1], [0], [0], [1], [0, 0, 1, 1], [], []>} : vector<16x16xf32>, vector<16x8xf32>, vector<16x8xf32> -> vector<16x8xf32>
    %210 = vector.extract_strided_slice %191 {offsets = [0, 0], sizes = [8, 32], strides = [1, 1]} : vector<32x32xf32> to vector<8x32xf32>
    %cst_108 = arith.constant dense<0.000000e+00> : vector<16x32xf32>
    %211 = tpu.matmul %209, %210, %cst_108 {dimension_numbers = #tpu.dot_dimension_numbers<[1], [0], [0], [1], [0, 0, 1, 1], [], []>} : vector<16x8xf32>, vector<8x32xf32>, vector<16x32xf32> -> vector<16x32xf32>
    %212 = arith.addf %192, %211 : vector<16x32xf32>
    %213 = vector.extract_strided_slice %180 {offsets = [0, 8], sizes = [16, 8], strides = [1, 1]} : vector<16x32xf32> to vector<16x8xf32>
    %cst_109 = arith.constant 0.353553385 : f32
    %214 = vector.broadcast %cst_109 : f32 to vector<16x8xf32>
    %215 = arith.mulf %213, %214 : vector<16x8xf32>
    %216 = vector.extract_strided_slice %185 {offsets = [0, 8], sizes = [16, 8], strides = [1, 1]} : vector<16x32xf32> to vector<16x8xf32>
    %217 = vector.extract_strided_slice %190 {offsets = [0, 8], sizes = [16, 8], strides = [1, 1]} : vector<16x32xf32> to vector<16x8xf32>
    %cst_110 = arith.constant dense<0.000000e+00> : vector<16x16xf32>
    %218 = tpu.matmul %215, %216, %cst_110 {dimension_numbers = #tpu.dot_dimension_numbers<[1], [1], [0], [0], [0, 0, 1, 0], [], []>} : vector<16x8xf32>, vector<16x8xf32>, vector<16x16xf32> -> vector<16x16xf32>
    %219 = arith.addf %218, %13 : vector<16x16xf32>
    %cst_111 = arith.constant dense<0xFF800000> : vector<16xf32>
    %220 = vector.multi_reduction <maximumf>, %219, %cst_111 [1] : vector<16x16xf32> to vector<16xf32>
    %221 = vector.shape_cast %220 : vector<16xf32> to vector<16x1xf32>
    %222 = vector.broadcast %221 : vector<16x1xf32> to vector<16x16xf32>
    %223 = arith.subf %219, %222 : vector<16x16xf32>
    %224 = math.exp %223 : vector<16x16xf32>
    %cst_112 = arith.constant dense<0.000000e+00> : vector<16xf32>
    %225 = vector.multi_reduction <add>, %224, %cst_112 [1] : vector<16x16xf32> to vector<16xf32>
    %226 = vector.shape_cast %225 : vector<16xf32> to vector<16x1xf32>
    %227 = vector.broadcast %226 : vector<16x1xf32> to vector<16x16xf32>
    %228 = arith.divf %224, %227 : vector<16x16xf32>
    %cst_113 = arith.constant dense<0.000000e+00> : vector<16x8xf32>
    %229 = tpu.matmul %228, %217, %cst_113 {dimension_numbers = #tpu.dot_dimension_numbers<[1], [0], [0], [1], [0, 0, 1, 1], [], []>} : vector<16x16xf32>, vector<16x8xf32>, vector<16x8xf32> -> vector<16x8xf32>
    %230 = vector.extract_strided_slice %191 {offsets = [8, 0], sizes = [8, 32], strides = [1, 1]} : vector<32x32xf32> to vector<8x32xf32>
    %cst_114 = arith.constant dense<0.000000e+00> : vector<16x32xf32>
    %231 = tpu.matmul %229, %230, %cst_114 {dimension_numbers = #tpu.dot_dimension_numbers<[1], [0], [0], [1], [0, 0, 1, 1], [], []>} : vector<16x8xf32>, vector<8x32xf32>, vector<16x32xf32> -> vector<16x32xf32>
    %232 = arith.addf %212, %231 : vector<16x32xf32>
    %233 = vector.extract_strided_slice %180 {offsets = [0, 16], sizes = [16, 8], strides = [1, 1]} : vector<16x32xf32> to vector<16x8xf32>
    %cst_115 = arith.constant 0.353553385 : f32
    %234 = vector.broadcast %cst_115 : f32 to vector<16x8xf32>
    %235 = arith.mulf %233, %234 : vector<16x8xf32>
    %236 = vector.extract_strided_slice %185 {offsets = [0, 16], sizes = [16, 8], strides = [1, 1]} : vector<16x32xf32> to vector<16x8xf32>
    %237 = vector.extract_strided_slice %190 {offsets = [0, 16], sizes = [16, 8], strides = [1, 1]} : vector<16x32xf32> to vector<16x8xf32>
    %cst_116 = arith.constant dense<0.000000e+00> : vector<16x16xf32>
    %238 = tpu.matmul %235, %236, %cst_116 {dimension_numbers = #tpu.dot_dimension_numbers<[1], [1], [0], [0], [0, 0, 1, 0], [], []>} : vector<16x8xf32>, vector<16x8xf32>, vector<16x16xf32> -> vector<16x16xf32>
    %239 = arith.addf %238, %13 : vector<16x16xf32>
    %cst_117 = arith.constant dense<0xFF800000> : vector<16xf32>
    %240 = vector.multi_reduction <maximumf>, %239, %cst_117 [1] : vector<16x16xf32> to vector<16xf32>
    %241 = vector.shape_cast %240 : vector<16xf32> to vector<16x1xf32>
    %242 = vector.broadcast %241 : vector<16x1xf32> to vector<16x16xf32>
    %243 = arith.subf %239, %242 : vector<16x16xf32>
    %244 = math.exp %243 : vector<16x16xf32>
    %cst_118 = arith.constant dense<0.000000e+00> : vector<16xf32>
    %245 = vector.multi_reduction <add>, %244, %cst_118 [1] : vector<16x16xf32> to vector<16xf32>
    %246 = vector.shape_cast %245 : vector<16xf32> to vector<16x1xf32>
    %247 = vector.broadcast %246 : vector<16x1xf32> to vector<16x16xf32>
    %248 = arith.divf %244, %247 : vector<16x16xf32>
    %cst_119 = arith.constant dense<0.000000e+00> : vector<16x8xf32>
    %249 = tpu.matmul %248, %237, %cst_119 {dimension_numbers = #tpu.dot_dimension_numbers<[1], [0], [0], [1], [0, 0, 1, 1], [], []>} : vector<16x16xf32>, vector<16x8xf32>, vector<16x8xf32> -> vector<16x8xf32>
    %250 = vector.extract_strided_slice %191 {offsets = [16, 0], sizes = [8, 32], strides = [1, 1]} : vector<32x32xf32> to vector<8x32xf32>
    %cst_120 = arith.constant dense<0.000000e+00> : vector<16x32xf32>
    %251 = tpu.matmul %249, %250, %cst_120 {dimension_numbers = #tpu.dot_dimension_numbers<[1], [0], [0], [1], [0, 0, 1, 1], [], []>} : vector<16x8xf32>, vector<8x32xf32>, vector<16x32xf32> -> vector<16x32xf32>
    %252 = arith.addf %232, %251 : vector<16x32xf32>
    %253 = vector.extract_strided_slice %180 {offsets = [0, 24], sizes = [16, 8], strides = [1, 1]} : vector<16x32xf32> to vector<16x8xf32>
    %cst_121 = arith.constant 0.353553385 : f32
    %254 = vector.broadcast %cst_121 : f32 to vector<16x8xf32>
    %255 = arith.mulf %253, %254 : vector<16x8xf32>
    %256 = vector.extract_strided_slice %185 {offsets = [0, 24], sizes = [16, 8], strides = [1, 1]} : vector<16x32xf32> to vector<16x8xf32>
    %257 = vector.extract_strided_slice %190 {offsets = [0, 24], sizes = [16, 8], strides = [1, 1]} : vector<16x32xf32> to vector<16x8xf32>
    %cst_122 = arith.constant dense<0.000000e+00> : vector<16x16xf32>
    %258 = tpu.matmul %255, %256, %cst_122 {dimension_numbers = #tpu.dot_dimension_numbers<[1], [1], [0], [0], [0, 0, 1, 0], [], []>} : vector<16x8xf32>, vector<16x8xf32>, vector<16x16xf32> -> vector<16x16xf32>
    %259 = arith.addf %258, %13 : vector<16x16xf32>
    %cst_123 = arith.constant dense<0xFF800000> : vector<16xf32>
    %260 = vector.multi_reduction <maximumf>, %259, %cst_123 [1] : vector<16x16xf32> to vector<16xf32>
    %261 = vector.shape_cast %260 : vector<16xf32> to vector<16x1xf32>
    %262 = vector.broadcast %261 : vector<16x1xf32> to vector<16x16xf32>
    %263 = arith.subf %259, %262 : vector<16x16xf32>
    %264 = math.exp %263 : vector<16x16xf32>
    %cst_124 = arith.constant dense<0.000000e+00> : vector<16xf32>
    %265 = vector.multi_reduction <add>, %264, %cst_124 [1] : vector<16x16xf32> to vector<16xf32>
    %266 = vector.shape_cast %265 : vector<16xf32> to vector<16x1xf32>
    %267 = vector.broadcast %266 : vector<16x1xf32> to vector<16x16xf32>
    %268 = arith.divf %264, %267 : vector<16x16xf32>
    %cst_125 = arith.constant dense<0.000000e+00> : vector<16x8xf32>
    %269 = tpu.matmul %268, %257, %cst_125 {dimension_numbers = #tpu.dot_dimension_numbers<[1], [0], [0], [1], [0, 0, 1, 1], [], []>} : vector<16x16xf32>, vector<16x8xf32>, vector<16x8xf32> -> vector<16x8xf32>
    %270 = vector.extract_strided_slice %191 {offsets = [24, 0], sizes = [8, 32], strides = [1, 1]} : vector<32x32xf32> to vector<8x32xf32>
    %cst_126 = arith.constant dense<0.000000e+00> : vector<16x32xf32>
    %271 = tpu.matmul %269, %270, %cst_126 {dimension_numbers = #tpu.dot_dimension_numbers<[1], [0], [0], [1], [0, 0, 1, 1], [], []>} : vector<16x8xf32>, vector<8x32xf32>, vector<16x32xf32> -> vector<16x32xf32>
    %272 = arith.addf %252, %271 : vector<16x32xf32>
    %c0_127 = arith.constant 0 : index
    %c0_128 = arith.constant 0 : index
    %273 = vector.load %arg28[%c0_127, %c0_128] : memref<1x32xf32, #tpu.memory_space<vmem>>, vector<1x32xf32>
    %274 = vector.broadcast %273 : vector<1x32xf32> to vector<16x32xf32>
    %275 = arith.addf %272, %274 : vector<16x32xf32>
    %276 = arith.addf %275, %175 : vector<16x32xf32>
    %c0_129 = arith.constant 0 : index
    %c0_130 = arith.constant 0 : index
    %277 = vector.load %arg29[%c0_129, %c0_130] : memref<1x32xf32, #tpu.memory_space<vmem>>, vector<1x32xf32>
    %c0_131 = arith.constant 0 : index
    %c0_132 = arith.constant 0 : index
    %278 = vector.load %arg30[%c0_131, %c0_132] : memref<1x32xf32, #tpu.memory_space<vmem>>, vector<1x32xf32>
    %cst_133 = arith.constant dense<0.000000e+00> : vector<16xf32>
    %279 = vector.multi_reduction <add>, %276, %cst_133 [1] : vector<16x32xf32> to vector<16xf32>
    %280 = vector.shape_cast %279 : vector<16xf32> to vector<16x1xf32>
    %cst_134 = arith.constant 3.200000e+01 : f32
    %281 = vector.broadcast %cst_134 : f32 to vector<16x1xf32>
    %282 = arith.divf %280, %281 : vector<16x1xf32>
    %283 = vector.broadcast %282 : vector<16x1xf32> to vector<16x32xf32>
    %284 = arith.subf %276, %283 : vector<16x32xf32>
    %285 = arith.mulf %284, %284 : vector<16x32xf32>
    %cst_135 = arith.constant dense<0.000000e+00> : vector<16xf32>
    %286 = vector.multi_reduction <add>, %285, %cst_135 [1] : vector<16x32xf32> to vector<16xf32>
    %287 = vector.shape_cast %286 : vector<16xf32> to vector<16x1xf32>
    %cst_136 = arith.constant 3.200000e+01 : f32
    %288 = vector.broadcast %cst_136 : f32 to vector<16x1xf32>
    %289 = arith.divf %287, %288 : vector<16x1xf32>
    %290 = vector.broadcast %282 : vector<16x1xf32> to vector<16x32xf32>
    %291 = arith.subf %276, %290 : vector<16x32xf32>
    %cst_137 = arith.constant 9.99999974E-6 : f32
    %292 = vector.broadcast %cst_137 : f32 to vector<16x1xf32>
    %293 = arith.addf %289, %292 : vector<16x1xf32>
    %294 = math.rsqrt %293 : vector<16x1xf32>
    %295 = vector.broadcast %294 : vector<16x1xf32> to vector<16x32xf32>
    %296 = arith.mulf %291, %295 : vector<16x32xf32>
    %297 = vector.broadcast %277 : vector<1x32xf32> to vector<16x32xf32>
    %298 = arith.mulf %296, %297 : vector<16x32xf32>
    %299 = vector.broadcast %278 : vector<1x32xf32> to vector<16x32xf32>
    %300 = arith.addf %298, %299 : vector<16x32xf32>
    %c0_138 = arith.constant 0 : index
    %c0_139 = arith.constant 0 : index
    %301 = vector.load %arg31[%c0_138, %c0_139] : memref<32x128xf32, #tpu.memory_space<vmem>>, vector<32x128xf32>
    %cst_140 = arith.constant dense<0.000000e+00> : vector<16x128xf32>
    %302 = tpu.matmul %300, %301, %cst_140 {dimension_numbers = #tpu.dot_dimension_numbers<[1], [0], [0], [1], [0, 0, 1, 1], [], []>} : vector<16x32xf32>, vector<32x128xf32>, vector<16x128xf32> -> vector<16x128xf32>
    %c0_141 = arith.constant 0 : index
    %c0_142 = arith.constant 0 : index
    %303 = vector.load %arg32[%c0_141, %c0_142] : memref<1x128xf32, #tpu.memory_space<vmem>>, vector<1x128xf32>
    %304 = vector.broadcast %303 : vector<1x128xf32> to vector<16x128xf32>
    %305 = arith.addf %302, %304 : vector<16x128xf32>
    %cst_143 = arith.constant 0.000000e+00 : f32
    %306 = vector.broadcast %cst_143 : f32 to vector<16x128xf32>
    %307 = arith.maximumf %305, %306 : vector<16x128xf32>
    %c0_144 = arith.constant 0 : index
    %c0_145 = arith.constant 0 : index
    %308 = vector.load %arg33[%c0_144, %c0_145] : memref<128x32xf32, #tpu.memory_space<vmem>>, vector<128x32xf32>
    %cst_146 = arith.constant dense<0.000000e+00> : vector<16x32xf32>
    %309 = tpu.matmul %307, %308, %cst_146 {dimension_numbers = #tpu.dot_dimension_numbers<[1], [0], [0], [1], [0, 0, 1, 1], [], []>} : vector<16x128xf32>, vector<128x32xf32>, vector<16x32xf32> -> vector<16x32xf32>
    %c0_147 = arith.constant 0 : index
    %c0_148 = arith.constant 0 : index
    %310 = vector.load %arg34[%c0_147, %c0_148] : memref<1x32xf32, #tpu.memory_space<vmem>>, vector<1x32xf32>
    %311 = vector.broadcast %310 : vector<1x32xf32> to vector<16x32xf32>
    %312 = arith.addf %309, %311 : vector<16x32xf32>
    %313 = arith.addf %312, %300 : vector<16x32xf32>
    %c0_149 = arith.constant 0 : index
    %c0_150 = arith.constant 0 : index
    %314 = vector.load %arg35[%c0_149, %c0_150] : memref<1x32xf32, #tpu.memory_space<vmem>>, vector<1x32xf32>
    %c0_151 = arith.constant 0 : index
    %c0_152 = arith.constant 0 : index
    %315 = vector.load %arg36[%c0_151, %c0_152] : memref<1x32xf32, #tpu.memory_space<vmem>>, vector<1x32xf32>
    %cst_153 = arith.constant dense<0.000000e+00> : vector<16xf32>
    %316 = vector.multi_reduction <add>, %313, %cst_153 [1] : vector<16x32xf32> to vector<16xf32>
    %317 = vector.shape_cast %316 : vector<16xf32> to vector<16x1xf32>
    %cst_154 = arith.constant 3.200000e+01 : f32
    %318 = vector.broadcast %cst_154 : f32 to vector<16x1xf32>
    %319 = arith.divf %317, %318 : vector<16x1xf32>
    %320 = vector.broadcast %319 : vector<16x1xf32> to vector<16x32xf32>
    %321 = arith.subf %313, %320 : vector<16x32xf32>
    %322 = arith.mulf %321, %321 : vector<16x32xf32>
    %cst_155 = arith.constant dense<0.000000e+00> : vector<16xf32>
    %323 = vector.multi_reduction <add>, %322, %cst_155 [1] : vector<16x32xf32> to vector<16xf32>
    %324 = vector.shape_cast %323 : vector<16xf32> to vector<16x1xf32>
    %cst_156 = arith.constant 3.200000e+01 : f32
    %325 = vector.broadcast %cst_156 : f32 to vector<16x1xf32>
    %326 = arith.divf %324, %325 : vector<16x1xf32>
    %327 = vector.broadcast %319 : vector<16x1xf32> to vector<16x32xf32>
    %328 = arith.subf %313, %327 : vector<16x32xf32>
    %cst_157 = arith.constant 9.99999974E-6 : f32
    %329 = vector.broadcast %cst_157 : f32 to vector<16x1xf32>
    %330 = arith.addf %326, %329 : vector<16x1xf32>
    %331 = math.rsqrt %330 : vector<16x1xf32>
    %332 = vector.broadcast %331 : vector<16x1xf32> to vector<16x32xf32>
    %333 = arith.mulf %328, %332 : vector<16x32xf32>
    %334 = vector.broadcast %314 : vector<1x32xf32> to vector<16x32xf32>
    %335 = arith.mulf %333, %334 : vector<16x32xf32>
    %336 = vector.broadcast %315 : vector<1x32xf32> to vector<16x32xf32>
    %337 = arith.addf %335, %336 : vector<16x32xf32>
    %c0_158 = arith.constant 0 : index
    %c0_159 = arith.constant 0 : index
    %338 = vector.load %arg37[%c0_158, %c0_159] : memref<32x64xf32, #tpu.memory_space<vmem>>, vector<32x64xf32>
    %cst_160 = arith.constant dense<0.000000e+00> : vector<16x64xf32>
    %339 = tpu.matmul %337, %338, %cst_160 {dimension_numbers = #tpu.dot_dimension_numbers<[1], [0], [0], [1], [0, 0, 1, 1], [], []>} : vector<16x32xf32>, vector<32x64xf32>, vector<16x64xf32> -> vector<16x64xf32>
    %c0_161 = arith.constant 0 : index
    %c0_162 = arith.constant 0 : index
    %340 = vector.load %arg38[%c0_161, %c0_162] : memref<1x64xf32, #tpu.memory_space<vmem>>, vector<1x64xf32>
    %341 = vector.broadcast %340 : vector<1x64xf32> to vector<16x64xf32>
    %342 = arith.addf %339, %341 : vector<16x64xf32>
    %c0_163 = arith.constant 0 : index
    %c0_164 = arith.constant 0 : index
    %343 = vector.load %arg39[%c0_163, %c0_164] : memref<16x64xf32, #tpu.memory_space<vmem>>, vector<16x64xf32>
    tpu.vector_store %arg39[%c0_163, %c0_164], %342 {strides = array<i32>} : memref<16x64xf32, #tpu.memory_space<vmem>>, vector<16x64xf32>,
    return
  }
}

</mosaic_0001>

<llo_original>
// kernel: custom_model_forward.1
$region0: #{custom_model_forward.1}
  #allocation0 [shape = 'u32[]', space=smem, size = 0x4, offset = 0x4, fixed_abs, tag = 'smem constant byte address 0x4 - core index']
  #allocation1 [shape = 'u32[144,128]{1,0:T(1,128)}', space=vmem, size = 0x12000, scoped, tag = 'internal scratch']
  %s0 = inlined_call_operand.smem [shape: u32[40], index: -1, kind: input, shape index: {}]
  %s1 = sld [smem:[%s0]]
  %s2 = scalar_lea.smem %s0, 1
  %s3 = sld [smem:[%s2]]
  %s4 = scalar_lea.smem %s0, 2
  %s5 = sld [smem:[%s4]]
  %s6 = scalar_lea.smem %s0, 3
  %s7 = sld [smem:[%s6]]
  %s8 = scalar_lea.smem %s0, 4
  %s9 = sld [smem:[%s8]]
  %s10 = scalar_lea.smem %s0, 5
  %s11 = sld [smem:[%s10]]
  %s12 = scalar_lea.smem %s0, 6
  %s13 = sld [smem:[%s12]]
  %s14 = scalar_lea.smem %s0, 7
  %s15 = sld [smem:[%s14]]
  %s16 = scalar_lea.smem %s0, 8
  %s17 = sld [smem:[%s16]]
  %s18 = scalar_lea.smem %s0, 9
  %s19 = sld [smem:[%s18]]
  %s20 = scalar_lea.smem %s0, 10
  %s21 = sld [smem:[%s20]]
  %s22 = scalar_lea.smem %s0, 11
  %s23 = sld [smem:[%s22]]
  %s24 = scalar_lea.smem %s0, 12
  %s25 = sld [smem:[%s24]]
  %s26 = scalar_lea.smem %s0, 13
  %s27 = sld [smem:[%s26]]
  %s28 = scalar_lea.smem %s0, 14
  %s29 = sld [smem:[%s28]]
  %s30 = scalar_lea.smem %s0, 15
  %s31 = sld [smem:[%s30]]
  %s32 = scalar_lea.smem %s0, 16
  %s33 = sld [smem:[%s32]]
  %s34 = scalar_lea.smem %s0, 17
  %s35 = sld [smem:[%s34]]
  %s36 = scalar_lea.smem %s0, 18
  %s37 = sld [smem:[%s36]]
  %s38 = scalar_lea.smem %s0, 19
  %s39 = sld [smem:[%s38]]
  %s40 = scalar_lea.smem %s0, 20
  %s41 = sld [smem:[%s40]]
  %s42 = scalar_lea.smem %s0, 21
  %s43 = sld [smem:[%s42]]
  %s44 = scalar_lea.smem %s0, 22
  %s45 = sld [smem:[%s44]]
  %s46 = scalar_lea.smem %s0, 23
  %s47 = sld [smem:[%s46]]
  %s48 = scalar_lea.smem %s0, 24
  %s49 = sld [smem:[%s48]]
  %s50 = scalar_lea.smem %s0, 25
  %s51 = sld [smem:[%s50]]
  %s52 = scalar_lea.smem %s0, 26
  %s53 = sld [smem:[%s52]]
  %s54 = scalar_lea.smem %s0, 27
  %s55 = sld [smem:[%s54]]
  %s56 = scalar_lea.smem %s0, 28
  %s57 = sld [smem:[%s56]]
  %s58 = scalar_lea.smem %s0, 29
  %s59 = sld [smem:[%s58]]
  %s60 = scalar_lea.smem %s0, 30
  %s61 = sld [smem:[%s60]]
  %s62 = scalar_lea.smem %s0, 31
  %s63 = sld [smem:[%s62]]
  %s64 = scalar_lea.smem %s0, 32
  %s65 = sld [smem:[%s64]]
  %s66 = scalar_lea.smem %s0, 33
  %s67 = sld [smem:[%s66]]
  %s68 = scalar_lea.smem %s0, 34
  %s69 = sld [smem:[%s68]]
  %s70 = scalar_lea.smem %s0, 35
  %s71 = sld [smem:[%s70]]
  %s72 = scalar_lea.smem %s0, 36
  %s73 = sld [smem:[%s72]]
  %s74 = scalar_lea.smem %s0, 37
  %s75 = sld [smem:[%s74]]
  %s76 = scalar_lea.smem %s0, 38
  %s77 = sld [smem:[%s76]]
  %s78 = scalar_lea.smem %s0, 39
  %s79 = sld [smem:[%s78]]
  %s80 = sld [smem:[#allocation0]]
  $region166: #{custom_model_forward.1} parent=0
    _
  %s82 = ssub.s32 1, %s80
  %s83 = scalar_select 0, %s82, %s80
  $region1: #{custom_model_forward.1} parent=0
    #allocation2 [shape = 'u8[8192]{0}', space=vmem, size = 0x2000, scoped, tag = 'output window, operand 0, single buffered']
    #allocation3 [shape = 's32[1]{0}', space=sflag, size = 0x4, scoped, tag = 'scoped memory for custom_model_forward.1']
    %84 = vsyncpa [#allocation3], 0
    // Predicated region
    $region2: #{custom_model_forward.1} parent=1 // pred_check
      _
    $region3: #{custom_model_forward.1} parent=1 // pred_check_branch
      %86 = sbr.rel (0) target = $region5
    $region4: #{custom_model_forward.1} parent=1 // pred_region
      _
    $region5: #{custom_model_forward.1} parent=1 // pred_fallthru
      _
    // Predicated region
    $region6: #{custom_model_forward.1} parent=1 // pred_check
      _
    $region7: #{custom_model_forward.1} parent=1 // pred_check_branch
      %88 = sbr.rel (0) target = $region9
    $region8: #{custom_model_forward.1} parent=1 // pred_region
      _
    $region9: #{custom_model_forward.1} parent=1 // pred_fallthru
      _
    // Predicated region
    $region10: #{custom_model_forward.1} parent=1 // pred_check
      _
    $region11: #{custom_model_forward.1} parent=1 // pred_check_branch
      %90 = sbr.rel (0) target = $region13
    $region12: #{custom_model_forward.1} parent=1 // pred_region
      _
    $region13: #{custom_model_forward.1} parent=1 // pred_fallthru
      _
    // Predicated region
    $region14: #{custom_model_forward.1} parent=1 // pred_check
      _
    $region15: #{custom_model_forward.1} parent=1 // pred_check_branch
      %92 = sbr.rel (0) target = $region17
    $region16: #{custom_model_forward.1} parent=1 // pred_region
      _
    $region17: #{custom_model_forward.1} parent=1 // pred_fallthru
      _
    // Predicated region
    $region18: #{custom_model_forward.1} parent=1 // pred_check
      _
    $region19: #{custom_model_forward.1} parent=1 // pred_check_branch
      %94 = sbr.rel (0) target = $region21
    $region20: #{custom_model_forward.1} parent=1 // pred_region
      _
    $region21: #{custom_model_forward.1} parent=1 // pred_fallthru
      _
    // Predicated region
    $region22: #{custom_model_forward.1} parent=1 // pred_check
      _
    $region23: #{custom_model_forward.1} parent=1 // pred_check_branch
      %96 = sbr.rel (0) target = $region25
    $region24: #{custom_model_forward.1} parent=1 // pred_region
      _
    $region25: #{custom_model_forward.1} parent=1 // pred_fallthru
      _
    // Predicated region
    $region26: #{custom_model_forward.1} parent=1 // pred_check
      _
    $region27: #{custom_model_forward.1} parent=1 // pred_check_branch
      %98 = sbr.rel (0) target = $region29
    $region28: #{custom_model_forward.1} parent=1 // pred_region
      _
    $region29: #{custom_model_forward.1} parent=1 // pred_fallthru
      _
    // Predicated region
    $region30: #{custom_model_forward.1} parent=1 // pred_check
      _
    $region31: #{custom_model_forward.1} parent=1 // pred_check_branch
      %100 = sbr.rel (0) target = $region33
    $region32: #{custom_model_forward.1} parent=1 // pred_region
      _
    $region33: #{custom_model_forward.1} parent=1 // pred_fallthru
      _
    // Predicated region
    $region34: #{custom_model_forward.1} parent=1 // pred_check
      _
    $region35: #{custom_model_forward.1} parent=1 // pred_check_branch
      %102 = sbr.rel (0) target = $region37
    $region36: #{custom_model_forward.1} parent=1 // pred_region
      _
    $region37: #{custom_model_forward.1} parent=1 // pred_fallthru
      _
    // Predicated region
    $region38: #{custom_model_forward.1} parent=1 // pred_check
      _
    $region39: #{custom_model_forward.1} parent=1 // pred_check_branch
      %104 = sbr.rel (0) target = $region41
    $region40: #{custom_model_forward.1} parent=1 // pred_region
      _
    $region41: #{custom_model_forward.1} parent=1 // pred_fallthru
      _
    // Predicated region
    $region42: #{custom_model_forward.1} parent=1 // pred_check
      _
    $region43: #{custom_model_forward.1} parent=1 // pred_check_branch
      %106 = sbr.rel (0) target = $region45
    $region44: #{custom_model_forward.1} parent=1 // pred_region
      _
    $region45: #{custom_model_forward.1} parent=1 // pred_fallthru
      _
    // Predicated region
    $region46: #{custom_model_forward.1} parent=1 // pred_check
      _
    $region47: #{custom_model_forward.1} parent=1 // pred_check_branch
      %108 = sbr.rel (0) target = $region49
    $region48: #{custom_model_forward.1} parent=1 // pred_region
      _
    $region49: #{custom_model_forward.1} parent=1 // pred_fallthru
      _
    // Predicated region
    $region50: #{custom_model_forward.1} parent=1 // pred_check
      _
    $region51: #{custom_model_forward.1} parent=1 // pred_check_branch
      %110 = sbr.rel (0) target = $region53
    $region52: #{custom_model_forward.1} parent=1 // pred_region
      _
    $region53: #{custom_model_forward.1} parent=1 // pred_fallthru
      _
    // Predicated region
    $region54: #{custom_model_forward.1} parent=1 // pred_check
      _
    $region55: #{custom_model_forward.1} parent=1 // pred_check_branch
      %112 = sbr.rel (0) target = $region57
    $region56: #{custom_model_forward.1} parent=1 // pred_region
      _
    $region57: #{custom_model_forward.1} parent=1 // pred_fallthru
      _
    // Predicated region
    $region58: #{custom_model_forward.1} parent=1 // pred_check
      _
    $region59: #{custom_model_forward.1} parent=1 // pred_check_branch
      %114 = sbr.rel (0) target = $region61
    $region60: #{custom_model_forward.1} parent=1 // pred_region
      _
    $region61: #{custom_model_forward.1} parent=1 // pred_fallthru
      _
    // Predicated region
    $region62: #{custom_model_forward.1} parent=1 // pred_check
      _
    $region63: #{custom_model_forward.1} parent=1 // pred_check_branch
      %116 = sbr.rel (0) target = $region65
    $region64: #{custom_model_forward.1} parent=1 // pred_region
      _
    $region65: #{custom_model_forward.1} parent=1 // pred_fallthru
      _
    // Predicated region
    $region66: #{custom_model_forward.1} parent=1 // pred_check
      _
    $region67: #{custom_model_forward.1} parent=1 // pred_check_branch
      %118 = sbr.rel (0) target = $region69
    $region68: #{custom_model_forward.1} parent=1 // pred_region
      _
    $region69: #{custom_model_forward.1} parent=1 // pred_fallthru
      _
    // Predicated region
    $region70: #{custom_model_forward.1} parent=1 // pred_check
      _
    $region71: #{custom_model_forward.1} parent=1 // pred_check_branch
      %120 = sbr.rel (0) target = $region73
    $region72: #{custom_model_forward.1} parent=1 // pred_region
      _
    $region73: #{custom_model_forward.1} parent=1 // pred_fallthru
      _
    // Predicated region
    $region74: #{custom_model_forward.1} parent=1 // pred_check
      _
    $region75: #{custom_model_forward.1} parent=1 // pred_check_branch
      %122 = sbr.rel (0) target = $region77
    $region76: #{custom_model_forward.1} parent=1 // pred_region
      _
    $region77: #{custom_model_forward.1} parent=1 // pred_fallthru
      _
    // Predicated region
    $region78: #{custom_model_forward.1} parent=1 // pred_check
      _
    $region79: #{custom_model_forward.1} parent=1 // pred_check_branch
      %124 = sbr.rel (0) target = $region81
    $region80: #{custom_model_forward.1} parent=1 // pred_region
      _
    $region81: #{custom_model_forward.1} parent=1 // pred_fallthru
      _
    // Predicated region
    $region82: #{custom_model_forward.1} parent=1 // pred_check
      _
    $region83: #{custom_model_forward.1} parent=1 // pred_check_branch
      %126 = sbr.rel (0) target = $region85
    $region84: #{custom_model_forward.1} parent=1 // pred_region
      _
    $region85: #{custom_model_forward.1} parent=1 // pred_fallthru
      _
    // Predicated region
    $region86: #{custom_model_forward.1} parent=1 // pred_check
      _
    $region87: #{custom_model_forward.1} parent=1 // pred_check_branch
      %128 = sbr.rel (0) target = $region89
    $region88: #{custom_model_forward.1} parent=1 // pred_region
      _
    $region89: #{custom_model_forward.1} parent=1 // pred_fallthru
      _
    // Predicated region
    $region90: #{custom_model_forward.1} parent=1 // pred_check
      _
    $region91: #{custom_model_forward.1} parent=1 // pred_check_branch
      %130 = sbr.rel (0) target = $region93
    $region92: #{custom_model_forward.1} parent=1 // pred_region
      _
    $region93: #{custom_model_forward.1} parent=1 // pred_fallthru
      _
    // Predicated region
    $region94: #{custom_model_forward.1} parent=1 // pred_check
      _
    $region95: #{custom_model_forward.1} parent=1 // pred_check_branch
      %132 = sbr.rel (0) target = $region97
    $region96: #{custom_model_forward.1} parent=1 // pred_region
      _
    $region97: #{custom_model_forward.1} parent=1 // pred_fallthru
      _
    // Predicated region
    $region98: #{custom_model_forward.1} parent=1 // pred_check
      _
    $region99: #{custom_model_forward.1} parent=1 // pred_check_branch
      %134 = sbr.rel (0) target = $region101
    $region100: #{custom_model_forward.1} parent=1 // pred_region
      _
    $region101: #{custom_model_forward.1} parent=1 // pred_fallthru
      _
    // Predicated region
    $region102: #{custom_model_forward.1} parent=1 // pred_check
      _
    $region103: #{custom_model_forward.1} parent=1 // pred_check_branch
      %136 = sbr.rel (0) target = $region105
    $region104: #{custom_model_forward.1} parent=1 // pred_region
      _
    $region105: #{custom_model_forward.1} parent=1 // pred_fallthru
      _
    // Predicated region
    $region106: #{custom_model_forward.1} parent=1 // pred_check
      _
    $region107: #{custom_model_forward.1} parent=1 // pred_check_branch
      %138 = sbr.rel (0) target = $region109
    $region108: #{custom_model_forward.1} parent=1 // pred_region
      _
    $region109: #{custom_model_forward.1} parent=1 // pred_fallthru
      _
    // Predicated region
    $region110: #{custom_model_forward.1} parent=1 // pred_check
      _
    $region111: #{custom_model_forward.1} parent=1 // pred_check_branch
      %140 = sbr.rel (0) target = $region113
    $region112: #{custom_model_forward.1} parent=1 // pred_region
      _
    $region113: #{custom_model_forward.1} parent=1 // pred_fallthru
      _
    // Predicated region
    $region114: #{custom_model_forward.1} parent=1 // pred_check
      _
    $region115: #{custom_model_forward.1} parent=1 // pred_check_branch
      %142 = sbr.rel (0) target = $region117
    $region116: #{custom_model_forward.1} parent=1 // pred_region
      _
    $region117: #{custom_model_forward.1} parent=1 // pred_fallthru
      _
    // Predicated region
    $region118: #{custom_model_forward.1} parent=1 // pred_check
      _
    $region119: #{custom_model_forward.1} parent=1 // pred_check_branch
      %144 = sbr.rel (0) target = $region121
    $region120: #{custom_model_forward.1} parent=1 // pred_region
      _
    $region121: #{custom_model_forward.1} parent=1 // pred_fallthru
      _
    // Predicated region
    $region122: #{custom_model_forward.1} parent=1 // pred_check
      _
    $region123: #{custom_model_forward.1} parent=1 // pred_check_branch
      %146 = sbr.rel (0) target = $region125
    $region124: #{custom_model_forward.1} parent=1 // pred_region
      _
    $region125: #{custom_model_forward.1} parent=1 // pred_fallthru
      _
    // Predicated region
    $region126: #{custom_model_forward.1} parent=1 // pred_check
      _
    $region127: #{custom_model_forward.1} parent=1 // pred_check_branch
      %148 = sbr.rel (0) target = $region129
    $region128: #{custom_model_forward.1} parent=1 // pred_region
      _
    $region129: #{custom_model_forward.1} parent=1 // pred_fallthru
      _
    // Predicated region
    $region130: #{custom_model_forward.1} parent=1 // pred_check
      _
    $region131: #{custom_model_forward.1} parent=1 // pred_check_branch
      %150 = sbr.rel (0) target = $region133
    $region132: #{custom_model_forward.1} parent=1 // pred_region
      _
    $region133: #{custom_model_forward.1} parent=1 // pred_fallthru
      _
    // Predicated region
    $region134: #{custom_model_forward.1} parent=1 // pred_check
      _
    $region135: #{custom_model_forward.1} parent=1 // pred_check_branch
      %152 = sbr.rel (0) target = $region137
    $region136: #{custom_model_forward.1} parent=1 // pred_region
      _
    $region137: #{custom_model_forward.1} parent=1 // pred_fallthru
      _
    // Predicated region
    $region138: #{custom_model_forward.1} parent=1 // pred_check
      _
    $region139: #{custom_model_forward.1} parent=1 // pred_check_branch
      %154 = sbr.rel (0) target = $region141
    $region140: #{custom_model_forward.1} parent=1 // pred_region
      _
    $region141: #{custom_model_forward.1} parent=1 // pred_fallthru
      _
    // Predicated region
    $region142: #{custom_model_forward.1} parent=1 // pred_check
      _
    $region143: #{custom_model_forward.1} parent=1 // pred_check_branch
      %156 = sbr.rel (0) target = $region145
    $region144: #{custom_model_forward.1} parent=1 // pred_region
      _
    $region145: #{custom_model_forward.1} parent=1 // pred_fallthru
      _
    // Predicated region
    $region146: #{custom_model_forward.1} parent=1 // pred_check
      _
    $region147: #{custom_model_forward.1} parent=1 // pred_check_branch
      %158 = sbr.rel (0) target = $region149
    $region148: #{custom_model_forward.1} parent=1 // pred_region
      _
    $region149: #{custom_model_forward.1} parent=1 // pred_fallthru
      _
    // Predicated region
    $region150: #{custom_model_forward.1} parent=1 // pred_check
      _
    $region151: #{custom_model_forward.1} parent=1 // pred_check_branch
      %160 = sbr.rel (0) target = $region153
    $region152: #{custom_model_forward.1} parent=1 // pred_region
      _
    $region153: #{custom_model_forward.1} parent=1 // pred_fallthru
      _
    // Predicated region
    $region154: #{custom_model_forward.1} parent=1 // pred_check
      _
    $region155: #{custom_model_forward.1} parent=1 // pred_check_branch
      %162 = sbr.rel (0) target = $region157
    $region156: #{custom_model_forward.1} parent=1 // pred_region
      _
    $region157: #{custom_model_forward.1} parent=1 // pred_fallthru
      _
    %v163 = vld [vmem:[%s1] sm:$0xff]
    %v164 = vld [vmem:[%s1 + $0x8] sm:$0xff]
    %v165 = vlaneseq
    %v166 = vand.u32 %v165, 127
    %167 = vset.pattern.permute.xlu0 0
    %168 = vperm.xlu0 %167, %v163
    %v169 = vpop.permute.xlu0 %168
    %170 = vset.pattern.permute.xlu0 0
    %171 = vperm.xlu0 %170, %v164
    %v172 = vpop.permute.xlu0 %171
    %vm173 = vcmp.eq.s32.totalorder %v169, %v166
    %vm174 = vcmp.eq.s32.totalorder %v172, %v166
    %v175 = vsel %vm173, 1.0, 0.0
    %v176 = vsel %vm174, 1.0, 0.0
    %v177 = vld [vmem:[%s7] sm:$0xff]
    %v178 = vld [vmem:[%s7 + $0x8] sm:$0xff]
    %v179 = vld [vmem:[%s7 + $0x10] sm:$0xff]
    %v180 = vld [vmem:[%s7 + $0x18] sm:$0xff]
    %v181 = vld [vmem:[%s7 + $0x20] sm:$0xff]
    %v182 = vld [vmem:[%s7 + $0x28] sm:$0xff]
    %v183 = vld [vmem:[%s7 + $0x30] sm:$0xff]
    %v184 = vld [vmem:[%s7 + $0x38] sm:$0xff]
    %v185 = vld [vmem:[%s3] sm:$0xff]
    %v186 = vld [vmem:[%s3 + $0x8] sm:$0xff]
    %v187 = vld [vmem:[%s9] sm:$0xff]
    %vm188 = vcmask 64512
    %v190 = vsel %vm188, %v185, 0
    %v193 = vsel %vm188, %v186, 0
    %195 = vmatprep.subr.mxu0 0.0
    %196 = vmatpush1.msra.mxu0 %v187
    %197 = vmatprep.subr.mxu0 0.0
    %198 = vmatpush1.msra.mxu0 0.0
    %199 = vmatprep.subr.mxu0 0.0
    %200 = vmatpush1.msra.mxu0 0.0
    %201 = vmatprep.subr.mxu0 0.0
    %202 = vmatpush1.msra.mxu0 0.0
    %203 = vmatprep.subr.mxu0 0.0
    %204 = vmatpush1.msra.mxu0 0.0
    %205 = vmatprep.subr.mxu0 0.0
    %206 = vmatpush1.msra.mxu0 0.0
    %207 = vmatprep.subr.mxu0 0.0
    %208 = vmatpush1.msra.mxu0 0.0
    %209 = vmatprep.subr.mxu0 0.0
    %210 = vmatpush1.msra.mxu0 0.0
    %211 = vmatprep.subr.mxu0 0.0
    %212 = vmatpush1.msra.mxu0 0.0
    %213 = vmatprep.subr.mxu0 0.0
    %214 = vmatpush1.msra.mxu0 0.0
    %215 = vmatprep.subr.mxu0 0.0
    %216 = vmatpush1.msra.mxu0 0.0
    %217 = vmatprep.subr.mxu0 0.0
    %218 = vmatpush1.msra.mxu0 0.0
    %219 = vmatprep.subr.mxu0 0.0
    %220 = vmatpush1.msra.mxu0 0.0
    %221 = vmatprep.subr.mxu0 0.0
    %222 = vmatpush1.msra.mxu0 0.0
    %223 = vmatprep.subr.mxu0 0.0
    %224 = vmatpush1.msra.mxu0 0.0
    %225 = vmatprep.subr.mxu0 0.0
    %226 = vmatpush1.msra.mxu0 0.0
    %227 = vmatprep.subr.mxu0 0.0
    %228 = vmatpush1.msra.mxu0 0.0
    %229 = vmatprep.subr.mxu0 0.0
    %230 = vmatpush1.msra.mxu0 0.0
    %231 = vmatprep.subr.mxu0 0.0
    %232 = vmatpush1.msra.mxu0 0.0
    %233 = vmatprep.subr.mxu0 0.0
    %234 = vmatpush1.msra.mxu0 0.0
    %235 = vmatprep.subr.mxu0 0.0
    %236 = vmatpush1.msra.mxu0 0.0
    %237 = vmatprep.subr.mxu0 0.0
    %238 = vmatpush1.msra.mxu0 0.0
    %239 = vmatprep.subr.mxu0 0.0
    %240 = vmatpush1.msra.mxu0 0.0
    %241 = vmatprep.subr.mxu0 0.0
    %242 = vmatpush1.msra.mxu0 0.0
    %243 = vmatprep.subr.mxu0 0.0
    %244 = vmatpush1.msra.mxu0 0.0
    %245 = vmatprep.subr.mxu0 0.0
    %246 = vmatpush1.msra.mxu0 0.0
    %247 = vmatprep.subr.mxu0 0.0
    %248 = vmatpush1.msra.mxu0 0.0
    %249 = vmatprep.subr.mxu0 0.0
    %250 = vmatpush1.msra.mxu0 0.0
    %251 = vmatprep.subr.mxu0 0.0
    %252 = vmatpush1.msra.mxu0 0.0
    %253 = vmatprep.subr.mxu0 0.0
    %254 = vmatpush1.msra.mxu0 0.0
    %255 = vmatprep.subr.mxu0 0.0
    %256 = vmatpush1.msra.mxu0 0.0
    %257 = vmatprep.subr.mxu0 0.0
    %258 = vmatpush1.msra.mxu0 0.0
    %259 = vmatprep.mubr.f32.mxu0 0.0
    %260 = vmatmul.mubr.f32.gmra.mrb[0].mxu0 %v190
    %v261 = vpop.f32.mrb[0].mxu0
    %v262 = vadd.f32 0.0, %v261
    %v263 = vpop.f32.mrb[0].mxu0
    %264 = vmatprep.mubr.f32.mxu0 0.0
    %265 = vmatmul.mubr.f32.gmra.mrb[0].mxu0 %v193
    %v266 = vpop.f32.mrb[0].mxu0
    %v267 = vadd.f32 0.0, %v266
    %v268 = vpop.f32.mrb[0].mxu0
    %269 = vdwg.mxu0
    %vm270 = vcmask 523264
    %v272 = vsel %vm270, %v175, 0
    %v275 = vsel %vm270, %v176, 0
    %277 = vmatprep.subr.mxu0 0.0
    %278 = vmatpush1.msra.mxu0 %v177
    %279 = vmatprep.subr.mxu0 0.0
    %280 = vmatpush1.msra.mxu0 %v178
    %281 = vmatprep.subr.mxu0 0.0
    %282 = vmatpush1.msra.mxu0 %v179
    %283 = vmatprep.subr.mxu0 0.0
    %284 = vmatpush1.msra.mxu0 %v180
    %285 = vmatprep.subr.mxu0 0.0
    %286 = vmatpush1.msra.mxu0 %v181
    %287 = vmatprep.subr.mxu0 0.0
    %288 = vmatpush1.msra.mxu0 %v182
    %289 = vmatprep.subr.mxu0 0.0
    %290 = vmatpush1.msra.mxu0 %v183
    %291 = vmatprep.subr.mxu0 0.0
    %292 = vmatpush1.msra.mxu0 %v184
    %293 = vmatprep.subr.mxu0 0.0
    %294 = vmatpush1.msra.mxu0 0.0
    %295 = vmatprep.subr.mxu0 0.0
    %296 = vmatpush1.msra.mxu0 0.0
    %297 = vmatprep.subr.mxu0 0.0
    %298 = vmatpush1.msra.mxu0 0.0
    %299 = vmatprep.subr.mxu0 0.0
    %300 = vmatpush1.msra.mxu0 0.0
    %301 = vmatprep.subr.mxu0 0.0
    %302 = vmatpush1.msra.mxu0 0.0
    %303 = vmatprep.subr.mxu0 0.0
    %304 = vmatpush1.msra.mxu0 0.0
    %305 = vmatprep.subr.mxu0 0.0
    %306 = vmatpush1.msra.mxu0 0.0
    %307 = vmatprep.subr.mxu0 0.0
    %308 = vmatpush1.msra.mxu0 0.0
    %309 = vmatprep.subr.mxu0 0.0
    %310 = vmatpush1.msra.mxu0 0.0
    %311 = vmatprep.subr.mxu0 0.0
    %312 = vmatpush1.msra.mxu0 0.0
    %313 = vmatprep.subr.mxu0 0.0
    %314 = vmatpush1.msra.mxu0 0.0
    %315 = vmatprep.subr.mxu0 0.0
    %316 = vmatpush1.msra.mxu0 0.0
    %317 = vmatprep.subr.mxu0 0.0
    %318 = vmatpush1.msra.mxu0 0.0
    %319 = vmatprep.subr.mxu0 0.0
    %320 = vmatpush1.msra.mxu0 0.0
    %321 = vmatprep.subr.mxu0 0.0
    %322 = vmatpush1.msra.mxu0 0.0
    %323 = vmatprep.subr.mxu0 0.0
    %324 = vmatpush1.msra.mxu0 0.0
    %325 = vmatprep.subr.mxu0 0.0
    %326 = vmatpush1.msra.mxu0 0.0
    %327 = vmatprep.subr.mxu0 0.0
    %328 = vmatpush1.msra.mxu0 0.0
    %329 = vmatprep.subr.mxu0 0.0
    %330 = vmatpush1.msra.mxu0 0.0
    %331 = vmatprep.subr.mxu0 0.0
    %332 = vmatpush1.msra.mxu0 0.0
    %333 = vmatprep.subr.mxu0 0.0
    %334 = vmatpush1.msra.mxu0 0.0
    %335 = vmatprep.subr.mxu0 0.0
    %336 = vmatpush1.msra.mxu0 0.0
    %337 = vmatprep.subr.mxu0 0.0
    %338 = vmatpush1.msra.mxu0 0.0
    %339 = vmatprep.subr.mxu0 0.0
    %340 = vmatpush1.msra.mxu0 0.0
    %341 = vmatprep.mubr.f32.mxu0 0.0
    %342 = vmatmul.mubr.f32.gmra.mrb[0].mxu0 %v272
    %v343 = vpop.f32.mrb[0].mxu0
    %v344 = vadd.f32 %v262, %v343
    %v345 = vpop.f32.mrb[0].mxu0
    %346 = vmatprep.mubr.f32.mxu0 0.0
    %347 = vmatmul.mubr.f32.gmra.mrb[0].mxu0 %v275
    %v348 = vpop.f32.mrb[0].mxu0
    %v349 = vadd.f32 %v267, %v348
    %v350 = vpop.f32.mrb[0].mxu0
    %351 = vdwg.mxu0
    %v352 = vld [vmem:[%s5] sm:$0xff]
    %v353 = vld [vmem:[%s5 + $0x8] sm:$0xff]
    %v354 = vld [vmem:[%s11] sm:$0xff]
    %v355 = vld [vmem:[%s11 + $0x8] sm:$0xff]
    %v356 = vld [vmem:[%s11 + $0x10] sm:$0xff]
    %v357 = vld [vmem:[%s11 + $0x18] sm:$0xff]
    %v358 = vld [vmem:[%s13] sm:$0x1]
    %v360 = vlaneseq
    %v361 = vshrl.u32 %v360, 7
    %v362 = vsub.s32 0, %v361
    %v363 = vrot.slane %v358, %v362
    %vm365 = vcmask 261120
    %v367 = vsel %vm365, %v344, 0
    %v370 = vsel %vm365, %v349, 0
    %372 = vmatprep.subr.mxu0 0.0
    %373 = vmatpush1.msra.mxu0 %v354
    %374 = vmatprep.subr.mxu0 0.0
    %375 = vmatpush1.msra.mxu0 %v355
    %376 = vmatprep.subr.mxu0 0.0
    %377 = vmatpush1.msra.mxu0 %v356
    %378 = vmatprep.subr.mxu0 0.0
    %379 = vmatpush1.msra.mxu0 %v357
    %380 = vmatprep.subr.mxu0 0.0
    %381 = vmatpush1.msra.mxu0 0.0
    %382 = vmatprep.subr.mxu0 0.0
    %383 = vmatpush1.msra.mxu0 0.0
    %384 = vmatprep.subr.mxu0 0.0
    %385 = vmatpush1.msra.mxu0 0.0
    %386 = vmatprep.subr.mxu0 0.0
    %387 = vmatpush1.msra.mxu0 0.0
    %388 = vmatprep.subr.mxu0 0.0
    %389 = vmatpush1.msra.mxu0 0.0
    %390 = vmatprep.subr.mxu0 0.0
    %391 = vmatpush1.msra.mxu0 0.0
    %392 = vmatprep.subr.mxu0 0.0
    %393 = vmatpush1.msra.mxu0 0.0
    %394 = vmatprep.subr.mxu0 0.0
    %395 = vmatpush1.msra.mxu0 0.0
    %396 = vmatprep.subr.mxu0 0.0
    %397 = vmatpush1.msra.mxu0 0.0
    %398 = vmatprep.subr.mxu0 0.0
    %399 = vmatpush1.msra.mxu0 0.0
    %400 = vmatprep.subr.mxu0 0.0
    %401 = vmatpush1.msra.mxu0 0.0
    %402 = vmatprep.subr.mxu0 0.0
    %403 = vmatpush1.msra.mxu0 0.0
    %404 = vmatprep.subr.mxu0 0.0
    %405 = vmatpush1.msra.mxu0 0.0
    %406 = vmatprep.subr.mxu0 0.0
    %407 = vmatpush1.msra.mxu0 0.0
    %408 = vmatprep.subr.mxu0 0.0
    %409 = vmatpush1.msra.mxu0 0.0
    %410 = vmatprep.subr.mxu0 0.0
    %411 = vmatpush1.msra.mxu0 0.0
    %412 = vmatprep.subr.mxu0 0.0
    %413 = vmatpush1.msra.mxu0 0.0
    %414 = vmatprep.subr.mxu0 0.0
    %415 = vmatpush1.msra.mxu0 0.0
    %416 = vmatprep.subr.mxu0 0.0
    %417 = vmatpush1.msra.mxu0 0.0
    %418 = vmatprep.subr.mxu0 0.0
    %419 = vmatpush1.msra.mxu0 0.0
    %420 = vmatprep.subr.mxu0 0.0
    %421 = vmatpush1.msra.mxu0 0.0
    %422 = vmatprep.subr.mxu0 0.0
    %423 = vmatpush1.msra.mxu0 0.0
    %424 = vmatprep.subr.mxu0 0.0
    %425 = vmatpush1.msra.mxu0 0.0
    %426 = vmatprep.subr.mxu0 0.0
    %427 = vmatpush1.msra.mxu0 0.0
    %428 = vmatprep.subr.mxu0 0.0
    %429 = vmatpush1.msra.mxu0 0.0
    %430 = vmatprep.subr.mxu0 0.0
    %431 = vmatpush1.msra.mxu0 0.0
    %432 = vmatprep.subr.mxu0 0.0
    %433 = vmatpush1.msra.mxu0 0.0
    %434 = vmatprep.subr.mxu0 0.0
    %435 = vmatpush1.msra.mxu0 0.0
    %436 = vmatprep.mubr.f32.mxu0 0.0
    %437 = vmatmul.mubr.f32.gmra.mrb[0].mxu0 %v367
    %v438 = vpop.f32.mrb[0].mxu0
    %v439 = vadd.f32 %v363, %v438
    %v440 = vpop.f32.mrb[0].mxu0
    %441 = vmatprep.mubr.f32.mxu0 0.0
    %442 = vmatmul.mubr.f32.gmra.mrb[0].mxu0 %v370
    %v443 = vpop.f32.mrb[0].mxu0
    %v444 = vadd.f32 %v363, %v443
    %v445 = vpop.f32.mrb[0].mxu0
    %446 = vdwg.mxu0
    %v447 = vld [vmem:[%s15] sm:$0xff]
    %v448 = vld [vmem:[%s15 + $0x8] sm:$0xff]
    %v449 = vld [vmem:[%s15 + $0x10] sm:$0xff]
    %v450 = vld [vmem:[%s15 + $0x18] sm:$0xff]
    %v451 = vld [vmem:[%s17] sm:$0x1]
    %v453 = vlaneseq
    %v454 = vshrl.u32 %v453, 7
    %v455 = vsub.s32 0, %v454
    %v456 = vrot.slane %v451, %v455
    %458 = vmatprep.subr.mxu0 0.0
    %459 = vmatpush1.msra.mxu0 %v447
    %460 = vmatprep.subr.mxu0 0.0
    %461 = vmatpush1.msra.mxu0 %v448
    %462 = vmatprep.subr.mxu0 0.0
    %463 = vmatpush1.msra.mxu0 %v449
    %464 = vmatprep.subr.mxu0 0.0
    %465 = vmatpush1.msra.mxu0 %v450
    %466 = vmatprep.subr.mxu0 0.0
    %467 = vmatpush1.msra.mxu0 0.0
    %468 = vmatprep.subr.mxu0 0.0
    %469 = vmatpush1.msra.mxu0 0.0
    %470 = vmatprep.subr.mxu0 0.0
    %471 = vmatpush1.msra.mxu0 0.0
    %472 = vmatprep.subr.mxu0 0.0
    %473 = vmatpush1.msra.mxu0 0.0
    %474 = vmatprep.subr.mxu0 0.0
    %475 = vmatpush1.msra.mxu0 0.0
    %476 = vmatprep.subr.mxu0 0.0
    %477 = vmatpush1.msra.mxu0 0.0
    %478 = vmatprep.subr.mxu0 0.0
    %479 = vmatpush1.msra.mxu0 0.0
    %480 = vmatprep.subr.mxu0 0.0
    %481 = vmatpush1.msra.mxu0 0.0
    %482 = vmatprep.subr.mxu0 0.0
    %483 = vmatpush1.msra.mxu0 0.0
    %484 = vmatprep.subr.mxu0 0.0
    %485 = vmatpush1.msra.mxu0 0.0
    %486 = vmatprep.subr.mxu0 0.0
    %487 = vmatpush1.msra.mxu0 0.0
    %488 = vmatprep.subr.mxu0 0.0
    %489 = vmatpush1.msra.mxu0 0.0
    %490 = vmatprep.subr.mxu0 0.0
    %491 = vmatpush1.msra.mxu0 0.0
    %492 = vmatprep.subr.mxu0 0.0
    %493 = vmatpush1.msra.mxu0 0.0
    %494 = vmatprep.subr.mxu0 0.0
    %495 = vmatpush1.msra.mxu0 0.0
    %496 = vmatprep.subr.mxu0 0.0
    %497 = vmatpush1.msra.mxu0 0.0
    %498 = vmatprep.subr.mxu0 0.0
    %499 = vmatpush1.msra.mxu0 0.0
    %500 = vmatprep.subr.mxu0 0.0
    %501 = vmatpush1.msra.mxu0 0.0
    %502 = vmatprep.subr.mxu0 0.0
    %503 = vmatpush1.msra.mxu0 0.0
    %504 = vmatprep.subr.mxu0 0.0
    %505 = vmatpush1.msra.mxu0 0.0
    %506 = vmatprep.subr.mxu0 0.0
    %507 = vmatpush1.msra.mxu0 0.0
    %508 = vmatprep.subr.mxu0 0.0
    %509 = vmatpush1.msra.mxu0 0.0
    %510 = vmatprep.subr.mxu0 0.0
    %511 = vmatpush1.msra.mxu0 0.0
    %512 = vmatprep.subr.mxu0 0.0
    %513 = vmatpush1.msra.mxu0 0.0
    %514 = vmatprep.subr.mxu0 0.0
    %515 = vmatpush1.msra.mxu0 0.0
    %516 = vmatprep.subr.mxu0 0.0
    %517 = vmatpush1.msra.mxu0 0.0
    %518 = vmatprep.subr.mxu0 0.0
    %519 = vmatpush1.msra.mxu0 0.0
    %520 = vmatprep.subr.mxu0 0.0
    %521 = vmatpush1.msra.mxu0 0.0
    %522 = vmatprep.mubr.f32.mxu0 0.0
    %523 = vmatmul.mubr.f32.gmra.mrb[0].mxu0 %v367
    %v524 = vpop.f32.mrb[0].mxu0
    %v525 = vadd.f32 %v456, %v524
    %v526 = vpop.f32.mrb[0].mxu0
    %527 = vmatprep.mubr.f32.mxu0 0.0
    %528 = vmatmul.mubr.f32.gmra.mrb[0].mxu0 %v370
    %v529 = vpop.f32.mrb[0].mxu0
    %v530 = vadd.f32 %v456, %v529
    %v531 = vpop.f32.mrb[0].mxu0
    %532 = vdwg.mxu0
    %v533 = vld [vmem:[%s19] sm:$0xff]
    %v534 = vld [vmem:[%s19 + $0x8] sm:$0xff]
    %v535 = vld [vmem:[%s19 + $0x10] sm:$0xff]
    %v536 = vld [vmem:[%s19 + $0x18] sm:$0xff]
    %v537 = vld [vmem:[%s21] sm:$0x1]
    %v539 = vlaneseq
    %v540 = vshrl.u32 %v539, 7
    %v541 = vsub.s32 0, %v540
    %v542 = vrot.slane %v537, %v541
    %544 = vmatprep.subr.mxu0 0.0
    %545 = vmatpush1.msra.mxu0 %v533
    %546 = vmatprep.subr.mxu0 0.0
    %547 = vmatpush1.msra.mxu0 %v534
    %548 = vmatprep.subr.mxu0 0.0
    %549 = vmatpush1.msra.mxu0 %v535
    %550 = vmatprep.subr.mxu0 0.0
    %551 = vmatpush1.msra.mxu0 %v536
    %552 = vmatprep.subr.mxu0 0.0
    %553 = vmatpush1.msra.mxu0 0.0
    %554 = vmatprep.subr.mxu0 0.0
    %555 = vmatpush1.msra.mxu0 0.0
    %556 = vmatprep.subr.mxu0 0.0
    %557 = vmatpush1.msra.mxu0 0.0
    %558 = vmatprep.subr.mxu0 0.0
    %559 = vmatpush1.msra.mxu0 0.0
    %560 = vmatprep.subr.mxu0 0.0
    %561 = vmatpush1.msra.mxu0 0.0
    %562 = vmatprep.subr.mxu0 0.0
    %563 = vmatpush1.msra.mxu0 0.0
    %564 = vmatprep.subr.mxu0 0.0
    %565 = vmatpush1.msra.mxu0 0.0
    %566 = vmatprep.subr.mxu0 0.0
    %567 = vmatpush1.msra.mxu0 0.0
    %568 = vmatprep.subr.mxu0 0.0
    %569 = vmatpush1.msra.mxu0 0.0
    %570 = vmatprep.subr.mxu0 0.0
    %571 = vmatpush1.msra.mxu0 0.0
    %572 = vmatprep.subr.mxu0 0.0
    %573 = vmatpush1.msra.mxu0 0.0
    %574 = vmatprep.subr.mxu0 0.0
    %575 = vmatpush1.msra.mxu0 0.0
    %576 = vmatprep.subr.mxu0 0.0
    %577 = vmatpush1.msra.mxu0 0.0
    %578 = vmatprep.subr.mxu0 0.0
    %579 = vmatpush1.msra.mxu0 0.0
    %580 = vmatprep.subr.mxu0 0.0
    %581 = vmatpush1.msra.mxu0 0.0
    %582 = vmatprep.subr.mxu0 0.0
    %583 = vmatpush1.msra.mxu0 0.0
    %584 = vmatprep.subr.mxu0 0.0
    %585 = vmatpush1.msra.mxu0 0.0
    %586 = vmatprep.subr.mxu0 0.0
    %587 = vmatpush1.msra.mxu0 0.0
    %588 = vmatprep.subr.mxu0 0.0
    %589 = vmatpush1.msra.mxu0 0.0
    %590 = vmatprep.subr.mxu0 0.0
    %591 = vmatpush1.msra.mxu0 0.0
    %592 = vmatprep.subr.mxu0 0.0
    %593 = vmatpush1.msra.mxu0 0.0
    %594 = vmatprep.subr.mxu0 0.0
    %595 = vmatpush1.msra.mxu0 0.0
    %596 = vmatprep.subr.mxu0 0.0
    %597 = vmatpush1.msra.mxu0 0.0
    %598 = vmatprep.subr.mxu0 0.0
    %599 = vmatpush1.msra.mxu0 0.0
    %600 = vmatprep.subr.mxu0 0.0
    %601 = vmatpush1.msra.mxu0 0.0
    %602 = vmatprep.subr.mxu0 0.0
    %603 = vmatpush1.msra.mxu0 0.0
    %604 = vmatprep.subr.mxu0 0.0
    %605 = vmatpush1.msra.mxu0 0.0
    %606 = vmatprep.subr.mxu0 0.0
    %607 = vmatpush1.msra.mxu0 0.0
    %608 = vmatprep.mubr.f32.mxu0 0.0
    %609 = vmatmul.mubr.f32.gmra.mrb[0].mxu0 %v367
    %v610 = vpop.f32.mrb[0].mxu0
    %v611 = vadd.f32 %v542, %v610
    %v612 = vpop.f32.mrb[0].mxu0
    %613 = vmatprep.mubr.f32.mxu0 0.0
    %614 = vmatmul.mubr.f32.gmra.mrb[0].mxu0 %v370
    %v615 = vpop.f32.mrb[0].mxu0
    %v616 = vadd.f32 %v542, %v615
    %v617 = vpop.f32.mrb[0].mxu0
    %618 = vdwg.mxu0
    %v619 = vld [vmem:[%s23] sm:$0xff]
    %v620 = vld [vmem:[%s23 + $0x8] sm:$0xff]
    %v621 = vld [vmem:[%s23 + $0x10] sm:$0xff]
    %v622 = vld [vmem:[%s23 + $0x18] sm:$0xff]
    %v623 = vmul.f32 %v439, 0.35355338
    %v624 = vmul.f32 %v444, 0.35355338
    %v626 = vsel %vm188, %v623, 0
    %v629 = vsel %vm188, %v624, 0
    %v632 = vsel %vm188, %v525, 0
    %v635 = vsel %vm188, %v530, 0
    %637 = vmatprep.subr.mxu0 0.0
    %638 = vmatpush1.xpose.msra.mxu0 %v632
    %639 = vmatprep.subr.mxu0 0.0
    %640 = vmatpush1.xpose.msra.mxu0 %v635
    %641 = vmatprep.subr.mxu0 0.0
    %642 = vmatpush1.xpose.msra.mxu0 0.0
    %643 = vmatprep.subr.mxu0 0.0
    %644 = vmatpush1.xpose.msra.mxu0 0.0
    %645 = vmatprep.subr.mxu0 0.0
    %646 = vmatpush1.xpose.msra.mxu0 0.0
    %647 = vmatprep.subr.mxu0 0.0
    %648 = vmatpush1.xpose.msra.mxu0 0.0
    %649 = vmatprep.subr.mxu0 0.0
    %650 = vmatpush1.xpose.msra.mxu0 0.0
    %651 = vmatprep.subr.mxu0 0.0
    %652 = vmatpush1.xpose.msra.mxu0 0.0
    %653 = vmatprep.subr.mxu0 0.0
    %654 = vmatpush1.xpose.msra.mxu0 0.0
    %655 = vmatprep.subr.mxu0 0.0
    %656 = vmatpush1.xpose.msra.mxu0 0.0
    %657 = vmatprep.subr.mxu0 0.0
    %658 = vmatpush1.xpose.msra.mxu0 0.0
    %659 = vmatprep.subr.mxu0 0.0
    %660 = vmatpush1.xpose.msra.mxu0 0.0
    %661 = vmatprep.subr.mxu0 0.0
    %662 = vmatpush1.xpose.msra.mxu0 0.0
    %663 = vmatprep.subr.mxu0 0.0
    %664 = vmatpush1.xpose.msra.mxu0 0.0
    %665 = vmatprep.subr.mxu0 0.0
    %666 = vmatpush1.xpose.msra.mxu0 0.0
    %667 = vmatprep.subr.mxu0 0.0
    %668 = vmatpush1.xpose.msra.mxu0 0.0
    %669 = vmatprep.subr.mxu0 0.0
    %670 = vmatpush1.xpose.msra.mxu0 0.0
    %671 = vmatprep.subr.mxu0 0.0
    %672 = vmatpush1.xpose.msra.mxu0 0.0
    %673 = vmatprep.subr.mxu0 0.0
    %674 = vmatpush1.xpose.msra.mxu0 0.0
    %675 = vmatprep.subr.mxu0 0.0
    %676 = vmatpush1.xpose.msra.mxu0 0.0
    %677 = vmatprep.subr.mxu0 0.0
    %678 = vmatpush1.xpose.msra.mxu0 0.0
    %679 = vmatprep.subr.mxu0 0.0
    %680 = vmatpush1.xpose.msra.mxu0 0.0
    %681 = vmatprep.subr.mxu0 0.0
    %682 = vmatpush1.xpose.msra.mxu0 0.0
    %683 = vmatprep.subr.mxu0 0.0
    %684 = vmatpush1.xpose.msra.mxu0 0.0
    %685 = vmatprep.subr.mxu0 0.0
    %686 = vmatpush1.xpose.msra.mxu0 0.0
    %687 = vmatprep.subr.mxu0 0.0
    %688 = vmatpush1.xpose.msra.mxu0 0.0
    %689 = vmatprep.subr.mxu0 0.0
    %690 = vmatpush1.xpose.msra.mxu0 0.0
    %691 = vmatprep.subr.mxu0 0.0
    %692 = vmatpush1.xpose.msra.mxu0 0.0
    %693 = vmatprep.subr.mxu0 0.0
    %694 = vmatpush1.xpose.msra.mxu0 0.0
    %695 = vmatprep.subr.mxu0 0.0
    %696 = vmatpush1.xpose.msra.mxu0 0.0
    %697 = vmatprep.subr.mxu0 0.0
    %698 = vmatpush1.xpose.msra.mxu0 0.0
    %699 = vmatprep.subr.mxu0 0.0
    %700 = vmatpush1.xpose.msra.mxu0 0.0
    %701 = vmatprep.mubr.f32.mxu0 0.0
    %702 = vmatmul.mubr.f32.gmra.mrb[0].mxu0 %v626
    %v703 = vpop.f32.mrb[0].mxu0
    %v704 = vadd.f32 %v352, %v703
    %v705 = vpop.f32.mrb[0].mxu0
    %706 = vmatprep.mubr.f32.mxu0 0.0
    %707 = vmatmul.mubr.f32.gmra.mrb[0].mxu0 %v629
    %v708 = vpop.f32.mrb[0].mxu0
    %v709 = vadd.f32 %v353, %v708
    %v710 = vpop.f32.mrb[0].mxu0
    %711 = vdwg.mxu0
    %vm712 = vcmask 130048
    %v713 = vsel %vm712, %v704, -inf
    %714 = vmax.xlane.f32.xlu0 %v713
    %v715 = vpop.xlane.xlu0 %714
    %v716 = vsel %vm712, %v709, -inf
    %717 = vmax.xlane.f32.xlu0 %v716
    %v718 = vpop.xlane.xlu0 %717
    %v719 = vsub.f32 %v704, %v715
    %v720 = vsub.f32 %v709, %v718
    %v721 = vmul.f32 %v719, 1.442695
    %v722 = vpow.pop %v721
    %v723 = vmul.f32 %v720, 1.442695
    %v724 = vpow.pop %v723
    %v725 = vsel %vm712, %v722, 0.0
    %726 = vadd.xlane.f32.xlu0 %v725
    %v727 = vpop.xlane.xlu0 %726
    %v728 = vsel %vm712, %v724, 0.0
    %729 = vadd.xlane.f32.xlu0 %v728
    %v730 = vpop.xlane.xlu0 %729
    %v731 = vrcp.pop %v727
    %v732 = vmul.f32 %v722, %v731
    %v733 = vrcp.pop %v730
    %v734 = vmul.f32 %v724, %v733
    %v736 = vsel %vm712, %v732, 0
    %v739 = vsel %vm712, %v734, 0
    %741 = vmatprep.subr.mxu0 0.0
    %742 = vmatpush1.msra.mxu0 %v611
    %743 = vmatprep.subr.mxu0 0.0
    %744 = vmatpush1.msra.mxu0 %v616
    %745 = vmatprep.subr.mxu0 0.0
    %746 = vmatpush1.msra.mxu0 0.0
    %747 = vmatprep.subr.mxu0 0.0
    %748 = vmatpush1.msra.mxu0 0.0
    %749 = vmatprep.subr.mxu0 0.0
    %750 = vmatpush1.msra.mxu0 0.0
    %751 = vmatprep.subr.mxu0 0.0
    %752 = vmatpush1.msra.mxu0 0.0
    %753 = vmatprep.subr.mxu0 0.0
    %754 = vmatpush1.msra.mxu0 0.0
    %755 = vmatprep.subr.mxu0 0.0
    %756 = vmatpush1.msra.mxu0 0.0
    %757 = vmatprep.subr.mxu0 0.0
    %758 = vmatpush1.msra.mxu0 0.0
    %759 = vmatprep.subr.mxu0 0.0
    %760 = vmatpush1.msra.mxu0 0.0
    %761 = vmatprep.subr.mxu0 0.0
    %762 = vmatpush1.msra.mxu0 0.0
    %763 = vmatprep.subr.mxu0 0.0
    %764 = vmatpush1.msra.mxu0 0.0
    %765 = vmatprep.subr.mxu0 0.0
    %766 = vmatpush1.msra.mxu0 0.0
    %767 = vmatprep.subr.mxu0 0.0
    %768 = vmatpush1.msra.mxu0 0.0
    %769 = vmatprep.subr.mxu0 0.0
    %770 = vmatpush1.msra.mxu0 0.0
    %771 = vmatprep.subr.mxu0 0.0
    %772 = vmatpush1.msra.mxu0 0.0
    %773 = vmatprep.subr.mxu0 0.0
    %774 = vmatpush1.msra.mxu0 0.0
    %775 = vmatprep.subr.mxu0 0.0
    %776 = vmatpush1.msra.mxu0 0.0
    %777 = vmatprep.subr.mxu0 0.0
    %778 = vmatpush1.msra.mxu0 0.0
    %779 = vmatprep.subr.mxu0 0.0
    %780 = vmatpush1.msra.mxu0 0.0
    %781 = vmatprep.subr.mxu0 0.0
    %782 = vmatpush1.msra.mxu0 0.0
    %783 = vmatprep.subr.mxu0 0.0
    %784 = vmatpush1.msra.mxu0 0.0
    %785 = vmatprep.subr.mxu0 0.0
    %786 = vmatpush1.msra.mxu0 0.0
    %787 = vmatprep.subr.mxu0 0.0
    %788 = vmatpush1.msra.mxu0 0.0
    %789 = vmatprep.subr.mxu0 0.0
    %790 = vmatpush1.msra.mxu0 0.0
    %791 = vmatprep.subr.mxu0 0.0
    %792 = vmatpush1.msra.mxu0 0.0
    %793 = vmatprep.subr.mxu0 0.0
    %794 = vmatpush1.msra.mxu0 0.0
    %795 = vmatprep.subr.mxu0 0.0
    %796 = vmatpush1.msra.mxu0 0.0
    %797 = vmatprep.subr.mxu0 0.0
    %798 = vmatpush1.msra.mxu0 0.0
    %799 = vmatprep.subr.mxu0 0.0
    %800 = vmatpush1.msra.mxu0 0.0
    %801 = vmatprep.subr.mxu0 0.0
    %802 = vmatpush1.msra.mxu0 0.0
    %803 = vmatprep.subr.mxu0 0.0
    %804 = vmatpush1.msra.mxu0 0.0
    %805 = vmatprep.mubr.f32.mxu0 0.0
    %806 = vmatmul.mubr.f32.gmra.mrb[0].mxu0 %v736
    %v807 = vpop.f32.mrb[0].mxu0
    %v808 = vadd.f32 0.0, %v807
    %v809 = vpop.f32.mrb[0].mxu0
    %810 = vmatprep.mubr.f32.mxu0 0.0
    %811 = vmatmul.mubr.f32.gmra.mrb[0].mxu0 %v739
    %v812 = vpop.f32.mrb[0].mxu0
    %v813 = vadd.f32 0.0, %v812
    %v814 = vpop.f32.mrb[0].mxu0
    %815 = vdwg.mxu0
    %816 = vrot.lane.b32.xlu0 %v623, 120
    %v817 = vpop.permute.xlu0 %816
    %818 = vrot.lane.b32.xlu0 %v624, 120
    %v819 = vpop.permute.xlu0 %818
    %820 = vrot.lane.b32.xlu0 %v525, 120
    %v821 = vpop.permute.xlu0 %820
    %822 = vrot.lane.b32.xlu0 %v530, 120
    %v823 = vpop.permute.xlu0 %822
    %v824 = vsel %vm188, %v817, 0
    %v826 = vsel %vm188, %v819, 0
    %v828 = vsel %vm188, %v821, 0
    %v830 = vsel %vm188, %v823, 0
    %832 = vmatprep.subr.mxu0 0.0
    %833 = vmatpush1.xpose.msra.mxu0 %v828
    %834 = vmatprep.subr.mxu0 0.0
    %835 = vmatpush1.xpose.msra.mxu0 %v830
    %836 = vmatprep.subr.mxu0 0.0
    %837 = vmatpush1.xpose.msra.mxu0 0.0
    %838 = vmatprep.subr.mxu0 0.0
    %839 = vmatpush1.xpose.msra.mxu0 0.0
    %840 = vmatprep.subr.mxu0 0.0
    %841 = vmatpush1.xpose.msra.mxu0 0.0
    %842 = vmatprep.subr.mxu0 0.0
    %843 = vmatpush1.xpose.msra.mxu0 0.0
    %844 = vmatprep.subr.mxu0 0.0
    %845 = vmatpush1.xpose.msra.mxu0 0.0
    %846 = vmatprep.subr.mxu0 0.0
    %847 = vmatpush1.xpose.msra.mxu0 0.0
    %848 = vmatprep.subr.mxu0 0.0
    %849 = vmatpush1.xpose.msra.mxu0 0.0
    %850 = vmatprep.subr.mxu0 0.0
    %851 = vmatpush1.xpose.msra.mxu0 0.0
    %852 = vmatprep.subr.mxu0 0.0
    %853 = vmatpush1.xpose.msra.mxu0 0.0
    %854 = vmatprep.subr.mxu0 0.0
    %855 = vmatpush1.xpose.msra.mxu0 0.0
    %856 = vmatprep.subr.mxu0 0.0
    %857 = vmatpush1.xpose.msra.mxu0 0.0
    %858 = vmatprep.subr.mxu0 0.0
    %859 = vmatpush1.xpose.msra.mxu0 0.0
    %860 = vmatprep.subr.mxu0 0.0
    %861 = vmatpush1.xpose.msra.mxu0 0.0
    %862 = vmatprep.subr.mxu0 0.0
    %863 = vmatpush1.xpose.msra.mxu0 0.0
    %864 = vmatprep.subr.mxu0 0.0
    %865 = vmatpush1.xpose.msra.mxu0 0.0
    %866 = vmatprep.subr.mxu0 0.0
    %867 = vmatpush1.xpose.msra.mxu0 0.0
    %868 = vmatprep.subr.mxu0 0.0
    %869 = vmatpush1.xpose.msra.mxu0 0.0
    %870 = vmatprep.subr.mxu0 0.0
    %871 = vmatpush1.xpose.msra.mxu0 0.0
    %872 = vmatprep.subr.mxu0 0.0
    %873 = vmatpush1.xpose.msra.mxu0 0.0
    %874 = vmatprep.subr.mxu0 0.0
    %875 = vmatpush1.xpose.msra.mxu0 0.0
    %876 = vmatprep.subr.mxu0 0.0
    %877 = vmatpush1.xpose.msra.mxu0 0.0
    %878 = vmatprep.subr.mxu0 0.0
    %879 = vmatpush1.xpose.msra.mxu0 0.0
    %880 = vmatprep.subr.mxu0 0.0
    %881 = vmatpush1.xpose.msra.mxu0 0.0
    %882 = vmatprep.subr.mxu0 0.0
    %883 = vmatpush1.xpose.msra.mxu0 0.0
    %884 = vmatprep.subr.mxu0 0.0
    %885 = vmatpush1.xpose.msra.mxu0 0.0
    %886 = vmatprep.subr.mxu0 0.0
    %887 = vmatpush1.xpose.msra.mxu0 0.0
    %888 = vmatprep.subr.mxu0 0.0
    %889 = vmatpush1.xpose.msra.mxu0 0.0
    %890 = vmatprep.subr.mxu0 0.0
    %891 = vmatpush1.xpose.msra.mxu0 0.0
    %892 = vmatprep.subr.mxu0 0.0
    %893 = vmatpush1.xpose.msra.mxu0 0.0
    %894 = vmatprep.subr.mxu0 0.0
    %895 = vmatpush1.xpose.msra.mxu0 0.0
    %896 = vmatprep.mubr.f32.mxu0 0.0
    %897 = vmatmul.mubr.f32.gmra.mrb[0].mxu0 %v824
    %v898 = vpop.f32.mrb[0].mxu0
    %v899 = vadd.f32 %v352, %v898
    %v900 = vpop.f32.mrb[0].mxu0
    %901 = vmatprep.mubr.f32.mxu0 0.0
    %902 = vmatmul.mubr.f32.gmra.mrb[0].mxu0 %v826
    %v903 = vpop.f32.mrb[0].mxu0
    %v904 = vadd.f32 %v353, %v903
    %v905 = vpop.f32.mrb[0].mxu0
    %906 = vdwg.mxu0
    %v907 = vsel %vm712, %v899, -inf
    %908 = vmax.xlane.f32.xlu0 %v907
    %v909 = vpop.xlane.xlu0 %908
    %v910 = vsel %vm712, %v904, -inf
    %911 = vmax.xlane.f32.xlu0 %v910
    %v912 = vpop.xlane.xlu0 %911
    %v913 = vsub.f32 %v899, %v909
    %v914 = vsub.f32 %v904, %v912
    %v915 = vmul.f32 %v913, 1.442695
    %v916 = vpow.pop %v915
    %v917 = vmul.f32 %v914, 1.442695
    %v918 = vpow.pop %v917
    %v919 = vsel %vm712, %v916, 0.0
    %920 = vadd.xlane.f32.xlu0 %v919
    %v921 = vpop.xlane.xlu0 %920
    %v922 = vsel %vm712, %v918, 0.0
    %923 = vadd.xlane.f32.xlu0 %v922
    %v924 = vpop.xlane.xlu0 %923
    %v925 = vrcp.pop %v921
    %v926 = vmul.f32 %v916, %v925
    %v927 = vrcp.pop %v924
    %v928 = vmul.f32 %v918, %v927
    %931 = vrot.lane.b32.xlu0 %v611, 120
    %v932 = vpop.permute.xlu0 %931
    %933 = vrot.lane.b32.xlu0 %v616, 120
    %v934 = vpop.permute.xlu0 %933
    %v938 = vsel %vm712, %v926, 0
    %v941 = vsel %vm712, %v928, 0
    %943 = vmatprep.subr.mxu0 0.0
    %944 = vmatpush1.msra.mxu0 %v932
    %945 = vmatprep.subr.mxu0 0.0
    %946 = vmatpush1.msra.mxu0 %v934
    %947 = vmatprep.subr.mxu0 0.0
    %948 = vmatpush1.msra.mxu0 0.0
    %949 = vmatprep.subr.mxu0 0.0
    %950 = vmatpush1.msra.mxu0 0.0
    %951 = vmatprep.subr.mxu0 0.0
    %952 = vmatpush1.msra.mxu0 0.0
    %953 = vmatprep.subr.mxu0 0.0
    %954 = vmatpush1.msra.mxu0 0.0
    %955 = vmatprep.subr.mxu0 0.0
    %956 = vmatpush1.msra.mxu0 0.0
    %957 = vmatprep.subr.mxu0 0.0
    %958 = vmatpush1.msra.mxu0 0.0
    %959 = vmatprep.subr.mxu0 0.0
    %960 = vmatpush1.msra.mxu0 0.0
    %961 = vmatprep.subr.mxu0 0.0
    %962 = vmatpush1.msra.mxu0 0.0
    %963 = vmatprep.subr.mxu0 0.0
    %964 = vmatpush1.msra.mxu0 0.0
    %965 = vmatprep.subr.mxu0 0.0
    %966 = vmatpush1.msra.mxu0 0.0
    %967 = vmatprep.subr.mxu0 0.0
    %968 = vmatpush1.msra.mxu0 0.0
    %969 = vmatprep.subr.mxu0 0.0
    %970 = vmatpush1.msra.mxu0 0.0
    %971 = vmatprep.subr.mxu0 0.0
    %972 = vmatpush1.msra.mxu0 0.0
    %973 = vmatprep.subr.mxu0 0.0
    %974 = vmatpush1.msra.mxu0 0.0
    %975 = vmatprep.subr.mxu0 0.0
    %976 = vmatpush1.msra.mxu0 0.0
    %977 = vmatprep.subr.mxu0 0.0
    %978 = vmatpush1.msra.mxu0 0.0
    %979 = vmatprep.subr.mxu0 0.0
    %980 = vmatpush1.msra.mxu0 0.0
    %981 = vmatprep.subr.mxu0 0.0
    %982 = vmatpush1.msra.mxu0 0.0
    %983 = vmatprep.subr.mxu0 0.0
    %984 = vmatpush1.msra.mxu0 0.0
    %985 = vmatprep.subr.mxu0 0.0
    %986 = vmatpush1.msra.mxu0 0.0
    %987 = vmatprep.subr.mxu0 0.0
    %988 = vmatpush1.msra.mxu0 0.0
    %989 = vmatprep.subr.mxu0 0.0
    %990 = vmatpush1.msra.mxu0 0.0
    %991 = vmatprep.subr.mxu0 0.0
    %992 = vmatpush1.msra.mxu0 0.0
    %993 = vmatprep.subr.mxu0 0.0
    %994 = vmatpush1.msra.mxu0 0.0
    %995 = vmatprep.subr.mxu0 0.0
    %996 = vmatpush1.msra.mxu0 0.0
    %997 = vmatprep.subr.mxu0 0.0
    %998 = vmatpush1.msra.mxu0 0.0
    %999 = vmatprep.subr.mxu0 0.0
    %1000 = vmatpush1.msra.mxu0 0.0
    %1001 = vmatprep.subr.mxu0 0.0
    %1002 = vmatpush1.msra.mxu0 0.0
    %1003 = vmatprep.subr.mxu0 0.0
    %1004 = vmatpush1.msra.mxu0 0.0
    %1005 = vmatprep.subr.mxu0 0.0
    %1006 = vmatpush1.msra.mxu0 0.0
    %1007 = vmatprep.mubr.f32.mxu0 0.0
    %1008 = vmatmul.mubr.f32.gmra.mrb[0].mxu0 %v938
    %v1009 = vpop.f32.mrb[0].mxu0
    %v1010 = vadd.f32 0.0, %v1009
    %v1011 = vpop.f32.mrb[0].mxu0
    %1012 = vmatprep.mubr.f32.mxu0 0.0
    %1013 = vmatmul.mubr.f32.gmra.mrb[0].mxu0 %v941
    %v1014 = vpop.f32.mrb[0].mxu0
    %v1015 = vadd.f32 0.0, %v1014
    %v1016 = vpop.f32.mrb[0].mxu0
    %1017 = vdwg.mxu0
    %v1019 = vsel %vm188, %v1010, 0
    %v1022 = vsel %vm188, %v1015, 0
    %1024 = vmatprep.subr.mxu0 0.0
    %1025 = vmatpush1.msra.mxu0 %v620
    %1026 = vmatprep.subr.mxu0 0.0
    %1027 = vmatpush1.msra.mxu0 0.0
    %1028 = vmatprep.subr.mxu0 0.0
    %1029 = vmatpush1.msra.mxu0 0.0
    %1030 = vmatprep.subr.mxu0 0.0
    %1031 = vmatpush1.msra.mxu0 0.0
    %1032 = vmatprep.subr.mxu0 0.0
    %1033 = vmatpush1.msra.mxu0 0.0
    %1034 = vmatprep.subr.mxu0 0.0
    %1035 = vmatpush1.msra.mxu0 0.0
    %1036 = vmatprep.subr.mxu0 0.0
    %1037 = vmatpush1.msra.mxu0 0.0
    %1038 = vmatprep.subr.mxu0 0.0
    %1039 = vmatpush1.msra.mxu0 0.0
    %1040 = vmatprep.subr.mxu0 0.0
    %1041 = vmatpush1.msra.mxu0 0.0
    %1042 = vmatprep.subr.mxu0 0.0
    %1043 = vmatpush1.msra.mxu0 0.0
    %1044 = vmatprep.subr.mxu0 0.0
    %1045 = vmatpush1.msra.mxu0 0.0
    %1046 = vmatprep.subr.mxu0 0.0
    %1047 = vmatpush1.msra.mxu0 0.0
    %1048 = vmatprep.subr.mxu0 0.0
    %1049 = vmatpush1.msra.mxu0 0.0
    %1050 = vmatprep.subr.mxu0 0.0
    %1051 = vmatpush1.msra.mxu0 0.0
    %1052 = vmatprep.subr.mxu0 0.0
    %1053 = vmatpush1.msra.mxu0 0.0
    %1054 = vmatprep.subr.mxu0 0.0
    %1055 = vmatpush1.msra.mxu0 0.0
    %1056 = vmatprep.subr.mxu0 0.0
    %1057 = vmatpush1.msra.mxu0 0.0
    %1058 = vmatprep.subr.mxu0 0.0
    %1059 = vmatpush1.msra.mxu0 0.0
    %1060 = vmatprep.subr.mxu0 0.0
    %1061 = vmatpush1.msra.mxu0 0.0
    %1062 = vmatprep.subr.mxu0 0.0
    %1063 = vmatpush1.msra.mxu0 0.0
    %1064 = vmatprep.subr.mxu0 0.0
    %1065 = vmatpush1.msra.mxu0 0.0
    %1066 = vmatprep.subr.mxu0 0.0
    %1067 = vmatpush1.msra.mxu0 0.0
    %1068 = vmatprep.subr.mxu0 0.0
    %1069 = vmatpush1.msra.mxu0 0.0
    %1070 = vmatprep.subr.mxu0 0.0
    %1071 = vmatpush1.msra.mxu0 0.0
    %1072 = vmatprep.subr.mxu0 0.0
    %1073 = vmatpush1.msra.mxu0 0.0
    %1074 = vmatprep.subr.mxu0 0.0
    %1075 = vmatpush1.msra.mxu0 0.0
    %1076 = vmatprep.subr.mxu0 0.0
    %1077 = vmatpush1.msra.mxu0 0.0
    %1078 = vmatprep.subr.mxu0 0.0
    %1079 = vmatpush1.msra.mxu0 0.0
    %1080 = vmatprep.subr.mxu0 0.0
    %1081 = vmatpush1.msra.mxu0 0.0
    %1082 = vmatprep.subr.mxu0 0.0
    %1083 = vmatpush1.msra.mxu0 0.0
    %1084 = vmatprep.subr.mxu0 0.0
    %1085 = vmatpush1.msra.mxu0 0.0
    %1086 = vmatprep.subr.mxu0 0.0
    %1087 = vmatpush1.msra.mxu0 0.0
    %1088 = vmatprep.mubr.f32.mxu0 0.0
    %1089 = vmatmul.mubr.f32.gmra.mrb[0].mxu0 %v1019
    %v1090 = vpop.f32.mrb[0].mxu0
    %v1091 = vadd.f32 0.0, %v1090
    %v1092 = vpop.f32.mrb[0].mxu0
    %1093 = vmatprep.mubr.f32.mxu0 0.0
    %1094 = vmatmul.mubr.f32.gmra.mrb[0].mxu0 %v1022
    %v1095 = vpop.f32.mrb[0].mxu0
    %v1096 = vadd.f32 0.0, %v1095
    %v1097 = vpop.f32.mrb[0].mxu0
    %1098 = vdwg.mxu0
    %v1100 = vsel %vm188, %v808, 0
    %v1103 = vsel %vm188, %v813, 0
    %1105 = vmatprep.subr.mxu0 0.0
    %1106 = vmatpush1.msra.mxu0 %v619
    %1107 = vmatprep.subr.mxu0 0.0
    %1108 = vmatpush1.msra.mxu0 0.0
    %1109 = vmatprep.subr.mxu0 0.0
    %1110 = vmatpush1.msra.mxu0 0.0
    %1111 = vmatprep.subr.mxu0 0.0
    %1112 = vmatpush1.msra.mxu0 0.0
    %1113 = vmatprep.subr.mxu0 0.0
    %1114 = vmatpush1.msra.mxu0 0.0
    %1115 = vmatprep.subr.mxu0 0.0
    %1116 = vmatpush1.msra.mxu0 0.0
    %1117 = vmatprep.subr.mxu0 0.0
    %1118 = vmatpush1.msra.mxu0 0.0
    %1119 = vmatprep.subr.mxu0 0.0
    %1120 = vmatpush1.msra.mxu0 0.0
    %1121 = vmatprep.subr.mxu0 0.0
    %1122 = vmatpush1.msra.mxu0 0.0
    %1123 = vmatprep.subr.mxu0 0.0
    %1124 = vmatpush1.msra.mxu0 0.0
    %1125 = vmatprep.subr.mxu0 0.0
    %1126 = vmatpush1.msra.mxu0 0.0
    %1127 = vmatprep.subr.mxu0 0.0
    %1128 = vmatpush1.msra.mxu0 0.0
    %1129 = vmatprep.subr.mxu0 0.0
    %1130 = vmatpush1.msra.mxu0 0.0
    %1131 = vmatprep.subr.mxu0 0.0
    %1132 = vmatpush1.msra.mxu0 0.0
    %1133 = vmatprep.subr.mxu0 0.0
    %1134 = vmatpush1.msra.mxu0 0.0
    %1135 = vmatprep.subr.mxu0 0.0
    %1136 = vmatpush1.msra.mxu0 0.0
    %1137 = vmatprep.subr.mxu0 0.0
    %1138 = vmatpush1.msra.mxu0 0.0
    %1139 = vmatprep.subr.mxu0 0.0
    %1140 = vmatpush1.msra.mxu0 0.0
    %1141 = vmatprep.subr.mxu0 0.0
    %1142 = vmatpush1.msra.mxu0 0.0
    %1143 = vmatprep.subr.mxu0 0.0
    %1144 = vmatpush1.msra.mxu0 0.0
    %1145 = vmatprep.subr.mxu0 0.0
    %1146 = vmatpush1.msra.mxu0 0.0
    %1147 = vmatprep.subr.mxu0 0.0
    %1148 = vmatpush1.msra.mxu0 0.0
    %1149 = vmatprep.subr.mxu0 0.0
    %1150 = vmatpush1.msra.mxu0 0.0
    %1151 = vmatprep.subr.mxu0 0.0
    %1152 = vmatpush1.msra.mxu0 0.0
    %1153 = vmatprep.subr.mxu0 0.0
    %1154 = vmatpush1.msra.mxu0 0.0
    %1155 = vmatprep.subr.mxu0 0.0
    %1156 = vmatpush1.msra.mxu0 0.0
    %1157 = vmatprep.subr.mxu0 0.0
    %1158 = vmatpush1.msra.mxu0 0.0
    %1159 = vmatprep.subr.mxu0 0.0
    %1160 = vmatpush1.msra.mxu0 0.0
    %1161 = vmatprep.subr.mxu0 0.0
    %1162 = vmatpush1.msra.mxu0 0.0
    %1163 = vmatprep.subr.mxu0 0.0
    %1164 = vmatpush1.msra.mxu0 0.0
    %1165 = vmatprep.subr.mxu0 0.0
    %1166 = vmatpush1.msra.mxu0 0.0
    %1167 = vmatprep.subr.mxu0 0.0
    %1168 = vmatpush1.msra.mxu0 0.0
    %1169 = vmatprep.mubr.f32.mxu0 0.0
    %1170 = vmatmul.mubr.f32.gmra.mrb[0].mxu0 %v1100
    %v1171 = vpop.f32.mrb[0].mxu0
    %v1172 = vadd.f32 %v1091, %v1171
    %v1173 = vpop.f32.mrb[0].mxu0
    %1174 = vmatprep.mubr.f32.mxu0 0.0
    %1175 = vmatmul.mubr.f32.gmra.mrb[0].mxu0 %v1103
    %v1176 = vpop.f32.mrb[0].mxu0
    %v1177 = vadd.f32 %v1096, %v1176
    %v1178 = vpop.f32.mrb[0].mxu0
    %1179 = vdwg.mxu0
    %1180 = vrot.lane.b32.xlu0 %v623, 112
    %v1181 = vpop.permute.xlu0 %1180
    %1182 = vrot.lane.b32.xlu0 %v624, 112
    %v1183 = vpop.permute.xlu0 %1182
    %1184 = vrot.lane.b32.xlu0 %v525, 112
    %v1185 = vpop.permute.xlu0 %1184
    %1186 = vrot.lane.b32.xlu0 %v530, 112
    %v1187 = vpop.permute.xlu0 %1186
    %v1188 = vsel %vm188, %v1181, 0
    %v1190 = vsel %vm188, %v1183, 0
    %v1192 = vsel %vm188, %v1185, 0
    %v1194 = vsel %vm188, %v1187, 0
    %1196 = vmatprep.subr.mxu0 0.0
    %1197 = vmatpush1.xpose.msra.mxu0 %v1192
    %1198 = vmatprep.subr.mxu0 0.0
    %1199 = vmatpush1.xpose.msra.mxu0 %v1194
    %1200 = vmatprep.subr.mxu0 0.0
    %1201 = vmatpush1.xpose.msra.mxu0 0.0
    %1202 = vmatprep.subr.mxu0 0.0
    %1203 = vmatpush1.xpose.msra.mxu0 0.0
    %1204 = vmatprep.subr.mxu0 0.0
    %1205 = vmatpush1.xpose.msra.mxu0 0.0
    %1206 = vmatprep.subr.mxu0 0.0
    %1207 = vmatpush1.xpose.msra.mxu0 0.0
    %1208 = vmatprep.subr.mxu0 0.0
    %1209 = vmatpush1.xpose.msra.mxu0 0.0
    %1210 = vmatprep.subr.mxu0 0.0
    %1211 = vmatpush1.xpose.msra.mxu0 0.0
    %1212 = vmatprep.subr.mxu0 0.0
    %1213 = vmatpush1.xpose.msra.mxu0 0.0
    %1214 = vmatprep.subr.mxu0 0.0
    %1215 = vmatpush1.xpose.msra.mxu0 0.0
    %1216 = vmatprep.subr.mxu0 0.0
    %1217 = vmatpush1.xpose.msra.mxu0 0.0
    %1218 = vmatprep.subr.mxu0 0.0
    %1219 = vmatpush1.xpose.msra.mxu0 0.0
    %1220 = vmatprep.subr.mxu0 0.0
    %1221 = vmatpush1.xpose.msra.mxu0 0.0
    %1222 = vmatprep.subr.mxu0 0.0
    %1223 = vmatpush1.xpose.msra.mxu0 0.0
    %1224 = vmatprep.subr.mxu0 0.0
    %1225 = vmatpush1.xpose.msra.mxu0 0.0
    %1226 = vmatprep.subr.mxu0 0.0
    %1227 = vmatpush1.xpose.msra.mxu0 0.0
    %1228 = vmatprep.subr.mxu0 0.0
    %1229 = vmatpush1.xpose.msra.mxu0 0.0
    %1230 = vmatprep.subr.mxu0 0.0
    %1231 = vmatpush1.xpose.msra.mxu0 0.0
    %1232 = vmatprep.subr.mxu0 0.0
    %1233 = vmatpush1.xpose.msra.mxu0 0.0
    %1234 = vmatprep.subr.mxu0 0.0
    %1235 = vmatpush1.xpose.msra.mxu0 0.0
    %1236 = vmatprep.subr.mxu0 0.0
    %1237 = vmatpush1.xpose.msra.mxu0 0.0
    %1238 = vmatprep.subr.mxu0 0.0
    %1239 = vmatpush1.xpose.msra.mxu0 0.0
    %1240 = vmatprep.subr.mxu0 0.0
    %1241 = vmatpush1.xpose.msra.mxu0 0.0
    %1242 = vmatprep.subr.mxu0 0.0
    %1243 = vmatpush1.xpose.msra.mxu0 0.0
    %1244 = vmatprep.subr.mxu0 0.0
    %1245 = vmatpush1.xpose.msra.mxu0 0.0
    %1246 = vmatprep.subr.mxu0 0.0
    %1247 = vmatpush1.xpose.msra.mxu0 0.0
    %1248 = vmatprep.subr.mxu0 0.0
    %1249 = vmatpush1.xpose.msra.mxu0 0.0
    %1250 = vmatprep.subr.mxu0 0.0
    %1251 = vmatpush1.xpose.msra.mxu0 0.0
    %1252 = vmatprep.subr.mxu0 0.0
    %1253 = vmatpush1.xpose.msra.mxu0 0.0
    %1254 = vmatprep.subr.mxu0 0.0
    %1255 = vmatpush1.xpose.msra.mxu0 0.0
    %1256 = vmatprep.subr.mxu0 0.0
    %1257 = vmatpush1.xpose.msra.mxu0 0.0
    %1258 = vmatprep.subr.mxu0 0.0
    %1259 = vmatpush1.xpose.msra.mxu0 0.0
    %1260 = vmatprep.mubr.f32.mxu0 0.0
    %1261 = vmatmul.mubr.f32.gmra.mrb[0].mxu0 %v1188
    %v1262 = vpop.f32.mrb[0].mxu0
    %v1263 = vadd.f32 %v352, %v1262
    %v1264 = vpop.f32.mrb[0].mxu0
    %1265 = vmatprep.mubr.f32.mxu0 0.0
    %1266 = vmatmul.mubr.f32.gmra.mrb[0].mxu0 %v1190
    %v1267 = vpop.f32.mrb[0].mxu0
    %v1268 = vadd.f32 %v353, %v1267
    %v1269 = vpop.f32.mrb[0].mxu0
    %1270 = vdwg.mxu0
    %v1271 = vsel %vm712, %v1263, -inf
    %1272 = vmax.xlane.f32.xlu0 %v1271
    %v1273 = vpop.xlane.xlu0 %1272
    %v1274 = vsel %vm712, %v1268, -inf
    %1275 = vmax.xlane.f32.xlu0 %v1274
    %v1276 = vpop.xlane.xlu0 %1275
    %v1277 = vsub.f32 %v1263, %v1273
    %v1278 = vsub.f32 %v1268, %v1276
    %v1279 = vmul.f32 %v1277, 1.442695
    %v1280 = vpow.pop %v1279
    %v1281 = vmul.f32 %v1278, 1.442695
    %v1282 = vpow.pop %v1281
    %v1283 = vsel %vm712, %v1280, 0.0
    %1284 = vadd.xlane.f32.xlu0 %v1283
    %v1285 = vpop.xlane.xlu0 %1284
    %v1286 = vsel %vm712, %v1282, 0.0
    %1287 = vadd.xlane.f32.xlu0 %v1286
    %v1288 = vpop.xlane.xlu0 %1287
    %v1289 = vrcp.pop %v1285
    %v1290 = vmul.f32 %v1280, %v1289
    %v1291 = vrcp.pop %v1288
    %v1292 = vmul.f32 %v1282, %v1291
    %1293 = vrot.lane.b32.xlu0 %v611, 112
    %v1294 = vpop.permute.xlu0 %1293
    %1295 = vrot.lane.b32.xlu0 %v616, 112
    %v1296 = vpop.permute.xlu0 %1295
    %v1300 = vsel %vm712, %v1290, 0
    %v1303 = vsel %vm712, %v1292, 0
    %1305 = vmatprep.subr.mxu0 0.0
    %1306 = vmatpush1.msra.mxu0 %v1294
    %1307 = vmatprep.subr.mxu0 0.0
    %1308 = vmatpush1.msra.mxu0 %v1296
    %1309 = vmatprep.subr.mxu0 0.0
    %1310 = vmatpush1.msra.mxu0 0.0
    %1311 = vmatprep.subr.mxu0 0.0
    %1312 = vmatpush1.msra.mxu0 0.0
    %1313 = vmatprep.subr.mxu0 0.0
    %1314 = vmatpush1.msra.mxu0 0.0
    %1315 = vmatprep.subr.mxu0 0.0
    %1316 = vmatpush1.msra.mxu0 0.0
    %1317 = vmatprep.subr.mxu0 0.0
    %1318 = vmatpush1.msra.mxu0 0.0
    %1319 = vmatprep.subr.mxu0 0.0
    %1320 = vmatpush1.msra.mxu0 0.0
    %1321 = vmatprep.subr.mxu0 0.0
    %1322 = vmatpush1.msra.mxu0 0.0
    %1323 = vmatprep.subr.mxu0 0.0
    %1324 = vmatpush1.msra.mxu0 0.0
    %1325 = vmatprep.subr.mxu0 0.0
    %1326 = vmatpush1.msra.mxu0 0.0
    %1327 = vmatprep.subr.mxu0 0.0
    %1328 = vmatpush1.msra.mxu0 0.0
    %1329 = vmatprep.subr.mxu0 0.0
    %1330 = vmatpush1.msra.mxu0 0.0
    %1331 = vmatprep.subr.mxu0 0.0
    %1332 = vmatpush1.msra.mxu0 0.0
    %1333 = vmatprep.subr.mxu0 0.0
    %1334 = vmatpush1.msra.mxu0 0.0
    %1335 = vmatprep.subr.mxu0 0.0
    %1336 = vmatpush1.msra.mxu0 0.0
    %1337 = vmatprep.subr.mxu0 0.0
    %1338 = vmatpush1.msra.mxu0 0.0
    %1339 = vmatprep.subr.mxu0 0.0
    %1340 = vmatpush1.msra.mxu0 0.0
    %1341 = vmatprep.subr.mxu0 0.0
    %1342 = vmatpush1.msra.mxu0 0.0
    %1343 = vmatprep.subr.mxu0 0.0
    %1344 = vmatpush1.msra.mxu0 0.0
    %1345 = vmatprep.subr.mxu0 0.0
    %1346 = vmatpush1.msra.mxu0 0.0
    %1347 = vmatprep.subr.mxu0 0.0
    %1348 = vmatpush1.msra.mxu0 0.0
    %1349 = vmatprep.subr.mxu0 0.0
    %1350 = vmatpush1.msra.mxu0 0.0
    %1351 = vmatprep.subr.mxu0 0.0
    %1352 = vmatpush1.msra.mxu0 0.0
    %1353 = vmatprep.subr.mxu0 0.0
    %1354 = vmatpush1.msra.mxu0 0.0
    %1355 = vmatprep.subr.mxu0 0.0
    %1356 = vmatpush1.msra.mxu0 0.0
    %1357 = vmatprep.subr.mxu0 0.0
    %1358 = vmatpush1.msra.mxu0 0.0
    %1359 = vmatprep.subr.mxu0 0.0
    %1360 = vmatpush1.msra.mxu0 0.0
    %1361 = vmatprep.subr.mxu0 0.0
    %1362 = vmatpush1.msra.mxu0 0.0
    %1363 = vmatprep.subr.mxu0 0.0
    %1364 = vmatpush1.msra.mxu0 0.0
    %1365 = vmatprep.subr.mxu0 0.0
    %1366 = vmatpush1.msra.mxu0 0.0
    %1367 = vmatprep.subr.mxu0 0.0
    %1368 = vmatpush1.msra.mxu0 0.0
    %1369 = vmatprep.mubr.f32.mxu0 0.0
    %1370 = vmatmul.mubr.f32.gmra.mrb[0].mxu0 %v1300
    %v1371 = vpop.f32.mrb[0].mxu0
    %v1372 = vadd.f32 0.0, %v1371
    %v1373 = vpop.f32.mrb[0].mxu0
    %1374 = vmatprep.mubr.f32.mxu0 0.0
    %1375 = vmatmul.mubr.f32.gmra.mrb[0].mxu0 %v1303
    %v1376 = vpop.f32.mrb[0].mxu0
    %v1377 = vadd.f32 0.0, %v1376
    %v1378 = vpop.f32.mrb[0].mxu0
    %1379 = vdwg.mxu0
    %v1381 = vsel %vm188, %v1372, 0
    %v1384 = vsel %vm188, %v1377, 0
    %1386 = vmatprep.subr.mxu0 0.0
    %1387 = vmatpush1.msra.mxu0 %v621
    %1388 = vmatprep.subr.mxu0 0.0
    %1389 = vmatpush1.msra.mxu0 0.0
    %1390 = vmatprep.subr.mxu0 0.0
    %1391 = vmatpush1.msra.mxu0 0.0
    %1392 = vmatprep.subr.mxu0 0.0
    %1393 = vmatpush1.msra.mxu0 0.0
    %1394 = vmatprep.subr.mxu0 0.0
    %1395 = vmatpush1.msra.mxu0 0.0
    %1396 = vmatprep.subr.mxu0 0.0
    %1397 = vmatpush1.msra.mxu0 0.0
    %1398 = vmatprep.subr.mxu0 0.0
    %1399 = vmatpush1.msra.mxu0 0.0
    %1400 = vmatprep.subr.mxu0 0.0
    %1401 = vmatpush1.msra.mxu0 0.0
    %1402 = vmatprep.subr.mxu0 0.0
    %1403 = vmatpush1.msra.mxu0 0.0
    %1404 = vmatprep.subr.mxu0 0.0
    %1405 = vmatpush1.msra.mxu0 0.0
    %1406 = vmatprep.subr.mxu0 0.0
    %1407 = vmatpush1.msra.mxu0 0.0
    %1408 = vmatprep.subr.mxu0 0.0
    %1409 = vmatpush1.msra.mxu0 0.0
    %1410 = vmatprep.subr.mxu0 0.0
    %1411 = vmatpush1.msra.mxu0 0.0
    %1412 = vmatprep.subr.mxu0 0.0
    %1413 = vmatpush1.msra.mxu0 0.0
    %1414 = vmatprep.subr.mxu0 0.0
    %1415 = vmatpush1.msra.mxu0 0.0
    %1416 = vmatprep.subr.mxu0 0.0
    %1417 = vmatpush1.msra.mxu0 0.0
    %1418 = vmatprep.subr.mxu0 0.0
    %1419 = vmatpush1.msra.mxu0 0.0
    %1420 = vmatprep.subr.mxu0 0.0
    %1421 = vmatpush1.msra.mxu0 0.0
    %1422 = vmatprep.subr.mxu0 0.0
    %1423 = vmatpush1.msra.mxu0 0.0
    %1424 = vmatprep.subr.mxu0 0.0
    %1425 = vmatpush1.msra.mxu0 0.0
    %1426 = vmatprep.subr.mxu0 0.0
    %1427 = vmatpush1.msra.mxu0 0.0
    %1428 = vmatprep.subr.mxu0 0.0
    %1429 = vmatpush1.msra.mxu0 0.0
    %1430 = vmatprep.subr.mxu0 0.0
    %1431 = vmatpush1.msra.mxu0 0.0
    %1432 = vmatprep.subr.mxu0 0.0
    %1433 = vmatpush1.msra.mxu0 0.0
    %1434 = vmatprep.subr.mxu0 0.0
    %1435 = vmatpush1.msra.mxu0 0.0
    %1436 = vmatprep.subr.mxu0 0.0
    %1437 = vmatpush1.msra.mxu0 0.0
    %1438 = vmatprep.subr.mxu0 0.0
    %1439 = vmatpush1.msra.mxu0 0.0
    %1440 = vmatprep.subr.mxu0 0.0
    %1441 = vmatpush1.msra.mxu0 0.0
    %1442 = vmatprep.subr.mxu0 0.0
    %1443 = vmatpush1.msra.mxu0 0.0
    %1444 = vmatprep.subr.mxu0 0.0
    %1445 = vmatpush1.msra.mxu0 0.0
    %1446 = vmatprep.subr.mxu0 0.0
    %1447 = vmatpush1.msra.mxu0 0.0
    %1448 = vmatprep.subr.mxu0 0.0
    %1449 = vmatpush1.msra.mxu0 0.0
    %1450 = vmatprep.mubr.f32.mxu0 0.0
    %1451 = vmatmul.mubr.f32.gmra.mrb[0].mxu0 %v1381
    %v1452 = vpop.f32.mrb[0].mxu0
    %v1453 = vadd.f32 0.0, %v1452
    %v1454 = vpop.f32.mrb[0].mxu0
    %1455 = vmatprep.mubr.f32.mxu0 0.0
    %1456 = vmatmul.mubr.f32.gmra.mrb[0].mxu0 %v1384
    %v1457 = vpop.f32.mrb[0].mxu0
    %v1458 = vadd.f32 0.0, %v1457
    %v1459 = vpop.f32.mrb[0].mxu0
    %1460 = vdwg.mxu0
    %v1461 = vadd.f32 %v1172, %v1453
    %v1462 = vadd.f32 %v1177, %v1458
    %1463 = vrot.lane.b32.xlu0 %v623, 104
    %v1464 = vpop.permute.xlu0 %1463
    %1465 = vrot.lane.b32.xlu0 %v624, 104
    %v1466 = vpop.permute.xlu0 %1465
    %1467 = vrot.lane.b32.xlu0 %v525, 104
    %v1468 = vpop.permute.xlu0 %1467
    %1469 = vrot.lane.b32.xlu0 %v530, 104
    %v1470 = vpop.permute.xlu0 %1469
    %v1471 = vsel %vm188, %v1464, 0
    %v1473 = vsel %vm188, %v1466, 0
    %v1475 = vsel %vm188, %v1468, 0
    %v1477 = vsel %vm188, %v1470, 0
    %1479 = vmatprep.subr.mxu0 0.0
    %1480 = vmatpush1.xpose.msra.mxu0 %v1475
    %1481 = vmatprep.subr.mxu0 0.0
    %1482 = vmatpush1.xpose.msra.mxu0 %v1477
    %1483 = vmatprep.subr.mxu0 0.0
    %1484 = vmatpush1.xpose.msra.mxu0 0.0
    %1485 = vmatprep.subr.mxu0 0.0
    %1486 = vmatpush1.xpose.msra.mxu0 0.0
    %1487 = vmatprep.subr.mxu0 0.0
    %1488 = vmatpush1.xpose.msra.mxu0 0.0
    %1489 = vmatprep.subr.mxu0 0.0
    %1490 = vmatpush1.xpose.msra.mxu0 0.0
    %1491 = vmatprep.subr.mxu0 0.0
    %1492 = vmatpush1.xpose.msra.mxu0 0.0
    %1493 = vmatprep.subr.mxu0 0.0
    %1494 = vmatpush1.xpose.msra.mxu0 0.0
    %1495 = vmatprep.subr.mxu0 0.0
    %1496 = vmatpush1.xpose.msra.mxu0 0.0
    %1497 = vmatprep.subr.mxu0 0.0
    %1498 = vmatpush1.xpose.msra.mxu0 0.0
    %1499 = vmatprep.subr.mxu0 0.0
    %1500 = vmatpush1.xpose.msra.mxu0 0.0
    %1501 = vmatprep.subr.mxu0 0.0
    %1502 = vmatpush1.xpose.msra.mxu0 0.0
    %1503 = vmatprep.subr.mxu0 0.0
    %1504 = vmatpush1.xpose.msra.mxu0 0.0
    %1505 = vmatprep.subr.mxu0 0.0
    %1506 = vmatpush1.xpose.msra.mxu0 0.0
    %1507 = vmatprep.subr.mxu0 0.0
    %1508 = vmatpush1.xpose.msra.mxu0 0.0
    %1509 = vmatprep.subr.mxu0 0.0
    %1510 = vmatpush1.xpose.msra.mxu0 0.0
    %1511 = vmatprep.subr.mxu0 0.0
    %1512 = vmatpush1.xpose.msra.mxu0 0.0
    %1513 = vmatprep.subr.mxu0 0.0
    %1514 = vmatpush1.xpose.msra.mxu0 0.0
    %1515 = vmatprep.subr.mxu0 0.0
    %1516 = vmatpush1.xpose.msra.mxu0 0.0
    %1517 = vmatprep.subr.mxu0 0.0
    %1518 = vmatpush1.xpose.msra.mxu0 0.0
    %1519 = vmatprep.subr.mxu0 0.0
    %1520 = vmatpush1.xpose.msra.mxu0 0.0
    %1521 = vmatprep.subr.mxu0 0.0
    %1522 = vmatpush1.xpose.msra.mxu0 0.0
    %1523 = vmatprep.subr.mxu0 0.0
    %1524 = vmatpush1.xpose.msra.mxu0 0.0
    %1525 = vmatprep.subr.mxu0 0.0
    %1526 = vmatpush1.xpose.msra.mxu0 0.0
    %1527 = vmatprep.subr.mxu0 0.0
    %1528 = vmatpush1.xpose.msra.mxu0 0.0
    %1529 = vmatprep.subr.mxu0 0.0
    %1530 = vmatpush1.xpose.msra.mxu0 0.0
    %1531 = vmatprep.subr.mxu0 0.0
    %1532 = vmatpush1.xpose.msra.mxu0 0.0
    %1533 = vmatprep.subr.mxu0 0.0
    %1534 = vmatpush1.xpose.msra.mxu0 0.0
    %1535 = vmatprep.subr.mxu0 0.0
    %1536 = vmatpush1.xpose.msra.mxu0 0.0
    %1537 = vmatprep.subr.mxu0 0.0
    %1538 = vmatpush1.xpose.msra.mxu0 0.0
    %1539 = vmatprep.subr.mxu0 0.0
    %1540 = vmatpush1.xpose.msra.mxu0 0.0
    %1541 = vmatprep.subr.mxu0 0.0
    %1542 = vmatpush1.xpose.msra.mxu0 0.0
    %1543 = vmatprep.mubr.f32.mxu0 0.0
    %1544 = vmatmul.mubr.f32.gmra.mrb[0].mxu0 %v1471
    %v1545 = vpop.f32.mrb[0].mxu0
    %v1546 = vadd.f32 %v352, %v1545
    %v1547 = vpop.f32.mrb[0].mxu0
    %1548 = vmatprep.mubr.f32.mxu0 0.0
    %1549 = vmatmul.mubr.f32.gmra.mrb[0].mxu0 %v1473
    %v1550 = vpop.f32.mrb[0].mxu0
    %v1551 = vadd.f32 %v353, %v1550
    %v1552 = vpop.f32.mrb[0].mxu0
    %1553 = vdwg.mxu0
    %v1554 = vsel %vm712, %v1546, -inf
    %1555 = vmax.xlane.f32.xlu0 %v1554
    %v1556 = vpop.xlane.xlu0 %1555
    %v1557 = vsel %vm712, %v1551, -inf
    %1558 = vmax.xlane.f32.xlu0 %v1557
    %v1559 = vpop.xlane.xlu0 %1558
    %v1560 = vsub.f32 %v1546, %v1556
    %v1561 = vsub.f32 %v1551, %v1559
    %v1562 = vmul.f32 %v1560, 1.442695
    %v1563 = vpow.pop %v1562
    %v1564 = vmul.f32 %v1561, 1.442695
    %v1565 = vpow.pop %v1564
    %v1566 = vsel %vm712, %v1563, 0.0
    %1567 = vadd.xlane.f32.xlu0 %v1566
    %v1568 = vpop.xlane.xlu0 %1567
    %v1569 = vsel %vm712, %v1565, 0.0
    %1570 = vadd.xlane.f32.xlu0 %v1569
    %v1571 = vpop.xlane.xlu0 %1570
    %v1572 = vrcp.pop %v1568
    %v1573 = vmul.f32 %v1563, %v1572
    %v1574 = vrcp.pop %v1571
    %v1575 = vmul.f32 %v1565, %v1574
    %1576 = vrot.lane.b32.xlu0 %v611, 104
    %v1577 = vpop.permute.xlu0 %1576
    %1578 = vrot.lane.b32.xlu0 %v616, 104
    %v1579 = vpop.permute.xlu0 %1578
    %v1583 = vsel %vm712, %v1573, 0
    %v1586 = vsel %vm712, %v1575, 0
    %1588 = vmatprep.subr.mxu0 0.0
    %1589 = vmatpush1.msra.mxu0 %v1577
    %1590 = vmatprep.subr.mxu0 0.0
    %1591 = vmatpush1.msra.mxu0 %v1579
    %1592 = vmatprep.subr.mxu0 0.0
    %1593 = vmatpush1.msra.mxu0 0.0
    %1594 = vmatprep.subr.mxu0 0.0
    %1595 = vmatpush1.msra.mxu0 0.0
    %1596 = vmatprep.subr.mxu0 0.0
    %1597 = vmatpush1.msra.mxu0 0.0
    %1598 = vmatprep.subr.mxu0 0.0
    %1599 = vmatpush1.msra.mxu0 0.0
    %1600 = vmatprep.subr.mxu0 0.0
    %1601 = vmatpush1.msra.mxu0 0.0
    %1602 = vmatprep.subr.mxu0 0.0
    %1603 = vmatpush1.msra.mxu0 0.0
    %1604 = vmatprep.subr.mxu0 0.0
    %1605 = vmatpush1.msra.mxu0 0.0
    %1606 = vmatprep.subr.mxu0 0.0
    %1607 = vmatpush1.msra.mxu0 0.0
    %1608 = vmatprep.subr.mxu0 0.0
    %1609 = vmatpush1.msra.mxu0 0.0
    %1610 = vmatprep.subr.mxu0 0.0
    %1611 = vmatpush1.msra.mxu0 0.0
    %1612 = vmatprep.subr.mxu0 0.0
    %1613 = vmatpush1.msra.mxu0 0.0
    %1614 = vmatprep.subr.mxu0 0.0
    %1615 = vmatpush1.msra.mxu0 0.0
    %1616 = vmatprep.subr.mxu0 0.0
    %1617 = vmatpush1.msra.mxu0 0.0
    %1618 = vmatprep.subr.mxu0 0.0
    %1619 = vmatpush1.msra.mxu0 0.0
    %1620 = vmatprep.subr.mxu0 0.0
    %1621 = vmatpush1.msra.mxu0 0.0
    %1622 = vmatprep.subr.mxu0 0.0
    %1623 = vmatpush1.msra.mxu0 0.0
    %1624 = vmatprep.subr.mxu0 0.0
    %1625 = vmatpush1.msra.mxu0 0.0
    %1626 = vmatprep.subr.mxu0 0.0
    %1627 = vmatpush1.msra.mxu0 0.0
    %1628 = vmatprep.subr.mxu0 0.0
    %1629 = vmatpush1.msra.mxu0 0.0
    %1630 = vmatprep.subr.mxu0 0.0
    %1631 = vmatpush1.msra.mxu0 0.0
    %1632 = vmatprep.subr.mxu0 0.0
    %1633 = vmatpush1.msra.mxu0 0.0
    %1634 = vmatprep.subr.mxu0 0.0
    %1635 = vmatpush1.msra.mxu0 0.0
    %1636 = vmatprep.subr.mxu0 0.0
    %1637 = vmatpush1.msra.mxu0 0.0
    %1638 = vmatprep.subr.mxu0 0.0
    %1639 = vmatpush1.msra.mxu0 0.0
    %1640 = vmatprep.subr.mxu0 0.0
    %1641 = vmatpush1.msra.mxu0 0.0
    %1642 = vmatprep.subr.mxu0 0.0
    %1643 = vmatpush1.msra.mxu0 0.0
    %1644 = vmatprep.subr.mxu0 0.0
    %1645 = vmatpush1.msra.mxu0 0.0
    %1646 = vmatprep.subr.mxu0 0.0
    %1647 = vmatpush1.msra.mxu0 0.0
    %1648 = vmatprep.subr.mxu0 0.0
    %1649 = vmatpush1.msra.mxu0 0.0
    %1650 = vmatprep.subr.mxu0 0.0
    %1651 = vmatpush1.msra.mxu0 0.0
    %1652 = vmatprep.mubr.f32.mxu0 0.0
    %1653 = vmatmul.mubr.f32.gmra.mrb[0].mxu0 %v1583
    %v1654 = vpop.f32.mrb[0].mxu0
    %v1655 = vadd.f32 0.0, %v1654
    %v1656 = vpop.f32.mrb[0].mxu0
    %1657 = vmatprep.mubr.f32.mxu0 0.0
    %1658 = vmatmul.mubr.f32.gmra.mrb[0].mxu0 %v1586
    %v1659 = vpop.f32.mrb[0].mxu0
    %v1660 = vadd.f32 0.0, %v1659
    %v1661 = vpop.f32.mrb[0].mxu0
    %1662 = vdwg.mxu0
    %v1664 = vsel %vm188, %v1655, 0
    %v1667 = vsel %vm188, %v1660, 0
    %1669 = vmatprep.subr.mxu0 0.0
    %1670 = vmatpush1.msra.mxu0 %v622
    %1671 = vmatprep.subr.mxu0 0.0
    %1672 = vmatpush1.msra.mxu0 0.0
    %1673 = vmatprep.subr.mxu0 0.0
    %1674 = vmatpush1.msra.mxu0 0.0
    %1675 = vmatprep.subr.mxu0 0.0
    %1676 = vmatpush1.msra.mxu0 0.0
    %1677 = vmatprep.subr.mxu0 0.0
    %1678 = vmatpush1.msra.mxu0 0.0
    %1679 = vmatprep.subr.mxu0 0.0
    %1680 = vmatpush1.msra.mxu0 0.0
    %1681 = vmatprep.subr.mxu0 0.0
    %1682 = vmatpush1.msra.mxu0 0.0
    %1683 = vmatprep.subr.mxu0 0.0
    %1684 = vmatpush1.msra.mxu0 0.0
    %1685 = vmatprep.subr.mxu0 0.0
    %1686 = vmatpush1.msra.mxu0 0.0
    %1687 = vmatprep.subr.mxu0 0.0
    %1688 = vmatpush1.msra.mxu0 0.0
    %1689 = vmatprep.subr.mxu0 0.0
    %1690 = vmatpush1.msra.mxu0 0.0
    %1691 = vmatprep.subr.mxu0 0.0
    %1692 = vmatpush1.msra.mxu0 0.0
    %1693 = vmatprep.subr.mxu0 0.0
    %1694 = vmatpush1.msra.mxu0 0.0
    %1695 = vmatprep.subr.mxu0 0.0
    %1696 = vmatpush1.msra.mxu0 0.0
    %1697 = vmatprep.subr.mxu0 0.0
    %1698 = vmatpush1.msra.mxu0 0.0
    %1699 = vmatprep.subr.mxu0 0.0
    %1700 = vmatpush1.msra.mxu0 0.0
    %1701 = vmatprep.subr.mxu0 0.0
    %1702 = vmatpush1.msra.mxu0 0.0
    %1703 = vmatprep.subr.mxu0 0.0
    %1704 = vmatpush1.msra.mxu0 0.0
    %1705 = vmatprep.subr.mxu0 0.0
    %1706 = vmatpush1.msra.mxu0 0.0
    %1707 = vmatprep.subr.mxu0 0.0
    %1708 = vmatpush1.msra.mxu0 0.0
    %1709 = vmatprep.subr.mxu0 0.0
    %1710 = vmatpush1.msra.mxu0 0.0
    %1711 = vmatprep.subr.mxu0 0.0
    %1712 = vmatpush1.msra.mxu0 0.0
    %1713 = vmatprep.subr.mxu0 0.0
    %1714 = vmatpush1.msra.mxu0 0.0
    %1715 = vmatprep.subr.mxu0 0.0
    %1716 = vmatpush1.msra.mxu0 0.0
    %1717 = vmatprep.subr.mxu0 0.0
    %1718 = vmatpush1.msra.mxu0 0.0
    %1719 = vmatprep.subr.mxu0 0.0
    %1720 = vmatpush1.msra.mxu0 0.0
    %1721 = vmatprep.subr.mxu0 0.0
    %1722 = vmatpush1.msra.mxu0 0.0
    %1723 = vmatprep.subr.mxu0 0.0
    %1724 = vmatpush1.msra.mxu0 0.0
    %1725 = vmatprep.subr.mxu0 0.0
    %1726 = vmatpush1.msra.mxu0 0.0
    %1727 = vmatprep.subr.mxu0 0.0
    %1728 = vmatpush1.msra.mxu0 0.0
    %1729 = vmatprep.subr.mxu0 0.0
    %1730 = vmatpush1.msra.mxu0 0.0
    %1731 = vmatprep.subr.mxu0 0.0
    %1732 = vmatpush1.msra.mxu0 0.0
    %1733 = vmatprep.mubr.f32.mxu0 0.0
    %1734 = vmatmul.mubr.f32.gmra.mrb[0].mxu0 %v1664
    %v1735 = vpop.f32.mrb[0].mxu0
    %v1736 = vadd.f32 0.0, %v1735
    %v1737 = vpop.f32.mrb[0].mxu0
    %1738 = vmatprep.mubr.f32.mxu0 0.0
    %1739 = vmatmul.mubr.f32.gmra.mrb[0].mxu0 %v1667
    %v1740 = vpop.f32.mrb[0].mxu0
    %v1741 = vadd.f32 0.0, %v1740
    %v1742 = vpop.f32.mrb[0].mxu0
    %1743 = vdwg.mxu0
    %v1744 = vadd.f32 %v1461, %v1736
    %v1745 = vadd.f32 %v1462, %v1741
    %v1746 = vld [vmem:[%s25] sm:$0x1]
    %v1748 = vlaneseq
    %v1749 = vshrl.u32 %v1748, 7
    %v1750 = vsub.s32 0, %v1749
    %v1751 = vrot.slane %v1746, %v1750
    %v1753 = vadd.f32 %v1744, %v1751
    %v1754 = vadd.f32 %v1745, %v1751
    %v1755 = vadd.f32 %v1753, %v344
    %v1756 = vadd.f32 %v1754, %v349
    %v1757 = vld [vmem:[%s27] sm:$0x1]
    %v1758 = vld [vmem:[%s29] sm:$0x1]
    %v1759 = vsel %vm365, %v1755, 0.0
    %1760 = vadd.xlane.f32.xlu0 %v1759
    %v1761 = vpop.xlane.xlu0 %1760
    %v1762 = vsel %vm365, %v1756, 0.0
    %1763 = vadd.xlane.f32.xlu0 %v1762
    %v1764 = vpop.xlane.xlu0 %1763
    %v1765 = vrcp.pop 32.0
    %v1766 = vmul.f32 %v1761, %v1765
    %v1767 = vmul.f32 %v1764, %v1765
    %v1768 = vsub.f32 %v1755, %v1766
    %v1769 = vsub.f32 %v1756, %v1767
    %v1770 = vmul.f32 %v1768, %v1768
    %v1771 = vmul.f32 %v1769, %v1769
    %v1772 = vsel %vm365, %v1770, 0.0
    %1773 = vadd.xlane.f32.xlu0 %v1772
    %v1774 = vpop.xlane.xlu0 %1773
    %v1775 = vsel %vm365, %v1771, 0.0
    %1776 = vadd.xlane.f32.xlu0 %v1775
    %v1777 = vpop.xlane.xlu0 %1776
    %v1778 = vmul.f32 %v1774, %v1765
    %v1779 = vmul.f32 %v1777, %v1765
    %v1780 = vadd.f32 %v1778, 1e-05
    %v1781 = vadd.f32 %v1779, 1e-05
    %v1782 = vrsqrt.pop %v1780
    %v1783 = vrsqrt.pop %v1781
    %v1784 = vmul.f32 %v1768, %v1782
    %v1785 = vmul.f32 %v1769, %v1783
    %v1787 = vlaneseq
    %v1788 = vshrl.u32 %v1787, 7
    %v1789 = vsub.s32 0, %v1788
    %v1790 = vrot.slane %v1757, %v1789
    %v1792 = vmul.f32 %v1784, %v1790
    %v1793 = vmul.f32 %v1785, %v1790
    %v1795 = vlaneseq
    %v1796 = vshrl.u32 %v1795, 7
    %v1797 = vsub.s32 0, %v1796
    %v1798 = vrot.slane %v1758, %v1797
    %v1800 = vadd.f32 %v1792, %v1798
    %v1801 = vadd.f32 %v1793, %v1798
    %v1802 = vld [vmem:[%s31] sm:$0xff]
    %v1803 = vld [vmem:[%s31 + $0x8] sm:$0xff]
    %v1804 = vld [vmem:[%s31 + $0x10] sm:$0xff]
    %v1805 = vld [vmem:[%s31 + $0x18] sm:$0xff]
    %v1806 = vld [vmem:[%s33] sm:$0x1]
    %v1808 = vlaneseq
    %v1809 = vshrl.u32 %v1808, 7
    %v1810 = vsub.s32 0, %v1809
    %v1811 = vrot.slane %v1806, %v1810
    %v1814 = vsel %vm365, %v1800, 0
    %v1817 = vsel %vm365, %v1801, 0
    %1819 = vmatprep.subr.mxu0 0.0
    %1820 = vmatpush1.msra.mxu0 %v1802
    %1821 = vmatprep.subr.mxu0 0.0
    %1822 = vmatpush1.msra.mxu0 %v1803
    %1823 = vmatprep.subr.mxu0 0.0
    %1824 = vmatpush1.msra.mxu0 %v1804
    %1825 = vmatprep.subr.mxu0 0.0
    %1826 = vmatpush1.msra.mxu0 %v1805
    %1827 = vmatprep.subr.mxu0 0.0
    %1828 = vmatpush1.msra.mxu0 0.0
    %1829 = vmatprep.subr.mxu0 0.0
    %1830 = vmatpush1.msra.mxu0 0.0
    %1831 = vmatprep.subr.mxu0 0.0
    %1832 = vmatpush1.msra.mxu0 0.0
    %1833 = vmatprep.subr.mxu0 0.0
    %1834 = vmatpush1.msra.mxu0 0.0
    %1835 = vmatprep.subr.mxu0 0.0
    %1836 = vmatpush1.msra.mxu0 0.0
    %1837 = vmatprep.subr.mxu0 0.0
    %1838 = vmatpush1.msra.mxu0 0.0
    %1839 = vmatprep.subr.mxu0 0.0
    %1840 = vmatpush1.msra.mxu0 0.0
    %1841 = vmatprep.subr.mxu0 0.0
    %1842 = vmatpush1.msra.mxu0 0.0
    %1843 = vmatprep.subr.mxu0 0.0
    %1844 = vmatpush1.msra.mxu0 0.0
    %1845 = vmatprep.subr.mxu0 0.0
    %1846 = vmatpush1.msra.mxu0 0.0
    %1847 = vmatprep.subr.mxu0 0.0
    %1848 = vmatpush1.msra.mxu0 0.0
    %1849 = vmatprep.subr.mxu0 0.0
    %1850 = vmatpush1.msra.mxu0 0.0
    %1851 = vmatprep.subr.mxu0 0.0
    %1852 = vmatpush1.msra.mxu0 0.0
    %1853 = vmatprep.subr.mxu0 0.0
    %1854 = vmatpush1.msra.mxu0 0.0
    %1855 = vmatprep.subr.mxu0 0.0
    %1856 = vmatpush1.msra.mxu0 0.0
    %1857 = vmatprep.subr.mxu0 0.0
    %1858 = vmatpush1.msra.mxu0 0.0
    %1859 = vmatprep.subr.mxu0 0.0
    %1860 = vmatpush1.msra.mxu0 0.0
    %1861 = vmatprep.subr.mxu0 0.0
    %1862 = vmatpush1.msra.mxu0 0.0
    %1863 = vmatprep.subr.mxu0 0.0
    %1864 = vmatpush1.msra.mxu0 0.0
    %1865 = vmatprep.subr.mxu0 0.0
    %1866 = vmatpush1.msra.mxu0 0.0
    %1867 = vmatprep.subr.mxu0 0.0
    %1868 = vmatpush1.msra.mxu0 0.0
    %1869 = vmatprep.subr.mxu0 0.0
    %1870 = vmatpush1.msra.mxu0 0.0
    %1871 = vmatprep.subr.mxu0 0.0
    %1872 = vmatpush1.msra.mxu0 0.0
    %1873 = vmatprep.subr.mxu0 0.0
    %1874 = vmatpush1.msra.mxu0 0.0
    %1875 = vmatprep.subr.mxu0 0.0
    %1876 = vmatpush1.msra.mxu0 0.0
    %1877 = vmatprep.subr.mxu0 0.0
    %1878 = vmatpush1.msra.mxu0 0.0
    %1879 = vmatprep.subr.mxu0 0.0
    %1880 = vmatpush1.msra.mxu0 0.0
    %1881 = vmatprep.subr.mxu0 0.0
    %1882 = vmatpush1.msra.mxu0 0.0
    %1883 = vmatprep.mubr.f32.mxu0 0.0
    %1884 = vmatmul.mubr.f32.gmra.mrb[0].mxu0 %v1814
    %v1885 = vpop.f32.mrb[0].mxu0
    %v1886 = vadd.f32 %v1811, %v1885
    %v1887 = vpop.f32.mrb[0].mxu0
    %1888 = vmatprep.mubr.f32.mxu0 0.0
    %1889 = vmatmul.mubr.f32.gmra.mrb[0].mxu0 %v1817
    %v1890 = vpop.f32.mrb[0].mxu0
    %v1891 = vadd.f32 %v1811, %v1890
    %v1892 = vpop.f32.mrb[0].mxu0
    %1893 = vdwg.mxu0
    %v1894 = vmax.f32 %v1886, 0.0
    %v1895 = vmax.f32 %v1891, 0.0
    %v1896 = vld [vmem:[%s35] sm:$0xff]
    %v1897 = vld [vmem:[%s35 + $0x8] sm:$0xff]
    %v1898 = vld [vmem:[%s35 + $0x10] sm:$0xff]
    %v1899 = vld [vmem:[%s35 + $0x18] sm:$0xff]
    %v1900 = vld [vmem:[%s35 + $0x20] sm:$0xff]
    %v1901 = vld [vmem:[%s35 + $0x28] sm:$0xff]
    %v1902 = vld [vmem:[%s35 + $0x30] sm:$0xff]
    %v1903 = vld [vmem:[%s35 + $0x38] sm:$0xff]
    %v1904 = vld [vmem:[%s35 + $0x40] sm:$0xff]
    %v1905 = vld [vmem:[%s35 + $0x48] sm:$0xff]
    %v1906 = vld [vmem:[%s35 + $0x50] sm:$0xff]
    %v1907 = vld [vmem:[%s35 + $0x58] sm:$0xff]
    %v1908 = vld [vmem:[%s35 + $0x60] sm:$0xff]
    %v1909 = vld [vmem:[%s35 + $0x68] sm:$0xff]
    %v1910 = vld [vmem:[%s35 + $0x70] sm:$0xff]
    %v1911 = vld [vmem:[%s35 + $0x78] sm:$0xff]
    %v1912 = vld [vmem:[%s37] sm:$0x1]
    %v1914 = vlaneseq
    %v1915 = vshrl.u32 %v1914, 7
    %v1916 = vsub.s32 0, %v1915
    %v1917 = vrot.slane %v1912, %v1916
    %1919 = vmatprep.subr.mxu0 0.0
    %1920 = vmatpush1.msra.mxu0 %v1896
    %1921 = vmatprep.subr.mxu0 0.0
    %1922 = vmatpush1.msra.mxu0 %v1897
    %1923 = vmatprep.subr.mxu0 0.0
    %1924 = vmatpush1.msra.mxu0 %v1898
    %1925 = vmatprep.subr.mxu0 0.0
    %1926 = vmatpush1.msra.mxu0 %v1899
    %1927 = vmatprep.subr.mxu0 0.0
    %1928 = vmatpush1.msra.mxu0 %v1900
    %1929 = vmatprep.subr.mxu0 0.0
    %1930 = vmatpush1.msra.mxu0 %v1901
    %1931 = vmatprep.subr.mxu0 0.0
    %1932 = vmatpush1.msra.mxu0 %v1902
    %1933 = vmatprep.subr.mxu0 0.0
    %1934 = vmatpush1.msra.mxu0 %v1903
    %1935 = vmatprep.subr.mxu0 0.0
    %1936 = vmatpush1.msra.mxu0 %v1904
    %1937 = vmatprep.subr.mxu0 0.0
    %1938 = vmatpush1.msra.mxu0 %v1905
    %1939 = vmatprep.subr.mxu0 0.0
    %1940 = vmatpush1.msra.mxu0 %v1906
    %1941 = vmatprep.subr.mxu0 0.0
    %1942 = vmatpush1.msra.mxu0 %v1907
    %1943 = vmatprep.subr.mxu0 0.0
    %1944 = vmatpush1.msra.mxu0 %v1908
    %1945 = vmatprep.subr.mxu0 0.0
    %1946 = vmatpush1.msra.mxu0 %v1909
    %1947 = vmatprep.subr.mxu0 0.0
    %1948 = vmatpush1.msra.mxu0 %v1910
    %1949 = vmatprep.subr.mxu0 0.0
    %1950 = vmatpush1.msra.mxu0 %v1911
    %1951 = vmatprep.subr.mxu0 0.0
    %1952 = vmatpush1.msra.mxu0 0.0
    %1953 = vmatprep.subr.mxu0 0.0
    %1954 = vmatpush1.msra.mxu0 0.0
    %1955 = vmatprep.subr.mxu0 0.0
    %1956 = vmatpush1.msra.mxu0 0.0
    %1957 = vmatprep.subr.mxu0 0.0
    %1958 = vmatpush1.msra.mxu0 0.0
    %1959 = vmatprep.subr.mxu0 0.0
    %1960 = vmatpush1.msra.mxu0 0.0
    %1961 = vmatprep.subr.mxu0 0.0
    %1962 = vmatpush1.msra.mxu0 0.0
    %1963 = vmatprep.subr.mxu0 0.0
    %1964 = vmatpush1.msra.mxu0 0.0
    %1965 = vmatprep.subr.mxu0 0.0
    %1966 = vmatpush1.msra.mxu0 0.0
    %1967 = vmatprep.subr.mxu0 0.0
    %1968 = vmatpush1.msra.mxu0 0.0
    %1969 = vmatprep.subr.mxu0 0.0
    %1970 = vmatpush1.msra.mxu0 0.0
    %1971 = vmatprep.subr.mxu0 0.0
    %1972 = vmatpush1.msra.mxu0 0.0
    %1973 = vmatprep.subr.mxu0 0.0
    %1974 = vmatpush1.msra.mxu0 0.0
    %1975 = vmatprep.subr.mxu0 0.0
    %1976 = vmatpush1.msra.mxu0 0.0
    %1977 = vmatprep.subr.mxu0 0.0
    %1978 = vmatpush1.msra.mxu0 0.0
    %1979 = vmatprep.subr.mxu0 0.0
    %1980 = vmatpush1.msra.mxu0 0.0
    %1981 = vmatprep.subr.mxu0 0.0
    %1982 = vmatpush1.msra.mxu0 0.0
    %1983 = vmatprep.mubr.f32.mxu0 0.0
    %1984 = vmatmul.mubr.f32.gmra.mrb[0].mxu0 %v1894
    %v1985 = vpop.f32.mrb[0].mxu0
    %v1986 = vadd.f32 %v1917, %v1985
    %v1987 = vpop.f32.mrb[0].mxu0
    %1988 = vmatprep.mubr.f32.mxu0 0.0
    %1989 = vmatmul.mubr.f32.gmra.mrb[0].mxu0 %v1895
    %v1990 = vpop.f32.mrb[0].mxu0
    %v1991 = vadd.f32 %v1917, %v1990
    %v1992 = vpop.f32.mrb[0].mxu0
    %1993 = vdwg.mxu0
    %v1994 = vadd.f32 %v1986, %v1800
    %v1995 = vadd.f32 %v1991, %v1801
    %v1996 = vld [vmem:[%s39] sm:$0x1]
    %v1997 = vld [vmem:[%s41] sm:$0x1]
    %v1998 = vsel %vm365, %v1994, 0.0
    %1999 = vadd.xlane.f32.xlu0 %v1998
    %v2000 = vpop.xlane.xlu0 %1999
    %v2001 = vsel %vm365, %v1995, 0.0
    %2002 = vadd.xlane.f32.xlu0 %v2001
    %v2003 = vpop.xlane.xlu0 %2002
    %v2004 = vmul.f32 %v2000, %v1765
    %v2005 = vmul.f32 %v2003, %v1765
    %v2006 = vsub.f32 %v1994, %v2004
    %v2007 = vsub.f32 %v1995, %v2005
    %v2008 = vmul.f32 %v2006, %v2006
    %v2009 = vmul.f32 %v2007, %v2007
    %v2010 = vsel %vm365, %v2008, 0.0
    %2011 = vadd.xlane.f32.xlu0 %v2010
    %v2012 = vpop.xlane.xlu0 %2011
    %v2013 = vsel %vm365, %v2009, 0.0
    %2014 = vadd.xlane.f32.xlu0 %v2013
    %v2015 = vpop.xlane.xlu0 %2014
    %v2016 = vmul.f32 %v2012, %v1765
    %v2017 = vmul.f32 %v2015, %v1765
    %v2018 = vadd.f32 %v2016, 1e-05
    %v2019 = vadd.f32 %v2017, 1e-05
    %v2020 = vrsqrt.pop %v2018
    %v2021 = vrsqrt.pop %v2019
    %v2022 = vmul.f32 %v2006, %v2020
    %v2023 = vmul.f32 %v2007, %v2021
    %v2025 = vlaneseq
    %v2026 = vshrl.u32 %v2025, 7
    %v2027 = vsub.s32 0, %v2026
    %v2028 = vrot.slane %v1996, %v2027
    %v2030 = vmul.f32 %v2022, %v2028
    %v2031 = vmul.f32 %v2023, %v2028
    %v2033 = vlaneseq
    %v2034 = vshrl.u32 %v2033, 7
    %v2035 = vsub.s32 0, %v2034
    %v2036 = vrot.slane %v1997, %v2035
    %v2038 = vadd.f32 %v2030, %v2036
    %v2039 = vadd.f32 %v2031, %v2036
    %v2040 = vld [vmem:[%s43] sm:$0xff]
    %v2041 = vld [vmem:[%s43 + $0x8] sm:$0xff]
    %v2042 = vld [vmem:[%s43 + $0x10] sm:$0xff]
    %v2043 = vld [vmem:[%s43 + $0x18] sm:$0xff]
    %v2044 = vld [vmem:[%s45] sm:$0x1]
    %v2046 = vlaneseq
    %v2047 = vshrl.u32 %v2046, 7
    %v2048 = vsub.s32 0, %v2047
    %v2049 = vrot.slane %v2044, %v2048
    %v2052 = vsel %vm365, %v2038, 0
    %v2055 = vsel %vm365, %v2039, 0
    %2057 = vmatprep.subr.mxu0 0.0
    %2058 = vmatpush1.msra.mxu0 %v2040
    %2059 = vmatprep.subr.mxu0 0.0
    %2060 = vmatpush1.msra.mxu0 %v2041
    %2061 = vmatprep.subr.mxu0 0.0
    %2062 = vmatpush1.msra.mxu0 %v2042
    %2063 = vmatprep.subr.mxu0 0.0
    %2064 = vmatpush1.msra.mxu0 %v2043
    %2065 = vmatprep.subr.mxu0 0.0
    %2066 = vmatpush1.msra.mxu0 0.0
    %2067 = vmatprep.subr.mxu0 0.0
    %2068 = vmatpush1.msra.mxu0 0.0
    %2069 = vmatprep.subr.mxu0 0.0
    %2070 = vmatpush1.msra.mxu0 0.0
    %2071 = vmatprep.subr.mxu0 0.0
    %2072 = vmatpush1.msra.mxu0 0.0
    %2073 = vmatprep.subr.mxu0 0.0
    %2074 = vmatpush1.msra.mxu0 0.0
    %2075 = vmatprep.subr.mxu0 0.0
    %2076 = vmatpush1.msra.mxu0 0.0
    %2077 = vmatprep.subr.mxu0 0.0
    %2078 = vmatpush1.msra.mxu0 0.0
    %2079 = vmatprep.subr.mxu0 0.0
    %2080 = vmatpush1.msra.mxu0 0.0
    %2081 = vmatprep.subr.mxu0 0.0
    %2082 = vmatpush1.msra.mxu0 0.0
    %2083 = vmatprep.subr.mxu0 0.0
    %2084 = vmatpush1.msra.mxu0 0.0
    %2085 = vmatprep.subr.mxu0 0.0
    %2086 = vmatpush1.msra.mxu0 0.0
    %2087 = vmatprep.subr.mxu0 0.0
    %2088 = vmatpush1.msra.mxu0 0.0
    %2089 = vmatprep.subr.mxu0 0.0
    %2090 = vmatpush1.msra.mxu0 0.0
    %2091 = vmatprep.subr.mxu0 0.0
    %2092 = vmatpush1.msra.mxu0 0.0
    %2093 = vmatprep.subr.mxu0 0.0
    %2094 = vmatpush1.msra.mxu0 0.0
    %2095 = vmatprep.subr.mxu0 0.0
    %2096 = vmatpush1.msra.mxu0 0.0
    %2097 = vmatprep.subr.mxu0 0.0
    %2098 = vmatpush1.msra.mxu0 0.0
    %2099 = vmatprep.subr.mxu0 0.0
    %2100 = vmatpush1.msra.mxu0 0.0
    %2101 = vmatprep.subr.mxu0 0.0
    %2102 = vmatpush1.msra.mxu0 0.0
    %2103 = vmatprep.subr.mxu0 0.0
    %2104 = vmatpush1.msra.mxu0 0.0
    %2105 = vmatprep.subr.mxu0 0.0
    %2106 = vmatpush1.msra.mxu0 0.0
    %2107 = vmatprep.subr.mxu0 0.0
    %2108 = vmatpush1.msra.mxu0 0.0
    %2109 = vmatprep.subr.mxu0 0.0
    %2110 = vmatpush1.msra.mxu0 0.0
    %2111 = vmatprep.subr.mxu0 0.0
    %2112 = vmatpush1.msra.mxu0 0.0
    %2113 = vmatprep.subr.mxu0 0.0
    %2114 = vmatpush1.msra.mxu0 0.0
    %2115 = vmatprep.subr.mxu0 0.0
    %2116 = vmatpush1.msra.mxu0 0.0
    %2117 = vmatprep.subr.mxu0 0.0
    %2118 = vmatpush1.msra.mxu0 0.0
    %2119 = vmatprep.subr.mxu0 0.0
    %2120 = vmatpush1.msra.mxu0 0.0
    %2121 = vmatprep.mubr.f32.mxu0 0.0
    %2122 = vmatmul.mubr.f32.gmra.mrb[0].mxu0 %v2052
    %v2123 = vpop.f32.mrb[0].mxu0
    %v2124 = vadd.f32 %v2049, %v2123
    %v2125 = vpop.f32.mrb[0].mxu0
    %2126 = vmatprep.mubr.f32.mxu0 0.0
    %2127 = vmatmul.mubr.f32.gmra.mrb[0].mxu0 %v2055
    %v2128 = vpop.f32.mrb[0].mxu0
    %v2129 = vadd.f32 %v2049, %v2128
    %v2130 = vpop.f32.mrb[0].mxu0
    %2131 = vdwg.mxu0
    %v2132 = vld [vmem:[%s47] sm:$0xff]
    %v2133 = vld [vmem:[%s47 + $0x8] sm:$0xff]
    %v2134 = vld [vmem:[%s47 + $0x10] sm:$0xff]
    %v2135 = vld [vmem:[%s47 + $0x18] sm:$0xff]
    %v2136 = vld [vmem:[%s49] sm:$0x1]
    %v2138 = vlaneseq
    %v2139 = vshrl.u32 %v2138, 7
    %v2140 = vsub.s32 0, %v2139
    %v2141 = vrot.slane %v2136, %v2140
    %2143 = vmatprep.subr.mxu0 0.0
    %2144 = vmatpush1.msra.mxu0 %v2132
    %2145 = vmatprep.subr.mxu0 0.0
    %2146 = vmatpush1.msra.mxu0 %v2133
    %2147 = vmatprep.subr.mxu0 0.0
    %2148 = vmatpush1.msra.mxu0 %v2134
    %2149 = vmatprep.subr.mxu0 0.0
    %2150 = vmatpush1.msra.mxu0 %v2135
    %2151 = vmatprep.subr.mxu0 0.0
    %2152 = vmatpush1.msra.mxu0 0.0
    %2153 = vmatprep.subr.mxu0 0.0
    %2154 = vmatpush1.msra.mxu0 0.0
    %2155 = vmatprep.subr.mxu0 0.0
    %2156 = vmatpush1.msra.mxu0 0.0
    %2157 = vmatprep.subr.mxu0 0.0
    %2158 = vmatpush1.msra.mxu0 0.0
    %2159 = vmatprep.subr.mxu0 0.0
    %2160 = vmatpush1.msra.mxu0 0.0
    %2161 = vmatprep.subr.mxu0 0.0
    %2162 = vmatpush1.msra.mxu0 0.0
    %2163 = vmatprep.subr.mxu0 0.0
    %2164 = vmatpush1.msra.mxu0 0.0
    %2165 = vmatprep.subr.mxu0 0.0
    %2166 = vmatpush1.msra.mxu0 0.0
    %2167 = vmatprep.subr.mxu0 0.0
    %2168 = vmatpush1.msra.mxu0 0.0
    %2169 = vmatprep.subr.mxu0 0.0
    %2170 = vmatpush1.msra.mxu0 0.0
    %2171 = vmatprep.subr.mxu0 0.0
    %2172 = vmatpush1.msra.mxu0 0.0
    %2173 = vmatprep.subr.mxu0 0.0
    %2174 = vmatpush1.msra.mxu0 0.0
    %2175 = vmatprep.subr.mxu0 0.0
    %2176 = vmatpush1.msra.mxu0 0.0
    %2177 = vmatprep.subr.mxu0 0.0
    %2178 = vmatpush1.msra.mxu0 0.0
    %2179 = vmatprep.subr.mxu0 0.0
    %2180 = vmatpush1.msra.mxu0 0.0
    %2181 = vmatprep.subr.mxu0 0.0
    %2182 = vmatpush1.msra.mxu0 0.0
    %2183 = vmatprep.subr.mxu0 0.0
    %2184 = vmatpush1.msra.mxu0 0.0
    %2185 = vmatprep.subr.mxu0 0.0
    %2186 = vmatpush1.msra.mxu0 0.0
    %2187 = vmatprep.subr.mxu0 0.0
    %2188 = vmatpush1.msra.mxu0 0.0
    %2189 = vmatprep.subr.mxu0 0.0
    %2190 = vmatpush1.msra.mxu0 0.0
    %2191 = vmatprep.subr.mxu0 0.0
    %2192 = vmatpush1.msra.mxu0 0.0
    %2193 = vmatprep.subr.mxu0 0.0
    %2194 = vmatpush1.msra.mxu0 0.0
    %2195 = vmatprep.subr.mxu0 0.0
    %2196 = vmatpush1.msra.mxu0 0.0
    %2197 = vmatprep.subr.mxu0 0.0
    %2198 = vmatpush1.msra.mxu0 0.0
    %2199 = vmatprep.subr.mxu0 0.0
    %2200 = vmatpush1.msra.mxu0 0.0
    %2201 = vmatprep.subr.mxu0 0.0
    %2202 = vmatpush1.msra.mxu0 0.0
    %2203 = vmatprep.subr.mxu0 0.0
    %2204 = vmatpush1.msra.mxu0 0.0
    %2205 = vmatprep.subr.mxu0 0.0
    %2206 = vmatpush1.msra.mxu0 0.0
    %2207 = vmatprep.mubr.f32.mxu0 0.0
    %2208 = vmatmul.mubr.f32.gmra.mrb[0].mxu0 %v2052
    %v2209 = vpop.f32.mrb[0].mxu0
    %v2210 = vadd.f32 %v2141, %v2209
    %v2211 = vpop.f32.mrb[0].mxu0
    %2212 = vmatprep.mubr.f32.mxu0 0.0
    %2213 = vmatmul.mubr.f32.gmra.mrb[0].mxu0 %v2055
    %v2214 = vpop.f32.mrb[0].mxu0
    %v2215 = vadd.f32 %v2141, %v2214
    %v2216 = vpop.f32.mrb[0].mxu0
    %2217 = vdwg.mxu0
    %v2218 = vld [vmem:[%s51] sm:$0xff]
    %v2219 = vld [vmem:[%s51 + $0x8] sm:$0xff]
    %v2220 = vld [vmem:[%s51 + $0x10] sm:$0xff]
    %v2221 = vld [vmem:[%s51 + $0x18] sm:$0xff]
    %v2222 = vld [vmem:[%s53] sm:$0x1]
    %v2224 = vlaneseq
    %v2225 = vshrl.u32 %v2224, 7
    %v2226 = vsub.s32 0, %v2225
    %v2227 = vrot.slane %v2222, %v2226
    %2229 = vmatprep.subr.mxu0 0.0
    %2230 = vmatpush1.msra.mxu0 %v2218
    %2231 = vmatprep.subr.mxu0 0.0
    %2232 = vmatpush1.msra.mxu0 %v2219
    %2233 = vmatprep.subr.mxu0 0.0
    %2234 = vmatpush1.msra.mxu0 %v2220
    %2235 = vmatprep.subr.mxu0 0.0
    %2236 = vmatpush1.msra.mxu0 %v2221
    %2237 = vmatprep.subr.mxu0 0.0
    %2238 = vmatpush1.msra.mxu0 0.0
    %2239 = vmatprep.subr.mxu0 0.0
    %2240 = vmatpush1.msra.mxu0 0.0
    %2241 = vmatprep.subr.mxu0 0.0
    %2242 = vmatpush1.msra.mxu0 0.0
    %2243 = vmatprep.subr.mxu0 0.0
    %2244 = vmatpush1.msra.mxu0 0.0
    %2245 = vmatprep.subr.mxu0 0.0
    %2246 = vmatpush1.msra.mxu0 0.0
    %2247 = vmatprep.subr.mxu0 0.0
    %2248 = vmatpush1.msra.mxu0 0.0
    %2249 = vmatprep.subr.mxu0 0.0
    %2250 = vmatpush1.msra.mxu0 0.0
    %2251 = vmatprep.subr.mxu0 0.0
    %2252 = vmatpush1.msra.mxu0 0.0
    %2253 = vmatprep.subr.mxu0 0.0
    %2254 = vmatpush1.msra.mxu0 0.0
    %2255 = vmatprep.subr.mxu0 0.0
    %2256 = vmatpush1.msra.mxu0 0.0
    %2257 = vmatprep.subr.mxu0 0.0
    %2258 = vmatpush1.msra.mxu0 0.0
    %2259 = vmatprep.subr.mxu0 0.0
    %2260 = vmatpush1.msra.mxu0 0.0
    %2261 = vmatprep.subr.mxu0 0.0
    %2262 = vmatpush1.msra.mxu0 0.0
    %2263 = vmatprep.subr.mxu0 0.0
    %2264 = vmatpush1.msra.mxu0 0.0
    %2265 = vmatprep.subr.mxu0 0.0
    %2266 = vmatpush1.msra.mxu0 0.0
    %2267 = vmatprep.subr.mxu0 0.0
    %2268 = vmatpush1.msra.mxu0 0.0
    %2269 = vmatprep.subr.mxu0 0.0
    %2270 = vmatpush1.msra.mxu0 0.0
    %2271 = vmatprep.subr.mxu0 0.0
    %2272 = vmatpush1.msra.mxu0 0.0
    %2273 = vmatprep.subr.mxu0 0.0
    %2274 = vmatpush1.msra.mxu0 0.0
    %2275 = vmatprep.subr.mxu0 0.0
    %2276 = vmatpush1.msra.mxu0 0.0
    %2277 = vmatprep.subr.mxu0 0.0
    %2278 = vmatpush1.msra.mxu0 0.0
    %2279 = vmatprep.subr.mxu0 0.0
    %2280 = vmatpush1.msra.mxu0 0.0
    %2281 = vmatprep.subr.mxu0 0.0
    %2282 = vmatpush1.msra.mxu0 0.0
    %2283 = vmatprep.subr.mxu0 0.0
    %2284 = vmatpush1.msra.mxu0 0.0
    %2285 = vmatprep.subr.mxu0 0.0
    %2286 = vmatpush1.msra.mxu0 0.0
    %2287 = vmatprep.subr.mxu0 0.0
    %2288 = vmatpush1.msra.mxu0 0.0
    %2289 = vmatprep.subr.mxu0 0.0
    %2290 = vmatpush1.msra.mxu0 0.0
    %2291 = vmatprep.subr.mxu0 0.0
    %2292 = vmatpush1.msra.mxu0 0.0
    %2293 = vmatprep.mubr.f32.mxu0 0.0
    %2294 = vmatmul.mubr.f32.gmra.mrb[0].mxu0 %v2052
    %v2295 = vpop.f32.mrb[0].mxu0
    %v2296 = vadd.f32 %v2227, %v2295
    %v2297 = vpop.f32.mrb[0].mxu0
    %2298 = vmatprep.mubr.f32.mxu0 0.0
    %2299 = vmatmul.mubr.f32.gmra.mrb[0].mxu0 %v2055
    %v2300 = vpop.f32.mrb[0].mxu0
    %v2301 = vadd.f32 %v2227, %v2300
    %v2302 = vpop.f32.mrb[0].mxu0
    %2303 = vdwg.mxu0
    %v2304 = vld [vmem:[%s55] sm:$0xff]
    %v2305 = vld [vmem:[%s55 + $0x8] sm:$0xff]
    %v2306 = vld [vmem:[%s55 + $0x10] sm:$0xff]
    %v2307 = vld [vmem:[%s55 + $0x18] sm:$0xff]
    %v2308 = vmul.f32 %v2124, 0.35355338
    %v2309 = vmul.f32 %v2129, 0.35355338
    %v2311 = vsel %vm188, %v2308, 0
    %v2314 = vsel %vm188, %v2309, 0
    %v2317 = vsel %vm188, %v2210, 0
    %v2320 = vsel %vm188, %v2215, 0
    %2322 = vmatprep.subr.mxu0 0.0
    %2323 = vmatpush1.xpose.msra.mxu0 %v2317
    %2324 = vmatprep.subr.mxu0 0.0
    %2325 = vmatpush1.xpose.msra.mxu0 %v2320
    %2326 = vmatprep.subr.mxu0 0.0
    %2327 = vmatpush1.xpose.msra.mxu0 0.0
    %2328 = vmatprep.subr.mxu0 0.0
    %2329 = vmatpush1.xpose.msra.mxu0 0.0
    %2330 = vmatprep.subr.mxu0 0.0
    %2331 = vmatpush1.xpose.msra.mxu0 0.0
    %2332 = vmatprep.subr.mxu0 0.0
    %2333 = vmatpush1.xpose.msra.mxu0 0.0
    %2334 = vmatprep.subr.mxu0 0.0
    %2335 = vmatpush1.xpose.msra.mxu0 0.0
    %2336 = vmatprep.subr.mxu0 0.0
    %2337 = vmatpush1.xpose.msra.mxu0 0.0
    %2338 = vmatprep.subr.mxu0 0.0
    %2339 = vmatpush1.xpose.msra.mxu0 0.0
    %2340 = vmatprep.subr.mxu0 0.0
    %2341 = vmatpush1.xpose.msra.mxu0 0.0
    %2342 = vmatprep.subr.mxu0 0.0
    %2343 = vmatpush1.xpose.msra.mxu0 0.0
    %2344 = vmatprep.subr.mxu0 0.0
    %2345 = vmatpush1.xpose.msra.mxu0 0.0
    %2346 = vmatprep.subr.mxu0 0.0
    %2347 = vmatpush1.xpose.msra.mxu0 0.0
    %2348 = vmatprep.subr.mxu0 0.0
    %2349 = vmatpush1.xpose.msra.mxu0 0.0
    %2350 = vmatprep.subr.mxu0 0.0
    %2351 = vmatpush1.xpose.msra.mxu0 0.0
    %2352 = vmatprep.subr.mxu0 0.0
    %2353 = vmatpush1.xpose.msra.mxu0 0.0
    %2354 = vmatprep.subr.mxu0 0.0
    %2355 = vmatpush1.xpose.msra.mxu0 0.0
    %2356 = vmatprep.subr.mxu0 0.0
    %2357 = vmatpush1.xpose.msra.mxu0 0.0
    %2358 = vmatprep.subr.mxu0 0.0
    %2359 = vmatpush1.xpose.msra.mxu0 0.0
    %2360 = vmatprep.subr.mxu0 0.0
    %2361 = vmatpush1.xpose.msra.mxu0 0.0
    %2362 = vmatprep.subr.mxu0 0.0
    %2363 = vmatpush1.xpose.msra.mxu0 0.0
    %2364 = vmatprep.subr.mxu0 0.0
    %2365 = vmatpush1.xpose.msra.mxu0 0.0
    %2366 = vmatprep.subr.mxu0 0.0
    %2367 = vmatpush1.xpose.msra.mxu0 0.0
    %2368 = vmatprep.subr.mxu0 0.0
    %2369 = vmatpush1.xpose.msra.mxu0 0.0
    %2370 = vmatprep.subr.mxu0 0.0
    %2371 = vmatpush1.xpose.msra.mxu0 0.0
    %2372 = vmatprep.subr.mxu0 0.0
    %2373 = vmatpush1.xpose.msra.mxu0 0.0
    %2374 = vmatprep.subr.mxu0 0.0
    %2375 = vmatpush1.xpose.msra.mxu0 0.0
    %2376 = vmatprep.subr.mxu0 0.0
    %2377 = vmatpush1.xpose.msra.mxu0 0.0
    %2378 = vmatprep.subr.mxu0 0.0
    %2379 = vmatpush1.xpose.msra.mxu0 0.0
    %2380 = vmatprep.subr.mxu0 0.0
    %2381 = vmatpush1.xpose.msra.mxu0 0.0
    %2382 = vmatprep.subr.mxu0 0.0
    %2383 = vmatpush1.xpose.msra.mxu0 0.0
    %2384 = vmatprep.subr.mxu0 0.0
    %2385 = vmatpush1.xpose.msra.mxu0 0.0
    %2386 = vmatprep.mubr.f32.mxu0 0.0
    %2387 = vmatmul.mubr.f32.gmra.mrb[0].mxu0 %v2311
    %v2388 = vpop.f32.mrb[0].mxu0
    %v2389 = vadd.f32 %v352, %v2388
    %v2390 = vpop.f32.mrb[0].mxu0
    %2391 = vmatprep.mubr.f32.mxu0 0.0
    %2392 = vmatmul.mubr.f32.gmra.mrb[0].mxu0 %v2314
    %v2393 = vpop.f32.mrb[0].mxu0
    %v2394 = vadd.f32 %v353, %v2393
    %v2395 = vpop.f32.mrb[0].mxu0
    %2396 = vdwg.mxu0
    %v2397 = vsel %vm712, %v2389, -inf
    %2398 = vmax.xlane.f32.xlu0 %v2397
    %v2399 = vpop.xlane.xlu0 %2398
    %v2400 = vsel %vm712, %v2394, -inf
    %2401 = vmax.xlane.f32.xlu0 %v2400
    %v2402 = vpop.xlane.xlu0 %2401
    %v2403 = vsub.f32 %v2389, %v2399
    %v2404 = vsub.f32 %v2394, %v2402
    %v2405 = vmul.f32 %v2403, 1.442695
    %v2406 = vpow.pop %v2405
    %v2407 = vmul.f32 %v2404, 1.442695
    %v2408 = vpow.pop %v2407
    %v2409 = vsel %vm712, %v2406, 0.0
    %2410 = vadd.xlane.f32.xlu0 %v2409
    %v2411 = vpop.xlane.xlu0 %2410
    %v2412 = vsel %vm712, %v2408, 0.0
    %2413 = vadd.xlane.f32.xlu0 %v2412
    %v2414 = vpop.xlane.xlu0 %2413
    %v2415 = vrcp.pop %v2411
    %v2416 = vmul.f32 %v2406, %v2415
    %v2417 = vrcp.pop %v2414
    %v2418 = vmul.f32 %v2408, %v2417
    %v2420 = vsel %vm712, %v2416, 0
    %v2423 = vsel %vm712, %v2418, 0
    %2425 = vmatprep.subr.mxu0 0.0
    %2426 = vmatpush1.msra.mxu0 %v2296
    %2427 = vmatprep.subr.mxu0 0.0
    %2428 = vmatpush1.msra.mxu0 %v2301
    %2429 = vmatprep.subr.mxu0 0.0
    %2430 = vmatpush1.msra.mxu0 0.0
    %2431 = vmatprep.subr.mxu0 0.0
    %2432 = vmatpush1.msra.mxu0 0.0
    %2433 = vmatprep.subr.mxu0 0.0
    %2434 = vmatpush1.msra.mxu0 0.0
    %2435 = vmatprep.subr.mxu0 0.0
    %2436 = vmatpush1.msra.mxu0 0.0
    %2437 = vmatprep.subr.mxu0 0.0
    %2438 = vmatpush1.msra.mxu0 0.0
    %2439 = vmatprep.subr.mxu0 0.0
    %2440 = vmatpush1.msra.mxu0 0.0
    %2441 = vmatprep.subr.mxu0 0.0
    %2442 = vmatpush1.msra.mxu0 0.0
    %2443 = vmatprep.subr.mxu0 0.0
    %2444 = vmatpush1.msra.mxu0 0.0
    %2445 = vmatprep.subr.mxu0 0.0
    %2446 = vmatpush1.msra.mxu0 0.0
    %2447 = vmatprep.subr.mxu0 0.0
    %2448 = vmatpush1.msra.mxu0 0.0
    %2449 = vmatprep.subr.mxu0 0.0
    %2450 = vmatpush1.msra.mxu0 0.0
    %2451 = vmatprep.subr.mxu0 0.0
    %2452 = vmatpush1.msra.mxu0 0.0
    %2453 = vmatprep.subr.mxu0 0.0
    %2454 = vmatpush1.msra.mxu0 0.0
    %2455 = vmatprep.subr.mxu0 0.0
    %2456 = vmatpush1.msra.mxu0 0.0
    %2457 = vmatprep.subr.mxu0 0.0
    %2458 = vmatpush1.msra.mxu0 0.0
    %2459 = vmatprep.subr.mxu0 0.0
    %2460 = vmatpush1.msra.mxu0 0.0
    %2461 = vmatprep.subr.mxu0 0.0
    %2462 = vmatpush1.msra.mxu0 0.0
    %2463 = vmatprep.subr.mxu0 0.0
    %2464 = vmatpush1.msra.mxu0 0.0
    %2465 = vmatprep.subr.mxu0 0.0
    %2466 = vmatpush1.msra.mxu0 0.0
    %2467 = vmatprep.subr.mxu0 0.0
    %2468 = vmatpush1.msra.mxu0 0.0
    %2469 = vmatprep.subr.mxu0 0.0
    %2470 = vmatpush1.msra.mxu0 0.0
    %2471 = vmatprep.subr.mxu0 0.0
    %2472 = vmatpush1.msra.mxu0 0.0
    %2473 = vmatprep.subr.mxu0 0.0
    %2474 = vmatpush1.msra.mxu0 0.0
    %2475 = vmatprep.subr.mxu0 0.0
    %2476 = vmatpush1.msra.mxu0 0.0
    %2477 = vmatprep.subr.mxu0 0.0
    %2478 = vmatpush1.msra.mxu0 0.0
    %2479 = vmatprep.subr.mxu0 0.0
    %2480 = vmatpush1.msra.mxu0 0.0
    %2481 = vmatprep.subr.mxu0 0.0
    %2482 = vmatpush1.msra.mxu0 0.0
    %2483 = vmatprep.subr.mxu0 0.0
    %2484 = vmatpush1.msra.mxu0 0.0
    %2485 = vmatprep.subr.mxu0 0.0
    %2486 = vmatpush1.msra.mxu0 0.0
    %2487 = vmatprep.subr.mxu0 0.0
    %2488 = vmatpush1.msra.mxu0 0.0
    %2489 = vmatprep.mubr.f32.mxu0 0.0
    %2490 = vmatmul.mubr.f32.gmra.mrb[0].mxu0 %v2420
    %v2491 = vpop.f32.mrb[0].mxu0
    %v2492 = vadd.f32 0.0, %v2491
    %v2493 = vpop.f32.mrb[0].mxu0
    %2494 = vmatprep.mubr.f32.mxu0 0.0
    %2495 = vmatmul.mubr.f32.gmra.mrb[0].mxu0 %v2423
    %v2496 = vpop.f32.mrb[0].mxu0
    %v2497 = vadd.f32 0.0, %v2496
    %v2498 = vpop.f32.mrb[0].mxu0
    %2499 = vdwg.mxu0
    %2500 = vrot.lane.b32.xlu0 %v2308, 120
    %v2501 = vpop.permute.xlu0 %2500
    %2502 = vrot.lane.b32.xlu0 %v2309, 120
    %v2503 = vpop.permute.xlu0 %2502
    %2504 = vrot.lane.b32.xlu0 %v2210, 120
    %v2505 = vpop.permute.xlu0 %2504
    %2506 = vrot.lane.b32.xlu0 %v2215, 120
    %v2507 = vpop.permute.xlu0 %2506
    %v2508 = vsel %vm188, %v2501, 0
    %v2510 = vsel %vm188, %v2503, 0
    %v2512 = vsel %vm188, %v2505, 0
    %v2514 = vsel %vm188, %v2507, 0
    %2516 = vmatprep.subr.mxu0 0.0
    %2517 = vmatpush1.xpose.msra.mxu0 %v2512
    %2518 = vmatprep.subr.mxu0 0.0
    %2519 = vmatpush1.xpose.msra.mxu0 %v2514
    %2520 = vmatprep.subr.mxu0 0.0
    %2521 = vmatpush1.xpose.msra.mxu0 0.0
    %2522 = vmatprep.subr.mxu0 0.0
    %2523 = vmatpush1.xpose.msra.mxu0 0.0
    %2524 = vmatprep.subr.mxu0 0.0
    %2525 = vmatpush1.xpose.msra.mxu0 0.0
    %2526 = vmatprep.subr.mxu0 0.0
    %2527 = vmatpush1.xpose.msra.mxu0 0.0
    %2528 = vmatprep.subr.mxu0 0.0
    %2529 = vmatpush1.xpose.msra.mxu0 0.0
    %2530 = vmatprep.subr.mxu0 0.0
    %2531 = vmatpush1.xpose.msra.mxu0 0.0
    %2532 = vmatprep.subr.mxu0 0.0
    %2533 = vmatpush1.xpose.msra.mxu0 0.0
    %2534 = vmatprep.subr.mxu0 0.0
    %2535 = vmatpush1.xpose.msra.mxu0 0.0
    %2536 = vmatprep.subr.mxu0 0.0
    %2537 = vmatpush1.xpose.msra.mxu0 0.0
    %2538 = vmatprep.subr.mxu0 0.0
    %2539 = vmatpush1.xpose.msra.mxu0 0.0
    %2540 = vmatprep.subr.mxu0 0.0
    %2541 = vmatpush1.xpose.msra.mxu0 0.0
    %2542 = vmatprep.subr.mxu0 0.0
    %2543 = vmatpush1.xpose.msra.mxu0 0.0
    %2544 = vmatprep.subr.mxu0 0.0
    %2545 = vmatpush1.xpose.msra.mxu0 0.0
    %2546 = vmatprep.subr.mxu0 0.0
    %2547 = vmatpush1.xpose.msra.mxu0 0.0
    %2548 = vmatprep.subr.mxu0 0.0
    %2549 = vmatpush1.xpose.msra.mxu0 0.0
    %2550 = vmatprep.subr.mxu0 0.0
    %2551 = vmatpush1.xpose.msra.mxu0 0.0
    %2552 = vmatprep.subr.mxu0 0.0
    %2553 = vmatpush1.xpose.msra.mxu0 0.0
    %2554 = vmatprep.subr.mxu0 0.0
    %2555 = vmatpush1.xpose.msra.mxu0 0.0
    %2556 = vmatprep.subr.mxu0 0.0
    %2557 = vmatpush1.xpose.msra.mxu0 0.0
    %2558 = vmatprep.subr.mxu0 0.0
    %2559 = vmatpush1.xpose.msra.mxu0 0.0
    %2560 = vmatprep.subr.mxu0 0.0
    %2561 = vmatpush1.xpose.msra.mxu0 0.0
    %2562 = vmatprep.subr.mxu0 0.0
    %2563 = vmatpush1.xpose.msra.mxu0 0.0
    %2564 = vmatprep.subr.mxu0 0.0
    %2565 = vmatpush1.xpose.msra.mxu0 0.0
    %2566 = vmatprep.subr.mxu0 0.0
    %2567 = vmatpush1.xpose.msra.mxu0 0.0
    %2568 = vmatprep.subr.mxu0 0.0
    %2569 = vmatpush1.xpose.msra.mxu0 0.0
    %2570 = vmatprep.subr.mxu0 0.0
    %2571 = vmatpush1.xpose.msra.mxu0 0.0
    %2572 = vmatprep.subr.mxu0 0.0
    %2573 = vmatpush1.xpose.msra.mxu0 0.0
    %2574 = vmatprep.subr.mxu0 0.0
    %2575 = vmatpush1.xpose.msra.mxu0 0.0
    %2576 = vmatprep.subr.mxu0 0.0
    %2577 = vmatpush1.xpose.msra.mxu0 0.0
    %2578 = vmatprep.subr.mxu0 0.0
    %2579 = vmatpush1.xpose.msra.mxu0 0.0
    %2580 = vmatprep.mubr.f32.mxu0 0.0
    %2581 = vmatmul.mubr.f32.gmra.mrb[0].mxu0 %v2508
    %v2582 = vpop.f32.mrb[0].mxu0
    %v2583 = vadd.f32 %v352, %v2582
    %v2584 = vpop.f32.mrb[0].mxu0
    %2585 = vmatprep.mubr.f32.mxu0 0.0
    %2586 = vmatmul.mubr.f32.gmra.mrb[0].mxu0 %v2510
    %v2587 = vpop.f32.mrb[0].mxu0
    %v2588 = vadd.f32 %v353, %v2587
    %v2589 = vpop.f32.mrb[0].mxu0
    %2590 = vdwg.mxu0
    %v2591 = vsel %vm712, %v2583, -inf
    %2592 = vmax.xlane.f32.xlu0 %v2591
    %v2593 = vpop.xlane.xlu0 %2592
    %v2594 = vsel %vm712, %v2588, -inf
    %2595 = vmax.xlane.f32.xlu0 %v2594
    %v2596 = vpop.xlane.xlu0 %2595
    %v2597 = vsub.f32 %v2583, %v2593
    %v2598 = vsub.f32 %v2588, %v2596
    %v2599 = vmul.f32 %v2597, 1.442695
    %v2600 = vpow.pop %v2599
    %v2601 = vmul.f32 %v2598, 1.442695
    %v2602 = vpow.pop %v2601
    %v2603 = vsel %vm712, %v2600, 0.0
    %2604 = vadd.xlane.f32.xlu0 %v2603
    %v2605 = vpop.xlane.xlu0 %2604
    %v2606 = vsel %vm712, %v2602, 0.0
    %2607 = vadd.xlane.f32.xlu0 %v2606
    %v2608 = vpop.xlane.xlu0 %2607
    %v2609 = vrcp.pop %v2605
    %v2610 = vmul.f32 %v2600, %v2609
    %v2611 = vrcp.pop %v2608
    %v2612 = vmul.f32 %v2602, %v2611
    %2615 = vrot.lane.b32.xlu0 %v2296, 120
    %v2616 = vpop.permute.xlu0 %2615
    %2617 = vrot.lane.b32.xlu0 %v2301, 120
    %v2618 = vpop.permute.xlu0 %2617
    %v2622 = vsel %vm712, %v2610, 0
    %v2625 = vsel %vm712, %v2612, 0
    %2627 = vmatprep.subr.mxu0 0.0
    %2628 = vmatpush1.msra.mxu0 %v2616
    %2629 = vmatprep.subr.mxu0 0.0
    %2630 = vmatpush1.msra.mxu0 %v2618
    %2631 = vmatprep.subr.mxu0 0.0
    %2632 = vmatpush1.msra.mxu0 0.0
    %2633 = vmatprep.subr.mxu0 0.0
    %2634 = vmatpush1.msra.mxu0 0.0
    %2635 = vmatprep.subr.mxu0 0.0
    %2636 = vmatpush1.msra.mxu0 0.0
    %2637 = vmatprep.subr.mxu0 0.0
    %2638 = vmatpush1.msra.mxu0 0.0
    %2639 = vmatprep.subr.mxu0 0.0
    %2640 = vmatpush1.msra.mxu0 0.0
    %2641 = vmatprep.subr.mxu0 0.0
    %2642 = vmatpush1.msra.mxu0 0.0
    %2643 = vmatprep.subr.mxu0 0.0
    %2644 = vmatpush1.msra.mxu0 0.0
    %2645 = vmatprep.subr.mxu0 0.0
    %2646 = vmatpush1.msra.mxu0 0.0
    %2647 = vmatprep.subr.mxu0 0.0
    %2648 = vmatpush1.msra.mxu0 0.0
    %2649 = vmatprep.subr.mxu0 0.0
    %2650 = vmatpush1.msra.mxu0 0.0
    %2651 = vmatprep.subr.mxu0 0.0
    %2652 = vmatpush1.msra.mxu0 0.0
    %2653 = vmatprep.subr.mxu0 0.0
    %2654 = vmatpush1.msra.mxu0 0.0
    %2655 = vmatprep.subr.mxu0 0.0
    %2656 = vmatpush1.msra.mxu0 0.0
    %2657 = vmatprep.subr.mxu0 0.0
    %2658 = vmatpush1.msra.mxu0 0.0
    %2659 = vmatprep.subr.mxu0 0.0
    %2660 = vmatpush1.msra.mxu0 0.0
    %2661 = vmatprep.subr.mxu0 0.0
    %2662 = vmatpush1.msra.mxu0 0.0
    %2663 = vmatprep.subr.mxu0 0.0
    %2664 = vmatpush1.msra.mxu0 0.0
    %2665 = vmatprep.subr.mxu0 0.0
    %2666 = vmatpush1.msra.mxu0 0.0
    %2667 = vmatprep.subr.mxu0 0.0
    %2668 = vmatpush1.msra.mxu0 0.0
    %2669 = vmatprep.subr.mxu0 0.0
    %2670 = vmatpush1.msra.mxu0 0.0
    %2671 = vmatprep.subr.mxu0 0.0
    %2672 = vmatpush1.msra.mxu0 0.0
    %2673 = vmatprep.subr.mxu0 0.0
    %2674 = vmatpush1.msra.mxu0 0.0
    %2675 = vmatprep.subr.mxu0 0.0
    %2676 = vmatpush1.msra.mxu0 0.0
    %2677 = vmatprep.subr.mxu0 0.0
    %2678 = vmatpush1.msra.mxu0 0.0
    %2679 = vmatprep.subr.mxu0 0.0
    %2680 = vmatpush1.msra.mxu0 0.0
    %2681 = vmatprep.subr.mxu0 0.0
    %2682 = vmatpush1.msra.mxu0 0.0
    %2683 = vmatprep.subr.mxu0 0.0
    %2684 = vmatpush1.msra.mxu0 0.0
    %2685 = vmatprep.subr.mxu0 0.0
    %2686 = vmatpush1.msra.mxu0 0.0
    %2687 = vmatprep.subr.mxu0 0.0
    %2688 = vmatpush1.msra.mxu0 0.0
    %2689 = vmatprep.subr.mxu0 0.0
    %2690 = vmatpush1.msra.mxu0 0.0
    %2691 = vmatprep.mubr.f32.mxu0 0.0
    %2692 = vmatmul.mubr.f32.gmra.mrb[0].mxu0 %v2622
    %v2693 = vpop.f32.mrb[0].mxu0
    %v2694 = vadd.f32 0.0, %v2693
    %v2695 = vpop.f32.mrb[0].mxu0
    %2696 = vmatprep.mubr.f32.mxu0 0.0
    %2697 = vmatmul.mubr.f32.gmra.mrb[0].mxu0 %v2625
    %v2698 = vpop.f32.mrb[0].mxu0
    %v2699 = vadd.f32 0.0, %v2698
    %v2700 = vpop.f32.mrb[0].mxu0
    %2701 = vdwg.mxu0
    %v2703 = vsel %vm188, %v2694, 0
    %v2706 = vsel %vm188, %v2699, 0
    %2708 = vmatprep.subr.mxu0 0.0
    %2709 = vmatpush1.msra.mxu0 %v2305
    %2710 = vmatprep.subr.mxu0 0.0
    %2711 = vmatpush1.msra.mxu0 0.0
    %2712 = vmatprep.subr.mxu0 0.0
    %2713 = vmatpush1.msra.mxu0 0.0
    %2714 = vmatprep.subr.mxu0 0.0
    %2715 = vmatpush1.msra.mxu0 0.0
    %2716 = vmatprep.subr.mxu0 0.0
    %2717 = vmatpush1.msra.mxu0 0.0
    %2718 = vmatprep.subr.mxu0 0.0
    %2719 = vmatpush1.msra.mxu0 0.0
    %2720 = vmatprep.subr.mxu0 0.0
    %2721 = vmatpush1.msra.mxu0 0.0
    %2722 = vmatprep.subr.mxu0 0.0
    %2723 = vmatpush1.msra.mxu0 0.0
    %2724 = vmatprep.subr.mxu0 0.0
    %2725 = vmatpush1.msra.mxu0 0.0
    %2726 = vmatprep.subr.mxu0 0.0
    %2727 = vmatpush1.msra.mxu0 0.0
    %2728 = vmatprep.subr.mxu0 0.0
    %2729 = vmatpush1.msra.mxu0 0.0
    %2730 = vmatprep.subr.mxu0 0.0
    %2731 = vmatpush1.msra.mxu0 0.0
    %2732 = vmatprep.subr.mxu0 0.0
    %2733 = vmatpush1.msra.mxu0 0.0
    %2734 = vmatprep.subr.mxu0 0.0
    %2735 = vmatpush1.msra.mxu0 0.0
    %2736 = vmatprep.subr.mxu0 0.0
    %2737 = vmatpush1.msra.mxu0 0.0
    %2738 = vmatprep.subr.mxu0 0.0
    %2739 = vmatpush1.msra.mxu0 0.0
    %2740 = vmatprep.subr.mxu0 0.0
    %2741 = vmatpush1.msra.mxu0 0.0
    %2742 = vmatprep.subr.mxu0 0.0
    %2743 = vmatpush1.msra.mxu0 0.0
    %2744 = vmatprep.subr.mxu0 0.0
    %2745 = vmatpush1.msra.mxu0 0.0
    %2746 = vmatprep.subr.mxu0 0.0
    %2747 = vmatpush1.msra.mxu0 0.0
    %2748 = vmatprep.subr.mxu0 0.0
    %2749 = vmatpush1.msra.mxu0 0.0
    %2750 = vmatprep.subr.mxu0 0.0
    %2751 = vmatpush1.msra.mxu0 0.0
    %2752 = vmatprep.subr.mxu0 0.0
    %2753 = vmatpush1.msra.mxu0 0.0
    %2754 = vmatprep.subr.mxu0 0.0
    %2755 = vmatpush1.msra.mxu0 0.0
    %2756 = vmatprep.subr.mxu0 0.0
    %2757 = vmatpush1.msra.mxu0 0.0
    %2758 = vmatprep.subr.mxu0 0.0
    %2759 = vmatpush1.msra.mxu0 0.0
    %2760 = vmatprep.subr.mxu0 0.0
    %2761 = vmatpush1.msra.mxu0 0.0
    %2762 = vmatprep.subr.mxu0 0.0
    %2763 = vmatpush1.msra.mxu0 0.0
    %2764 = vmatprep.subr.mxu0 0.0
    %2765 = vmatpush1.msra.mxu0 0.0
    %2766 = vmatprep.subr.mxu0 0.0
    %2767 = vmatpush1.msra.mxu0 0.0
    %2768 = vmatprep.subr.mxu0 0.0
    %2769 = vmatpush1.msra.mxu0 0.0
    %2770 = vmatprep.subr.mxu0 0.0
    %2771 = vmatpush1.msra.mxu0 0.0
    %2772 = vmatprep.mubr.f32.mxu0 0.0
    %2773 = vmatmul.mubr.f32.gmra.mrb[0].mxu0 %v2703
    %v2774 = vpop.f32.mrb[0].mxu0
    %v2775 = vadd.f32 0.0, %v2774
    %v2776 = vpop.f32.mrb[0].mxu0
    %2777 = vmatprep.mubr.f32.mxu0 0.0
    %2778 = vmatmul.mubr.f32.gmra.mrb[0].mxu0 %v2706
    %v2779 = vpop.f32.mrb[0].mxu0
    %v2780 = vadd.f32 0.0, %v2779
    %v2781 = vpop.f32.mrb[0].mxu0
    %2782 = vdwg.mxu0
    %v2784 = vsel %vm188, %v2492, 0
    %v2787 = vsel %vm188, %v2497, 0
    %2789 = vmatprep.subr.mxu0 0.0
    %2790 = vmatpush1.msra.mxu0 %v2304
    %2791 = vmatprep.subr.mxu0 0.0
    %2792 = vmatpush1.msra.mxu0 0.0
    %2793 = vmatprep.subr.mxu0 0.0
    %2794 = vmatpush1.msra.mxu0 0.0
    %2795 = vmatprep.subr.mxu0 0.0
    %2796 = vmatpush1.msra.mxu0 0.0
    %2797 = vmatprep.subr.mxu0 0.0
    %2798 = vmatpush1.msra.mxu0 0.0
    %2799 = vmatprep.subr.mxu0 0.0
    %2800 = vmatpush1.msra.mxu0 0.0
    %2801 = vmatprep.subr.mxu0 0.0
    %2802 = vmatpush1.msra.mxu0 0.0
    %2803 = vmatprep.subr.mxu0 0.0
    %2804 = vmatpush1.msra.mxu0 0.0
    %2805 = vmatprep.subr.mxu0 0.0
    %2806 = vmatpush1.msra.mxu0 0.0
    %2807 = vmatprep.subr.mxu0 0.0
    %2808 = vmatpush1.msra.mxu0 0.0
    %2809 = vmatprep.subr.mxu0 0.0
    %2810 = vmatpush1.msra.mxu0 0.0
    %2811 = vmatprep.subr.mxu0 0.0
    %2812 = vmatpush1.msra.mxu0 0.0
    %2813 = vmatprep.subr.mxu0 0.0
    %2814 = vmatpush1.msra.mxu0 0.0
    %2815 = vmatprep.subr.mxu0 0.0
    %2816 = vmatpush1.msra.mxu0 0.0
    %2817 = vmatprep.subr.mxu0 0.0
    %2818 = vmatpush1.msra.mxu0 0.0
    %2819 = vmatprep.subr.mxu0 0.0
    %2820 = vmatpush1.msra.mxu0 0.0
    %2821 = vmatprep.subr.mxu0 0.0
    %2822 = vmatpush1.msra.mxu0 0.0
    %2823 = vmatprep.subr.mxu0 0.0
    %2824 = vmatpush1.msra.mxu0 0.0
    %2825 = vmatprep.subr.mxu0 0.0
    %2826 = vmatpush1.msra.mxu0 0.0
    %2827 = vmatprep.subr.mxu0 0.0
    %2828 = vmatpush1.msra.mxu0 0.0
    %2829 = vmatprep.subr.mxu0 0.0
    %2830 = vmatpush1.msra.mxu0 0.0
    %2831 = vmatprep.subr.mxu0 0.0
    %2832 = vmatpush1.msra.mxu0 0.0
    %2833 = vmatprep.subr.mxu0 0.0
    %2834 = vmatpush1.msra.mxu0 0.0
    %2835 = vmatprep.subr.mxu0 0.0
    %2836 = vmatpush1.msra.mxu0 0.0
    %2837 = vmatprep.subr.mxu0 0.0
    %2838 = vmatpush1.msra.mxu0 0.0
    %2839 = vmatprep.subr.mxu0 0.0
    %2840 = vmatpush1.msra.mxu0 0.0
    %2841 = vmatprep.subr.mxu0 0.0
    %2842 = vmatpush1.msra.mxu0 0.0
    %2843 = vmatprep.subr.mxu0 0.0
    %2844 = vmatpush1.msra.mxu0 0.0
    %2845 = vmatprep.subr.mxu0 0.0
    %2846 = vmatpush1.msra.mxu0 0.0
    %2847 = vmatprep.subr.mxu0 0.0
    %2848 = vmatpush1.msra.mxu0 0.0
    %2849 = vmatprep.subr.mxu0 0.0
    %2850 = vmatpush1.msra.mxu0 0.0
    %2851 = vmatprep.subr.mxu0 0.0
    %2852 = vmatpush1.msra.mxu0 0.0
    %2853 = vmatprep.mubr.f32.mxu0 0.0
    %2854 = vmatmul.mubr.f32.gmra.mrb[0].mxu0 %v2784
    %v2855 = vpop.f32.mrb[0].mxu0
    %v2856 = vadd.f32 %v2775, %v2855
    %v2857 = vpop.f32.mrb[0].mxu0
    %2858 = vmatprep.mubr.f32.mxu0 0.0
    %2859 = vmatmul.mubr.f32.gmra.mrb[0].mxu0 %v2787
    %v2860 = vpop.f32.mrb[0].mxu0
    %v2861 = vadd.f32 %v2780, %v2860
    %v2862 = vpop.f32.mrb[0].mxu0
    %2863 = vdwg.mxu0
    %2864 = vrot.lane.b32.xlu0 %v2308, 112
    %v2865 = vpop.permute.xlu0 %2864
    %2866 = vrot.lane.b32.xlu0 %v2309, 112
    %v2867 = vpop.permute.xlu0 %2866
    %2868 = vrot.lane.b32.xlu0 %v2210, 112
    %v2869 = vpop.permute.xlu0 %2868
    %2870 = vrot.lane.b32.xlu0 %v2215, 112
    %v2871 = vpop.permute.xlu0 %2870
    %v2872 = vsel %vm188, %v2865, 0
    %v2874 = vsel %vm188, %v2867, 0
    %v2876 = vsel %vm188, %v2869, 0
    %v2878 = vsel %vm188, %v2871, 0
    %2880 = vmatprep.subr.mxu0 0.0
    %2881 = vmatpush1.xpose.msra.mxu0 %v2876
    %2882 = vmatprep.subr.mxu0 0.0
    %2883 = vmatpush1.xpose.msra.mxu0 %v2878
    %2884 = vmatprep.subr.mxu0 0.0
    %2885 = vmatpush1.xpose.msra.mxu0 0.0
    %2886 = vmatprep.subr.mxu0 0.0
    %2887 = vmatpush1.xpose.msra.mxu0 0.0
    %2888 = vmatprep.subr.mxu0 0.0
    %2889 = vmatpush1.xpose.msra.mxu0 0.0
    %2890 = vmatprep.subr.mxu0 0.0
    %2891 = vmatpush1.xpose.msra.mxu0 0.0
    %2892 = vmatprep.subr.mxu0 0.0
    %2893 = vmatpush1.xpose.msra.mxu0 0.0
    %2894 = vmatprep.subr.mxu0 0.0
    %2895 = vmatpush1.xpose.msra.mxu0 0.0
    %2896 = vmatprep.subr.mxu0 0.0
    %2897 = vmatpush1.xpose.msra.mxu0 0.0
    %2898 = vmatprep.subr.mxu0 0.0
    %2899 = vmatpush1.xpose.msra.mxu0 0.0
    %2900 = vmatprep.subr.mxu0 0.0
    %2901 = vmatpush1.xpose.msra.mxu0 0.0
    %2902 = vmatprep.subr.mxu0 0.0
    %2903 = vmatpush1.xpose.msra.mxu0 0.0
    %2904 = vmatprep.subr.mxu0 0.0
    %2905 = vmatpush1.xpose.msra.mxu0 0.0
    %2906 = vmatprep.subr.mxu0 0.0
    %2907 = vmatpush1.xpose.msra.mxu0 0.0
    %2908 = vmatprep.subr.mxu0 0.0
    %2909 = vmatpush1.xpose.msra.mxu0 0.0
    %2910 = vmatprep.subr.mxu0 0.0
    %2911 = vmatpush1.xpose.msra.mxu0 0.0
    %2912 = vmatprep.subr.mxu0 0.0
    %2913 = vmatpush1.xpose.msra.mxu0 0.0
    %2914 = vmatprep.subr.mxu0 0.0
    %2915 = vmatpush1.xpose.msra.mxu0 0.0
    %2916 = vmatprep.subr.mxu0 0.0
    %2917 = vmatpush1.xpose.msra.mxu0 0.0
    %2918 = vmatprep.subr.mxu0 0.0
    %2919 = vmatpush1.xpose.msra.mxu0 0.0
    %2920 = vmatprep.subr.mxu0 0.0
    %2921 = vmatpush1.xpose.msra.mxu0 0.0
    %2922 = vmatprep.subr.mxu0 0.0
    %2923 = vmatpush1.xpose.msra.mxu0 0.0
    %2924 = vmatprep.subr.mxu0 0.0
    %2925 = vmatpush1.xpose.msra.mxu0 0.0
    %2926 = vmatprep.subr.mxu0 0.0
    %2927 = vmatpush1.xpose.msra.mxu0 0.0
    %2928 = vmatprep.subr.mxu0 0.0
    %2929 = vmatpush1.xpose.msra.mxu0 0.0
    %2930 = vmatprep.subr.mxu0 0.0
    %2931 = vmatpush1.xpose.msra.mxu0 0.0
    %2932 = vmatprep.subr.mxu0 0.0
    %2933 = vmatpush1.xpose.msra.mxu0 0.0
    %2934 = vmatprep.subr.mxu0 0.0
    %2935 = vmatpush1.xpose.msra.mxu0 0.0
    %2936 = vmatprep.subr.mxu0 0.0
    %2937 = vmatpush1.xpose.msra.mxu0 0.0
    %2938 = vmatprep.subr.mxu0 0.0
    %2939 = vmatpush1.xpose.msra.mxu0 0.0
    %2940 = vmatprep.subr.mxu0 0.0
    %2941 = vmatpush1.xpose.msra.mxu0 0.0
    %2942 = vmatprep.subr.mxu0 0.0
    %2943 = vmatpush1.xpose.msra.mxu0 0.0
    %2944 = vmatprep.mubr.f32.mxu0 0.0
    %2945 = vmatmul.mubr.f32.gmra.mrb[0].mxu0 %v2872
    %v2946 = vpop.f32.mrb[0].mxu0
    %v2947 = vadd.f32 %v352, %v2946
    %v2948 = vpop.f32.mrb[0].mxu0
    %2949 = vmatprep.mubr.f32.mxu0 0.0
    %2950 = vmatmul.mubr.f32.gmra.mrb[0].mxu0 %v2874
    %v2951 = vpop.f32.mrb[0].mxu0
    %v2952 = vadd.f32 %v353, %v2951
    %v2953 = vpop.f32.mrb[0].mxu0
    %2954 = vdwg.mxu0
    %v2955 = vsel %vm712, %v2947, -inf
    %2956 = vmax.xlane.f32.xlu0 %v2955
    %v2957 = vpop.xlane.xlu0 %2956
    %v2958 = vsel %vm712, %v2952, -inf
    %2959 = vmax.xlane.f32.xlu0 %v2958
    %v2960 = vpop.xlane.xlu0 %2959
    %v2961 = vsub.f32 %v2947, %v2957
    %v2962 = vsub.f32 %v2952, %v2960
    %v2963 = vmul.f32 %v2961, 1.442695
    %v2964 = vpow.pop %v2963
    %v2965 = vmul.f32 %v2962, 1.442695
    %v2966 = vpow.pop %v2965
    %v2967 = vsel %vm712, %v2964, 0.0
    %2968 = vadd.xlane.f32.xlu0 %v2967
    %v2969 = vpop.xlane.xlu0 %2968
    %v2970 = vsel %vm712, %v2966, 0.0
    %2971 = vadd.xlane.f32.xlu0 %v2970
    %v2972 = vpop.xlane.xlu0 %2971
    %v2973 = vrcp.pop %v2969
    %v2974 = vmul.f32 %v2964, %v2973
    %v2975 = vrcp.pop %v2972
    %v2976 = vmul.f32 %v2966, %v2975
    %2977 = vrot.lane.b32.xlu0 %v2296, 112
    %v2978 = vpop.permute.xlu0 %2977
    %2979 = vrot.lane.b32.xlu0 %v2301, 112
    %v2980 = vpop.permute.xlu0 %2979
    %v2984 = vsel %vm712, %v2974, 0
    %v2987 = vsel %vm712, %v2976, 0
    %2989 = vmatprep.subr.mxu0 0.0
    %2990 = vmatpush1.msra.mxu0 %v2978
    %2991 = vmatprep.subr.mxu0 0.0
    %2992 = vmatpush1.msra.mxu0 %v2980
    %2993 = vmatprep.subr.mxu0 0.0
    %2994 = vmatpush1.msra.mxu0 0.0
    %2995 = vmatprep.subr.mxu0 0.0
    %2996 = vmatpush1.msra.mxu0 0.0
    %2997 = vmatprep.subr.mxu0 0.0
    %2998 = vmatpush1.msra.mxu0 0.0
    %2999 = vmatprep.subr.mxu0 0.0
    %3000 = vmatpush1.msra.mxu0 0.0
    %3001 = vmatprep.subr.mxu0 0.0
    %3002 = vmatpush1.msra.mxu0 0.0
    %3003 = vmatprep.subr.mxu0 0.0
    %3004 = vmatpush1.msra.mxu0 0.0
    %3005 = vmatprep.subr.mxu0 0.0
    %3006 = vmatpush1.msra.mxu0 0.0
    %3007 = vmatprep.subr.mxu0 0.0
    %3008 = vmatpush1.msra.mxu0 0.0
    %3009 = vmatprep.subr.mxu0 0.0
    %3010 = vmatpush1.msra.mxu0 0.0
    %3011 = vmatprep.subr.mxu0 0.0
    %3012 = vmatpush1.msra.mxu0 0.0
    %3013 = vmatprep.subr.mxu0 0.0
    %3014 = vmatpush1.msra.mxu0 0.0
    %3015 = vmatprep.subr.mxu0 0.0
    %3016 = vmatpush1.msra.mxu0 0.0
    %3017 = vmatprep.subr.mxu0 0.0
    %3018 = vmatpush1.msra.mxu0 0.0
    %3019 = vmatprep.subr.mxu0 0.0
    %3020 = vmatpush1.msra.mxu0 0.0
    %3021 = vmatprep.subr.mxu0 0.0
    %3022 = vmatpush1.msra.mxu0 0.0
    %3023 = vmatprep.subr.mxu0 0.0
    %3024 = vmatpush1.msra.mxu0 0.0
    %3025 = vmatprep.subr.mxu0 0.0
    %3026 = vmatpush1.msra.mxu0 0.0
    %3027 = vmatprep.subr.mxu0 0.0
    %3028 = vmatpush1.msra.mxu0 0.0
    %3029 = vmatprep.subr.mxu0 0.0
    %3030 = vmatpush1.msra.mxu0 0.0
    %3031 = vmatprep.subr.mxu0 0.0
    %3032 = vmatpush1.msra.mxu0 0.0
    %3033 = vmatprep.subr.mxu0 0.0
    %3034 = vmatpush1.msra.mxu0 0.0
    %3035 = vmatprep.subr.mxu0 0.0
    %3036 = vmatpush1.msra.mxu0 0.0
    %3037 = vmatprep.subr.mxu0 0.0
    %3038 = vmatpush1.msra.mxu0 0.0
    %3039 = vmatprep.subr.mxu0 0.0
    %3040 = vmatpush1.msra.mxu0 0.0
    %3041 = vmatprep.subr.mxu0 0.0
    %3042 = vmatpush1.msra.mxu0 0.0
    %3043 = vmatprep.subr.mxu0 0.0
    %3044 = vmatpush1.msra.mxu0 0.0
    %3045 = vmatprep.subr.mxu0 0.0
    %3046 = vmatpush1.msra.mxu0 0.0
    %3047 = vmatprep.subr.mxu0 0.0
    %3048 = vmatpush1.msra.mxu0 0.0
    %3049 = vmatprep.subr.mxu0 0.0
    %3050 = vmatpush1.msra.mxu0 0.0
    %3051 = vmatprep.subr.mxu0 0.0
    %3052 = vmatpush1.msra.mxu0 0.0
    %3053 = vmatprep.mubr.f32.mxu0 0.0
    %3054 = vmatmul.mubr.f32.gmra.mrb[0].mxu0 %v2984
    %v3055 = vpop.f32.mrb[0].mxu0
    %v3056 = vadd.f32 0.0, %v3055
    %v3057 = vpop.f32.mrb[0].mxu0
    %3058 = vmatprep.mubr.f32.mxu0 0.0
    %3059 = vmatmul.mubr.f32.gmra.mrb[0].mxu0 %v2987
    %v3060 = vpop.f32.mrb[0].mxu0
    %v3061 = vadd.f32 0.0, %v3060
    %v3062 = vpop.f32.mrb[0].mxu0
    %3063 = vdwg.mxu0
    %v3065 = vsel %vm188, %v3056, 0
    %v3068 = vsel %vm188, %v3061, 0
    %3070 = vmatprep.subr.mxu0 0.0
    %3071 = vmatpush1.msra.mxu0 %v2306
    %3072 = vmatprep.subr.mxu0 0.0
    %3073 = vmatpush1.msra.mxu0 0.0
    %3074 = vmatprep.subr.mxu0 0.0
    %3075 = vmatpush1.msra.mxu0 0.0
    %3076 = vmatprep.subr.mxu0 0.0
    %3077 = vmatpush1.msra.mxu0 0.0
    %3078 = vmatprep.subr.mxu0 0.0
    %3079 = vmatpush1.msra.mxu0 0.0
    %3080 = vmatprep.subr.mxu0 0.0
    %3081 = vmatpush1.msra.mxu0 0.0
    %3082 = vmatprep.subr.mxu0 0.0
    %3083 = vmatpush1.msra.mxu0 0.0
    %3084 = vmatprep.subr.mxu0 0.0
    %3085 = vmatpush1.msra.mxu0 0.0
    %3086 = vmatprep.subr.mxu0 0.0
    %3087 = vmatpush1.msra.mxu0 0.0
    %3088 = vmatprep.subr.mxu0 0.0
    %3089 = vmatpush1.msra.mxu0 0.0
    %3090 = vmatprep.subr.mxu0 0.0
    %3091 = vmatpush1.msra.mxu0 0.0
    %3092 = vmatprep.subr.mxu0 0.0
    %3093 = vmatpush1.msra.mxu0 0.0
    %3094 = vmatprep.subr.mxu0 0.0
    %3095 = vmatpush1.msra.mxu0 0.0
    %3096 = vmatprep.subr.mxu0 0.0
    %3097 = vmatpush1.msra.mxu0 0.0
    %3098 = vmatprep.subr.mxu0 0.0
    %3099 = vmatpush1.msra.mxu0 0.0
    %3100 = vmatprep.subr.mxu0 0.0
    %3101 = vmatpush1.msra.mxu0 0.0
    %3102 = vmatprep.subr.mxu0 0.0
    %3103 = vmatpush1.msra.mxu0 0.0
    %3104 = vmatprep.subr.mxu0 0.0
    %3105 = vmatpush1.msra.mxu0 0.0
    %3106 = vmatprep.subr.mxu0 0.0
    %3107 = vmatpush1.msra.mxu0 0.0
    %3108 = vmatprep.subr.mxu0 0.0
    %3109 = vmatpush1.msra.mxu0 0.0
    %3110 = vmatprep.subr.mxu0 0.0
    %3111 = vmatpush1.msra.mxu0 0.0
    %3112 = vmatprep.subr.mxu0 0.0
    %3113 = vmatpush1.msra.mxu0 0.0
    %3114 = vmatprep.subr.mxu0 0.0
    %3115 = vmatpush1.msra.mxu0 0.0
    %3116 = vmatprep.subr.mxu0 0.0
    %3117 = vmatpush1.msra.mxu0 0.0
    %3118 = vmatprep.subr.mxu0 0.0
    %3119 = vmatpush1.msra.mxu0 0.0
    %3120 = vmatprep.subr.mxu0 0.0
    %3121 = vmatpush1.msra.mxu0 0.0
    %3122 = vmatprep.subr.mxu0 0.0
    %3123 = vmatpush1.msra.mxu0 0.0
    %3124 = vmatprep.subr.mxu0 0.0
    %3125 = vmatpush1.msra.mxu0 0.0
    %3126 = vmatprep.subr.mxu0 0.0
    %3127 = vmatpush1.msra.mxu0 0.0
    %3128 = vmatprep.subr.mxu0 0.0
    %3129 = vmatpush1.msra.mxu0 0.0
    %3130 = vmatprep.subr.mxu0 0.0
    %3131 = vmatpush1.msra.mxu0 0.0
    %3132 = vmatprep.subr.mxu0 0.0
    %3133 = vmatpush1.msra.mxu0 0.0
    %3134 = vmatprep.mubr.f32.mxu0 0.0
    %3135 = vmatmul.mubr.f32.gmra.mrb[0].mxu0 %v3065
    %v3136 = vpop.f32.mrb[0].mxu0
    %v3137 = vadd.f32 0.0, %v3136
    %v3138 = vpop.f32.mrb[0].mxu0
    %3139 = vmatprep.mubr.f32.mxu0 0.0
    %3140 = vmatmul.mubr.f32.gmra.mrb[0].mxu0 %v3068
    %v3141 = vpop.f32.mrb[0].mxu0
    %v3142 = vadd.f32 0.0, %v3141
    %v3143 = vpop.f32.mrb[0].mxu0
    %3144 = vdwg.mxu0
    %v3145 = vadd.f32 %v2856, %v3137
    %v3146 = vadd.f32 %v2861, %v3142
    %3147 = vrot.lane.b32.xlu0 %v2308, 104
    %v3148 = vpop.permute.xlu0 %3147
    %3149 = vrot.lane.b32.xlu0 %v2309, 104
    %v3150 = vpop.permute.xlu0 %3149
    %3151 = vrot.lane.b32.xlu0 %v2210, 104
    %v3152 = vpop.permute.xlu0 %3151
    %3153 = vrot.lane.b32.xlu0 %v2215, 104
    %v3154 = vpop.permute.xlu0 %3153
    %v3155 = vsel %vm188, %v3148, 0
    %v3157 = vsel %vm188, %v3150, 0
    %v3159 = vsel %vm188, %v3152, 0
    %v3161 = vsel %vm188, %v3154, 0
    %3163 = vmatprep.subr.mxu0 0.0
    %3164 = vmatpush1.xpose.msra.mxu0 %v3159
    %3165 = vmatprep.subr.mxu0 0.0
    %3166 = vmatpush1.xpose.msra.mxu0 %v3161
    %3167 = vmatprep.subr.mxu0 0.0
    %3168 = vmatpush1.xpose.msra.mxu0 0.0
    %3169 = vmatprep.subr.mxu0 0.0
    %3170 = vmatpush1.xpose.msra.mxu0 0.0
    %3171 = vmatprep.subr.mxu0 0.0
    %3172 = vmatpush1.xpose.msra.mxu0 0.0
    %3173 = vmatprep.subr.mxu0 0.0
    %3174 = vmatpush1.xpose.msra.mxu0 0.0
    %3175 = vmatprep.subr.mxu0 0.0
    %3176 = vmatpush1.xpose.msra.mxu0 0.0
    %3177 = vmatprep.subr.mxu0 0.0
    %3178 = vmatpush1.xpose.msra.mxu0 0.0
    %3179 = vmatprep.subr.mxu0 0.0
    %3180 = vmatpush1.xpose.msra.mxu0 0.0
    %3181 = vmatprep.subr.mxu0 0.0
    %3182 = vmatpush1.xpose.msra.mxu0 0.0
    %3183 = vmatprep.subr.mxu0 0.0
    %3184 = vmatpush1.xpose.msra.mxu0 0.0
    %3185 = vmatprep.subr.mxu0 0.0
    %3186 = vmatpush1.xpose.msra.mxu0 0.0
    %3187 = vmatprep.subr.mxu0 0.0
    %3188 = vmatpush1.xpose.msra.mxu0 0.0
    %3189 = vmatprep.subr.mxu0 0.0
    %3190 = vmatpush1.xpose.msra.mxu0 0.0
    %3191 = vmatprep.subr.mxu0 0.0
    %3192 = vmatpush1.xpose.msra.mxu0 0.0
    %3193 = vmatprep.subr.mxu0 0.0
    %3194 = vmatpush1.xpose.msra.mxu0 0.0
    %3195 = vmatprep.subr.mxu0 0.0
    %3196 = vmatpush1.xpose.msra.mxu0 0.0
    %3197 = vmatprep.subr.mxu0 0.0
    %3198 = vmatpush1.xpose.msra.mxu0 0.0
    %3199 = vmatprep.subr.mxu0 0.0
    %3200 = vmatpush1.xpose.msra.mxu0 0.0
    %3201 = vmatprep.subr.mxu0 0.0
    %3202 = vmatpush1.xpose.msra.mxu0 0.0
    %3203 = vmatprep.subr.mxu0 0.0
    %3204 = vmatpush1.xpose.msra.mxu0 0.0
    %3205 = vmatprep.subr.mxu0 0.0
    %3206 = vmatpush1.xpose.msra.mxu0 0.0
    %3207 = vmatprep.subr.mxu0 0.0
    %3208 = vmatpush1.xpose.msra.mxu0 0.0
    %3209 = vmatprep.subr.mxu0 0.0
    %3210 = vmatpush1.xpose.msra.mxu0 0.0
    %3211 = vmatprep.subr.mxu0 0.0
    %3212 = vmatpush1.xpose.msra.mxu0 0.0
    %3213 = vmatprep.subr.mxu0 0.0
    %3214 = vmatpush1.xpose.msra.mxu0 0.0
    %3215 = vmatprep.subr.mxu0 0.0
    %3216 = vmatpush1.xpose.msra.mxu0 0.0
    %3217 = vmatprep.subr.mxu0 0.0
    %3218 = vmatpush1.xpose.msra.mxu0 0.0
    %3219 = vmatprep.subr.mxu0 0.0
    %3220 = vmatpush1.xpose.msra.mxu0 0.0
    %3221 = vmatprep.subr.mxu0 0.0
    %3222 = vmatpush1.xpose.msra.mxu0 0.0
    %3223 = vmatprep.subr.mxu0 0.0
    %3224 = vmatpush1.xpose.msra.mxu0 0.0
    %3225 = vmatprep.subr.mxu0 0.0
    %3226 = vmatpush1.xpose.msra.mxu0 0.0
    %3227 = vmatprep.mubr.f32.mxu0 0.0
    %3228 = vmatmul.mubr.f32.gmra.mrb[0].mxu0 %v3155
    %v3229 = vpop.f32.mrb[0].mxu0
    %v3230 = vadd.f32 %v352, %v3229
    %v3231 = vpop.f32.mrb[0].mxu0
    %3232 = vmatprep.mubr.f32.mxu0 0.0
    %3233 = vmatmul.mubr.f32.gmra.mrb[0].mxu0 %v3157
    %v3234 = vpop.f32.mrb[0].mxu0
    %v3235 = vadd.f32 %v353, %v3234
    %v3236 = vpop.f32.mrb[0].mxu0
    %3237 = vdwg.mxu0
    %v3238 = vsel %vm712, %v3230, -inf
    %3239 = vmax.xlane.f32.xlu0 %v3238
    %v3240 = vpop.xlane.xlu0 %3239
    %v3241 = vsel %vm712, %v3235, -inf
    %3242 = vmax.xlane.f32.xlu0 %v3241
    %v3243 = vpop.xlane.xlu0 %3242
    %v3244 = vsub.f32 %v3230, %v3240
    %v3245 = vsub.f32 %v3235, %v3243
    %v3246 = vmul.f32 %v3244, 1.442695
    %v3247 = vpow.pop %v3246
    %v3248 = vmul.f32 %v3245, 1.442695
    %v3249 = vpow.pop %v3248
    %v3250 = vsel %vm712, %v3247, 0.0
    %3251 = vadd.xlane.f32.xlu0 %v3250
    %v3252 = vpop.xlane.xlu0 %3251
    %v3253 = vsel %vm712, %v3249, 0.0
    %3254 = vadd.xlane.f32.xlu0 %v3253
    %v3255 = vpop.xlane.xlu0 %3254
    %v3256 = vrcp.pop %v3252
    %v3257 = vmul.f32 %v3247, %v3256
    %v3258 = vrcp.pop %v3255
    %v3259 = vmul.f32 %v3249, %v3258
    %3260 = vrot.lane.b32.xlu0 %v2296, 104
    %v3261 = vpop.permute.xlu0 %3260
    %3262 = vrot.lane.b32.xlu0 %v2301, 104
    %v3263 = vpop.permute.xlu0 %3262
    %v3267 = vsel %vm712, %v3257, 0
    %v3270 = vsel %vm712, %v3259, 0
    %3272 = vmatprep.subr.mxu0 0.0
    %3273 = vmatpush1.msra.mxu0 %v3261
    %3274 = vmatprep.subr.mxu0 0.0
    %3275 = vmatpush1.msra.mxu0 %v3263
    %3276 = vmatprep.subr.mxu0 0.0
    %3277 = vmatpush1.msra.mxu0 0.0
    %3278 = vmatprep.subr.mxu0 0.0
    %3279 = vmatpush1.msra.mxu0 0.0
    %3280 = vmatprep.subr.mxu0 0.0
    %3281 = vmatpush1.msra.mxu0 0.0
    %3282 = vmatprep.subr.mxu0 0.0
    %3283 = vmatpush1.msra.mxu0 0.0
    %3284 = vmatprep.subr.mxu0 0.0
    %3285 = vmatpush1.msra.mxu0 0.0
    %3286 = vmatprep.subr.mxu0 0.0
    %3287 = vmatpush1.msra.mxu0 0.0
    %3288 = vmatprep.subr.mxu0 0.0
    %3289 = vmatpush1.msra.mxu0 0.0
    %3290 = vmatprep.subr.mxu0 0.0
    %3291 = vmatpush1.msra.mxu0 0.0
    %3292 = vmatprep.subr.mxu0 0.0
    %3293 = vmatpush1.msra.mxu0 0.0
    %3294 = vmatprep.subr.mxu0 0.0
    %3295 = vmatpush1.msra.mxu0 0.0
    %3296 = vmatprep.subr.mxu0 0.0
    %3297 = vmatpush1.msra.mxu0 0.0
    %3298 = vmatprep.subr.mxu0 0.0
    %3299 = vmatpush1.msra.mxu0 0.0
    %3300 = vmatprep.subr.mxu0 0.0
    %3301 = vmatpush1.msra.mxu0 0.0
    %3302 = vmatprep.subr.mxu0 0.0
    %3303 = vmatpush1.msra.mxu0 0.0
    %3304 = vmatprep.subr.mxu0 0.0
    %3305 = vmatpush1.msra.mxu0 0.0
    %3306 = vmatprep.subr.mxu0 0.0
    %3307 = vmatpush1.msra.mxu0 0.0
    %3308 = vmatprep.subr.mxu0 0.0
    %3309 = vmatpush1.msra.mxu0 0.0
    %3310 = vmatprep.subr.mxu0 0.0
    %3311 = vmatpush1.msra.mxu0 0.0
    %3312 = vmatprep.subr.mxu0 0.0
    %3313 = vmatpush1.msra.mxu0 0.0
    %3314 = vmatprep.subr.mxu0 0.0
    %3315 = vmatpush1.msra.mxu0 0.0
    %3316 = vmatprep.subr.mxu0 0.0
    %3317 = vmatpush1.msra.mxu0 0.0
    %3318 = vmatprep.subr.mxu0 0.0
    %3319 = vmatpush1.msra.mxu0 0.0
    %3320 = vmatprep.subr.mxu0 0.0
    %3321 = vmatpush1.msra.mxu0 0.0
    %3322 = vmatprep.subr.mxu0 0.0
    %3323 = vmatpush1.msra.mxu0 0.0
    %3324 = vmatprep.subr.mxu0 0.0
    %3325 = vmatpush1.msra.mxu0 0.0
    %3326 = vmatprep.subr.mxu0 0.0
    %3327 = vmatpush1.msra.mxu0 0.0
    %3328 = vmatprep.subr.mxu0 0.0
    %3329 = vmatpush1.msra.mxu0 0.0
    %3330 = vmatprep.subr.mxu0 0.0
    %3331 = vmatpush1.msra.mxu0 0.0
    %3332 = vmatprep.subr.mxu0 0.0
    %3333 = vmatpush1.msra.mxu0 0.0
    %3334 = vmatprep.subr.mxu0 0.0
    %3335 = vmatpush1.msra.mxu0 0.0
    %3336 = vmatprep.mubr.f32.mxu0 0.0
    %3337 = vmatmul.mubr.f32.gmra.mrb[0].mxu0 %v3267
    %v3338 = vpop.f32.mrb[0].mxu0
    %v3339 = vadd.f32 0.0, %v3338
    %v3340 = vpop.f32.mrb[0].mxu0
    %3341 = vmatprep.mubr.f32.mxu0 0.0
    %3342 = vmatmul.mubr.f32.gmra.mrb[0].mxu0 %v3270
    %v3343 = vpop.f32.mrb[0].mxu0
    %v3344 = vadd.f32 0.0, %v3343
    %v3345 = vpop.f32.mrb[0].mxu0
    %3346 = vdwg.mxu0
    %v3348 = vsel %vm188, %v3339, 0
    %v3351 = vsel %vm188, %v3344, 0
    %3353 = vmatprep.subr.mxu0 0.0
    %3354 = vmatpush1.msra.mxu0 %v2307
    %3355 = vmatprep.subr.mxu0 0.0
    %3356 = vmatpush1.msra.mxu0 0.0
    %3357 = vmatprep.subr.mxu0 0.0
    %3358 = vmatpush1.msra.mxu0 0.0
    %3359 = vmatprep.subr.mxu0 0.0
    %3360 = vmatpush1.msra.mxu0 0.0
    %3361 = vmatprep.subr.mxu0 0.0
    %3362 = vmatpush1.msra.mxu0 0.0
    %3363 = vmatprep.subr.mxu0 0.0
    %3364 = vmatpush1.msra.mxu0 0.0
    %3365 = vmatprep.subr.mxu0 0.0
    %3366 = vmatpush1.msra.mxu0 0.0
    %3367 = vmatprep.subr.mxu0 0.0
    %3368 = vmatpush1.msra.mxu0 0.0
    %3369 = vmatprep.subr.mxu0 0.0
    %3370 = vmatpush1.msra.mxu0 0.0
    %3371 = vmatprep.subr.mxu0 0.0
    %3372 = vmatpush1.msra.mxu0 0.0
    %3373 = vmatprep.subr.mxu0 0.0
    %3374 = vmatpush1.msra.mxu0 0.0
    %3375 = vmatprep.subr.mxu0 0.0
    %3376 = vmatpush1.msra.mxu0 0.0
    %3377 = vmatprep.subr.mxu0 0.0
    %3378 = vmatpush1.msra.mxu0 0.0
    %3379 = vmatprep.subr.mxu0 0.0
    %3380 = vmatpush1.msra.mxu0 0.0
    %3381 = vmatprep.subr.mxu0 0.0
    %3382 = vmatpush1.msra.mxu0 0.0
    %3383 = vmatprep.subr.mxu0 0.0
    %3384 = vmatpush1.msra.mxu0 0.0
    %3385 = vmatprep.subr.mxu0 0.0
    %3386 = vmatpush1.msra.mxu0 0.0
    %3387 = vmatprep.subr.mxu0 0.0
    %3388 = vmatpush1.msra.mxu0 0.0
    %3389 = vmatprep.subr.mxu0 0.0
    %3390 = vmatpush1.msra.mxu0 0.0
    %3391 = vmatprep.subr.mxu0 0.0
    %3392 = vmatpush1.msra.mxu0 0.0
    %3393 = vmatprep.subr.mxu0 0.0
    %3394 = vmatpush1.msra.mxu0 0.0
    %3395 = vmatprep.subr.mxu0 0.0
    %3396 = vmatpush1.msra.mxu0 0.0
    %3397 = vmatprep.subr.mxu0 0.0
    %3398 = vmatpush1.msra.mxu0 0.0
    %3399 = vmatprep.subr.mxu0 0.0
    %3400 = vmatpush1.msra.mxu0 0.0
    %3401 = vmatprep.subr.mxu0 0.0
    %3402 = vmatpush1.msra.mxu0 0.0
    %3403 = vmatprep.subr.mxu0 0.0
    %3404 = vmatpush1.msra.mxu0 0.0
    %3405 = vmatprep.subr.mxu0 0.0
    %3406 = vmatpush1.msra.mxu0 0.0
    %3407 = vmatprep.subr.mxu0 0.0
    %3408 = vmatpush1.msra.mxu0 0.0
    %3409 = vmatprep.subr.mxu0 0.0
    %3410 = vmatpush1.msra.mxu0 0.0
    %3411 = vmatprep.subr.mxu0 0.0
    %3412 = vmatpush1.msra.mxu0 0.0
    %3413 = vmatprep.subr.mxu0 0.0
    %3414 = vmatpush1.msra.mxu0 0.0
    %3415 = vmatprep.subr.mxu0 0.0
    %3416 = vmatpush1.msra.mxu0 0.0
    %3417 = vmatprep.mubr.f32.mxu0 0.0
    %3418 = vmatmul.mubr.f32.gmra.mrb[0].mxu0 %v3348
    %v3419 = vpop.f32.mrb[0].mxu0
    %v3420 = vadd.f32 0.0, %v3419
    %v3421 = vpop.f32.mrb[0].mxu0
    %3422 = vmatprep.mubr.f32.mxu0 0.0
    %3423 = vmatmul.mubr.f32.gmra.mrb[0].mxu0 %v3351
    %v3424 = vpop.f32.mrb[0].mxu0
    %v3425 = vadd.f32 0.0, %v3424
    %v3426 = vpop.f32.mrb[0].mxu0
    %3427 = vdwg.mxu0
    %v3428 = vadd.f32 %v3145, %v3420
    %v3429 = vadd.f32 %v3146, %v3425
    %v3430 = vld [vmem:[%s57] sm:$0x1]
    %v3432 = vlaneseq
    %v3433 = vshrl.u32 %v3432, 7
    %v3434 = vsub.s32 0, %v3433
    %v3435 = vrot.slane %v3430, %v3434
    %v3437 = vadd.f32 %v3428, %v3435
    %v3438 = vadd.f32 %v3429, %v3435
    %v3439 = vadd.f32 %v3437, %v2038
    %v3440 = vadd.f32 %v3438, %v2039
    %v3441 = vld [vmem:[%s59] sm:$0x1]
    %v3442 = vld [vmem:[%s61] sm:$0x1]
    %v3443 = vsel %vm365, %v3439, 0.0
    %3444 = vadd.xlane.f32.xlu0 %v3443
    %v3445 = vpop.xlane.xlu0 %3444
    %v3446 = vsel %vm365, %v3440, 0.0
    %3447 = vadd.xlane.f32.xlu0 %v3446
    %v3448 = vpop.xlane.xlu0 %3447
    %v3449 = vmul.f32 %v3445, %v1765
    %v3450 = vmul.f32 %v3448, %v1765
    %v3451 = vsub.f32 %v3439, %v3449
    %v3452 = vsub.f32 %v3440, %v3450
    %v3453 = vmul.f32 %v3451, %v3451
    %v3454 = vmul.f32 %v3452, %v3452
    %v3455 = vsel %vm365, %v3453, 0.0
    %3456 = vadd.xlane.f32.xlu0 %v3455
    %v3457 = vpop.xlane.xlu0 %3456
    %v3458 = vsel %vm365, %v3454, 0.0
    %3459 = vadd.xlane.f32.xlu0 %v3458
    %v3460 = vpop.xlane.xlu0 %3459
    %v3461 = vmul.f32 %v3457, %v1765
    %v3462 = vmul.f32 %v3460, %v1765
    %v3463 = vadd.f32 %v3461, 1e-05
    %v3464 = vadd.f32 %v3462, 1e-05
    %v3465 = vrsqrt.pop %v3463
    %v3466 = vrsqrt.pop %v3464
    %v3467 = vmul.f32 %v3451, %v3465
    %v3468 = vmul.f32 %v3452, %v3466
    %v3470 = vlaneseq
    %v3471 = vshrl.u32 %v3470, 7
    %v3472 = vsub.s32 0, %v3471
    %v3473 = vrot.slane %v3441, %v3472
    %v3475 = vmul.f32 %v3467, %v3473
    %v3476 = vmul.f32 %v3468, %v3473
    %v3478 = vlaneseq
    %v3479 = vshrl.u32 %v3478, 7
    %v3480 = vsub.s32 0, %v3479
    %v3481 = vrot.slane %v3442, %v3480
    %v3483 = vadd.f32 %v3475, %v3481
    %v3484 = vadd.f32 %v3476, %v3481
    %v3485 = vld [vmem:[%s63] sm:$0xff]
    %v3486 = vld [vmem:[%s63 + $0x8] sm:$0xff]
    %v3487 = vld [vmem:[%s63 + $0x10] sm:$0xff]
    %v3488 = vld [vmem:[%s63 + $0x18] sm:$0xff]
    %v3489 = vld [vmem:[%s65] sm:$0x1]
    %v3491 = vlaneseq
    %v3492 = vshrl.u32 %v3491, 7
    %v3493 = vsub.s32 0, %v3492
    %v3494 = vrot.slane %v3489, %v3493
    %v3497 = vsel %vm365, %v3483, 0
    %v3500 = vsel %vm365, %v3484, 0
    %3502 = vmatprep.subr.mxu0 0.0
    %3503 = vmatpush1.msra.mxu0 %v3485
    %3504 = vmatprep.subr.mxu0 0.0
    %3505 = vmatpush1.msra.mxu0 %v3486
    %3506 = vmatprep.subr.mxu0 0.0
    %3507 = vmatpush1.msra.mxu0 %v3487
    %3508 = vmatprep.subr.mxu0 0.0
    %3509 = vmatpush1.msra.mxu0 %v3488
    %3510 = vmatprep.subr.mxu0 0.0
    %3511 = vmatpush1.msra.mxu0 0.0
    %3512 = vmatprep.subr.mxu0 0.0
    %3513 = vmatpush1.msra.mxu0 0.0
    %3514 = vmatprep.subr.mxu0 0.0
    %3515 = vmatpush1.msra.mxu0 0.0
    %3516 = vmatprep.subr.mxu0 0.0
    %3517 = vmatpush1.msra.mxu0 0.0
    %3518 = vmatprep.subr.mxu0 0.0
    %3519 = vmatpush1.msra.mxu0 0.0
    %3520 = vmatprep.subr.mxu0 0.0
    %3521 = vmatpush1.msra.mxu0 0.0
    %3522 = vmatprep.subr.mxu0 0.0
    %3523 = vmatpush1.msra.mxu0 0.0
    %3524 = vmatprep.subr.mxu0 0.0
    %3525 = vmatpush1.msra.mxu0 0.0
    %3526 = vmatprep.subr.mxu0 0.0
    %3527 = vmatpush1.msra.mxu0 0.0
    %3528 = vmatprep.subr.mxu0 0.0
    %3529 = vmatpush1.msra.mxu0 0.0
    %3530 = vmatprep.subr.mxu0 0.0
    %3531 = vmatpush1.msra.mxu0 0.0
    %3532 = vmatprep.subr.mxu0 0.0
    %3533 = vmatpush1.msra.mxu0 0.0
    %3534 = vmatprep.subr.mxu0 0.0
    %3535 = vmatpush1.msra.mxu0 0.0
    %3536 = vmatprep.subr.mxu0 0.0
    %3537 = vmatpush1.msra.mxu0 0.0
    %3538 = vmatprep.subr.mxu0 0.0
    %3539 = vmatpush1.msra.mxu0 0.0
    %3540 = vmatprep.subr.mxu0 0.0
    %3541 = vmatpush1.msra.mxu0 0.0
    %3542 = vmatprep.subr.mxu0 0.0
    %3543 = vmatpush1.msra.mxu0 0.0
    %3544 = vmatprep.subr.mxu0 0.0
    %3545 = vmatpush1.msra.mxu0 0.0
    %3546 = vmatprep.subr.mxu0 0.0
    %3547 = vmatpush1.msra.mxu0 0.0
    %3548 = vmatprep.subr.mxu0 0.0
    %3549 = vmatpush1.msra.mxu0 0.0
    %3550 = vmatprep.subr.mxu0 0.0
    %3551 = vmatpush1.msra.mxu0 0.0
    %3552 = vmatprep.subr.mxu0 0.0
    %3553 = vmatpush1.msra.mxu0 0.0
    %3554 = vmatprep.subr.mxu0 0.0
    %3555 = vmatpush1.msra.mxu0 0.0
    %3556 = vmatprep.subr.mxu0 0.0
    %3557 = vmatpush1.msra.mxu0 0.0
    %3558 = vmatprep.subr.mxu0 0.0
    %3559 = vmatpush1.msra.mxu0 0.0
    %3560 = vmatprep.subr.mxu0 0.0
    %3561 = vmatpush1.msra.mxu0 0.0
    %3562 = vmatprep.subr.mxu0 0.0
    %3563 = vmatpush1.msra.mxu0 0.0
    %3564 = vmatprep.subr.mxu0 0.0
    %3565 = vmatpush1.msra.mxu0 0.0
    %3566 = vmatprep.mubr.f32.mxu0 0.0
    %3567 = vmatmul.mubr.f32.gmra.mrb[0].mxu0 %v3497
    %v3568 = vpop.f32.mrb[0].mxu0
    %v3569 = vadd.f32 %v3494, %v3568
    %v3570 = vpop.f32.mrb[0].mxu0
    %3571 = vmatprep.mubr.f32.mxu0 0.0
    %3572 = vmatmul.mubr.f32.gmra.mrb[0].mxu0 %v3500
    %v3573 = vpop.f32.mrb[0].mxu0
    %v3574 = vadd.f32 %v3494, %v3573
    %v3575 = vpop.f32.mrb[0].mxu0
    %3576 = vdwg.mxu0
    %v3577 = vmax.f32 %v3569, 0.0
    %v3578 = vmax.f32 %v3574, 0.0
    %v3579 = vld [vmem:[%s67] sm:$0xff]
    %v3580 = vld [vmem:[%s67 + $0x8] sm:$0xff]
    %v3581 = vld [vmem:[%s67 + $0x10] sm:$0xff]
    %v3582 = vld [vmem:[%s67 + $0x18] sm:$0xff]
    %v3583 = vld [vmem:[%s67 + $0x20] sm:$0xff]
    %v3584 = vld [vmem:[%s67 + $0x28] sm:$0xff]
    %v3585 = vld [vmem:[%s67 + $0x30] sm:$0xff]
    %v3586 = vld [vmem:[%s67 + $0x38] sm:$0xff]
    %v3587 = vld [vmem:[%s67 + $0x40] sm:$0xff]
    %v3588 = vld [vmem:[%s67 + $0x48] sm:$0xff]
    %v3589 = vld [vmem:[%s67 + $0x50] sm:$0xff]
    %v3590 = vld [vmem:[%s67 + $0x58] sm:$0xff]
    %v3591 = vld [vmem:[%s67 + $0x60] sm:$0xff]
    %v3592 = vld [vmem:[%s67 + $0x68] sm:$0xff]
    %v3593 = vld [vmem:[%s67 + $0x70] sm:$0xff]
    %v3594 = vld [vmem:[%s67 + $0x78] sm:$0xff]
    %v3595 = vld [vmem:[%s69] sm:$0x1]
    %v3597 = vlaneseq
    %v3598 = vshrl.u32 %v3597, 7
    %v3599 = vsub.s32 0, %v3598
    %v3600 = vrot.slane %v3595, %v3599
    %3602 = vmatprep.subr.mxu0 0.0
    %3603 = vmatpush1.msra.mxu0 %v3579
    %3604 = vmatprep.subr.mxu0 0.0
    %3605 = vmatpush1.msra.mxu0 %v3580
    %3606 = vmatprep.subr.mxu0 0.0
    %3607 = vmatpush1.msra.mxu0 %v3581
    %3608 = vmatprep.subr.mxu0 0.0
    %3609 = vmatpush1.msra.mxu0 %v3582
    %3610 = vmatprep.subr.mxu0 0.0
    %3611 = vmatpush1.msra.mxu0 %v3583
    %3612 = vmatprep.subr.mxu0 0.0
    %3613 = vmatpush1.msra.mxu0 %v3584
    %3614 = vmatprep.subr.mxu0 0.0
    %3615 = vmatpush1.msra.mxu0 %v3585
    %3616 = vmatprep.subr.mxu0 0.0
    %3617 = vmatpush1.msra.mxu0 %v3586
    %3618 = vmatprep.subr.mxu0 0.0
    %3619 = vmatpush1.msra.mxu0 %v3587
    %3620 = vmatprep.subr.mxu0 0.0
    %3621 = vmatpush1.msra.mxu0 %v3588
    %3622 = vmatprep.subr.mxu0 0.0
    %3623 = vmatpush1.msra.mxu0 %v3589
    %3624 = vmatprep.subr.mxu0 0.0
    %3625 = vmatpush1.msra.mxu0 %v3590
    %3626 = vmatprep.subr.mxu0 0.0
    %3627 = vmatpush1.msra.mxu0 %v3591
    %3628 = vmatprep.subr.mxu0 0.0
    %3629 = vmatpush1.msra.mxu0 %v3592
    %3630 = vmatprep.subr.mxu0 0.0
    %3631 = vmatpush1.msra.mxu0 %v3593
    %3632 = vmatprep.subr.mxu0 0.0
    %3633 = vmatpush1.msra.mxu0 %v3594
    %3634 = vmatprep.subr.mxu0 0.0
    %3635 = vmatpush1.msra.mxu0 0.0
    %3636 = vmatprep.subr.mxu0 0.0
    %3637 = vmatpush1.msra.mxu0 0.0
    %3638 = vmatprep.subr.mxu0 0.0
    %3639 = vmatpush1.msra.mxu0 0.0
    %3640 = vmatprep.subr.mxu0 0.0
    %3641 = vmatpush1.msra.mxu0 0.0
    %3642 = vmatprep.subr.mxu0 0.0
    %3643 = vmatpush1.msra.mxu0 0.0
    %3644 = vmatprep.subr.mxu0 0.0
    %3645 = vmatpush1.msra.mxu0 0.0
    %3646 = vmatprep.subr.mxu0 0.0
    %3647 = vmatpush1.msra.mxu0 0.0
    %3648 = vmatprep.subr.mxu0 0.0
    %3649 = vmatpush1.msra.mxu0 0.0
    %3650 = vmatprep.subr.mxu0 0.0
    %3651 = vmatpush1.msra.mxu0 0.0
    %3652 = vmatprep.subr.mxu0 0.0
    %3653 = vmatpush1.msra.mxu0 0.0
    %3654 = vmatprep.subr.mxu0 0.0
    %3655 = vmatpush1.msra.mxu0 0.0
    %3656 = vmatprep.subr.mxu0 0.0
    %3657 = vmatpush1.msra.mxu0 0.0
    %3658 = vmatprep.subr.mxu0 0.0
    %3659 = vmatpush1.msra.mxu0 0.0
    %3660 = vmatprep.subr.mxu0 0.0
    %3661 = vmatpush1.msra.mxu0 0.0
    %3662 = vmatprep.subr.mxu0 0.0
    %3663 = vmatpush1.msra.mxu0 0.0
    %3664 = vmatprep.subr.mxu0 0.0
    %3665 = vmatpush1.msra.mxu0 0.0
    %3666 = vmatprep.mubr.f32.mxu0 0.0
    %3667 = vmatmul.mubr.f32.gmra.mrb[0].mxu0 %v3577
    %v3668 = vpop.f32.mrb[0].mxu0
    %v3669 = vadd.f32 %v3600, %v3668
    %v3670 = vpop.f32.mrb[0].mxu0
    %3671 = vmatprep.mubr.f32.mxu0 0.0
    %3672 = vmatmul.mubr.f32.gmra.mrb[0].mxu0 %v3578
    %v3673 = vpop.f32.mrb[0].mxu0
    %v3674 = vadd.f32 %v3600, %v3673
    %v3675 = vpop.f32.mrb[0].mxu0
    %3676 = vdwg.mxu0
    %v3677 = vadd.f32 %v3669, %v3483
    %v3678 = vadd.f32 %v3674, %v3484
    %v3679 = vld [vmem:[%s71] sm:$0x1]
    %v3680 = vld [vmem:[%s73] sm:$0x1]
    %v3681 = vsel %vm365, %v3677, 0.0
    %3682 = vadd.xlane.f32.xlu0 %v3681
    %v3683 = vpop.xlane.xlu0 %3682
    %v3684 = vsel %vm365, %v3678, 0.0
    %3685 = vadd.xlane.f32.xlu0 %v3684
    %v3686 = vpop.xlane.xlu0 %3685
    %v3687 = vmul.f32 %v3683, %v1765
    %v3688 = vmul.f32 %v3686, %v1765
    %v3689 = vsub.f32 %v3677, %v3687
    %v3690 = vsub.f32 %v3678, %v3688
    %v3691 = vmul.f32 %v3689, %v3689
    %v3692 = vmul.f32 %v3690, %v3690
    %v3693 = vsel %vm365, %v3691, 0.0
    %3694 = vadd.xlane.f32.xlu0 %v3693
    %v3695 = vpop.xlane.xlu0 %3694
    %v3696 = vsel %vm365, %v3692, 0.0
    %3697 = vadd.xlane.f32.xlu0 %v3696
    %v3698 = vpop.xlane.xlu0 %3697
    %v3699 = vmul.f32 %v3695, %v1765
    %v3700 = vmul.f32 %v3698, %v1765
    %v3701 = vadd.f32 %v3699, 1e-05
    %v3702 = vadd.f32 %v3700, 1e-05
    %v3703 = vrsqrt.pop %v3701
    %v3704 = vrsqrt.pop %v3702
    %v3705 = vmul.f32 %v3689, %v3703
    %v3706 = vmul.f32 %v3690, %v3704
    %v3708 = vlaneseq
    %v3709 = vshrl.u32 %v3708, 7
    %v3710 = vsub.s32 0, %v3709
    %v3711 = vrot.slane %v3679, %v3710
    %v3713 = vmul.f32 %v3705, %v3711
    %v3714 = vmul.f32 %v3706, %v3711
    %v3716 = vlaneseq
    %v3717 = vshrl.u32 %v3716, 7
    %v3718 = vsub.s32 0, %v3717
    %v3719 = vrot.slane %v3680, %v3718
    %v3721 = vadd.f32 %v3713, %v3719
    %v3722 = vadd.f32 %v3714, %v3719
    %v3723 = vld [vmem:[%s75] sm:$0xff]
    %v3724 = vld [vmem:[%s75 + $0x8] sm:$0xff]
    %v3725 = vld [vmem:[%s75 + $0x10] sm:$0xff]
    %v3726 = vld [vmem:[%s75 + $0x18] sm:$0xff]
    %v3727 = vld [vmem:[%s77] sm:$0x1]
    %v3729 = vlaneseq
    %v3730 = vshrl.u32 %v3729, 7
    %v3731 = vsub.s32 0, %v3730
    %v3732 = vrot.slane %v3727, %v3731
    %v3735 = vsel %vm365, %v3721, 0
    %v3738 = vsel %vm365, %v3722, 0
    %3740 = vmatprep.subr.mxu0 0.0
    %3741 = vmatpush1.msra.mxu0 %v3723
    %3742 = vmatprep.subr.mxu0 0.0
    %3743 = vmatpush1.msra.mxu0 %v3724
    %3744 = vmatprep.subr.mxu0 0.0
    %3745 = vmatpush1.msra.mxu0 %v3725
    %3746 = vmatprep.subr.mxu0 0.0
    %3747 = vmatpush1.msra.mxu0 %v3726
    %3748 = vmatprep.subr.mxu0 0.0
    %3749 = vmatpush1.msra.mxu0 0.0
    %3750 = vmatprep.subr.mxu0 0.0
    %3751 = vmatpush1.msra.mxu0 0.0
    %3752 = vmatprep.subr.mxu0 0.0
    %3753 = vmatpush1.msra.mxu0 0.0
    %3754 = vmatprep.subr.mxu0 0.0
    %3755 = vmatpush1.msra.mxu0 0.0
    %3756 = vmatprep.subr.mxu0 0.0
    %3757 = vmatpush1.msra.mxu0 0.0
    %3758 = vmatprep.subr.mxu0 0.0
    %3759 = vmatpush1.msra.mxu0 0.0
    %3760 = vmatprep.subr.mxu0 0.0
    %3761 = vmatpush1.msra.mxu0 0.0
    %3762 = vmatprep.subr.mxu0 0.0
    %3763 = vmatpush1.msra.mxu0 0.0
    %3764 = vmatprep.subr.mxu0 0.0
    %3765 = vmatpush1.msra.mxu0 0.0
    %3766 = vmatprep.subr.mxu0 0.0
    %3767 = vmatpush1.msra.mxu0 0.0
    %3768 = vmatprep.subr.mxu0 0.0
    %3769 = vmatpush1.msra.mxu0 0.0
    %3770 = vmatprep.subr.mxu0 0.0
    %3771 = vmatpush1.msra.mxu0 0.0
    %3772 = vmatprep.subr.mxu0 0.0
    %3773 = vmatpush1.msra.mxu0 0.0
    %3774 = vmatprep.subr.mxu0 0.0
    %3775 = vmatpush1.msra.mxu0 0.0
    %3776 = vmatprep.subr.mxu0 0.0
    %3777 = vmatpush1.msra.mxu0 0.0
    %3778 = vmatprep.subr.mxu0 0.0
    %3779 = vmatpush1.msra.mxu0 0.0
    %3780 = vmatprep.subr.mxu0 0.0
    %3781 = vmatpush1.msra.mxu0 0.0
    %3782 = vmatprep.subr.mxu0 0.0
    %3783 = vmatpush1.msra.mxu0 0.0
    %3784 = vmatprep.subr.mxu0 0.0
    %3785 = vmatpush1.msra.mxu0 0.0
    %3786 = vmatprep.subr.mxu0 0.0
    %3787 = vmatpush1.msra.mxu0 0.0
    %3788 = vmatprep.subr.mxu0 0.0
    %3789 = vmatpush1.msra.mxu0 0.0
    %3790 = vmatprep.subr.mxu0 0.0
    %3791 = vmatpush1.msra.mxu0 0.0
    %3792 = vmatprep.subr.mxu0 0.0
    %3793 = vmatpush1.msra.mxu0 0.0
    %3794 = vmatprep.subr.mxu0 0.0
    %3795 = vmatpush1.msra.mxu0 0.0
    %3796 = vmatprep.subr.mxu0 0.0
    %3797 = vmatpush1.msra.mxu0 0.0
    %3798 = vmatprep.subr.mxu0 0.0
    %3799 = vmatpush1.msra.mxu0 0.0
    %3800 = vmatprep.subr.mxu0 0.0
    %3801 = vmatpush1.msra.mxu0 0.0
    %3802 = vmatprep.subr.mxu0 0.0
    %3803 = vmatpush1.msra.mxu0 0.0
    %3804 = vmatprep.mubr.f32.mxu0 0.0
    %3805 = vmatmul.mubr.f32.gmra.mrb[0].mxu0 %v3735
    %v3806 = vpop.f32.mrb[0].mxu0
    %v3807 = vadd.f32 %v3732, %v3806
    %v3808 = vpop.f32.mrb[0].mxu0
    %3809 = vmatprep.mubr.f32.mxu0 0.0
    %3810 = vmatmul.mubr.f32.gmra.mrb[0].mxu0 %v3738
    %v3811 = vpop.f32.mrb[0].mxu0
    %v3812 = vadd.f32 %v3732, %v3811
    %v3813 = vpop.f32.mrb[0].mxu0
    %3814 = vdwg.mxu0
    %3815 = vst.msk [vmem:[#allocation2] sm:$0xff] %vm270, %v3807
    %3816 = vst.msk [vmem:[#allocation2 + $0x8] sm:$0xff] %vm270, %v3812
    // Predicated region
    $region158: #{custom_model_forward.1} parent=1 // pred_check
      _
    $region159: #{custom_model_forward.1} parent=1 // pred_check_branch
      %3818 = sbr.rel (0) target = $region161
    $region160: #{custom_model_forward.1} parent=1 // pred_region
      %s3820 = ssub.s32 256, 256
      %3821 = vsyncadd [#allocation3], %s3820
      %s3822 = sshll.u32 [#allocation2], 4
      %s3823 = int_to_ptr.vmem [resolvable:$true] %s3822
      %3828 = dma.vmem_to_hbm [thread:$0]  %s3823, 256, %s79, [#allocation3], 128, 128, 8
    $region161: #{custom_model_forward.1} parent=1 // pred_fallthru
      _
    // Predicated region
    $region162: #{custom_model_forward.1} parent=1 // pred_check
      _
    $region163: #{custom_model_forward.1} parent=1 // pred_check_branch
      %3830 = sbr.rel (0) target = $region165
    $region164: #{custom_model_forward.1} parent=1 // pred_region
      %3831 = dma.done [#allocation3], 256
    $region165: #{custom_model_forward.1} parent=1 // pred_fallthru
      _
    %3832 = vsyncpa [#allocation3], 1

</llo_original>
